<compile_context>
chip_gen: v6e
topology: v6e:2x2x1
jax: 0.10.0
libtpu: 0.0.40
codegen_flags: <defaults>
</compile_context>

<pallas_src>
import functools

import jax
import jax.numpy as jnp
from jax.experimental import pallas as pl
from jax.experimental.pallas import tpu as pltpu

EPS = 1e-5          # norm_op_kwargs['eps']
NEG_SLOPE = 0.01    # nonlin_kwargs['negative_slope']


def _conv_bn_lrelu_kernel(x_ref, w_ref, shift_ref, o_ref, scratch_ref, *,
                          n_rows, Wp, KH, KW, Cin, fuse_taps):
    """One (image, row-block) per grid step.

    x_ref:       (BL, Cin)            bf16  flattened padded rows (+ halo + tail)
    w_ref:       (KH*KW*Cin, Cout_p)  bf16  per-tap weights, BN scale pre-folded
    shift_ref:   (1, Cout_p)          f32   (bias - mean) * scale + beta
    o_ref:       (n_rows, Cout_p)     bf16  fused conv+BN+LeakyReLU (Wp-wide rows)
    scratch_ref: fuse_taps -> (n_rows, KH*KW*Cin) bf16 im2col patch (VMEM only)
                 else      -> (n_rows, Cout_p)    f32  accumulator
    """
    if fuse_taps:
        # im2col in VMEM only: one K = KH*KW*Cin matmul instead of KH*KW
        # short-K matmuls + repeated accumulator read/write passes.
        for kh in range(KH):
            for kw in range(KW):
                s = kh * Wp + kw                              # static offsets
                k0 = (kh * KW + kw) * Cin
                scratch_ref[:, k0:k0 + Cin] = x_ref[s:s + n_rows, :]
        acc = jnp.dot(scratch_ref[...], w_ref[...],
                      preferred_element_type=jnp.float32)
    else:
        # Large-Cin path: per-tap matmuls accumulate into an explicit VMEM
        # f32 scratch (K per tap is already large; no im2col blow-up).
        scratch_ref[...] = jnp.zeros_like(scratch_ref)
        for kh in range(KH):
            for kw in range(KW):
                s = kh * Wp + kw
                k0 = (kh * KW + kw) * Cin
                scratch_ref[...] += jnp.dot(
                    x_ref[s:s + n_rows, :], w_ref[k0:k0 + Cin, :],
                    preferred_element_type=jnp.float32)
        acc = scratch_ref[...]
    # Folded conv-bias + BatchNorm shift, then LeakyReLU — f32, cast at store.
    y = acc + shift_ref[...]
    o_ref[...] = jnp.where(y >= 0, y, NEG_SLOPE * y).astype(o_ref.dtype)


def conv_drop_norm(x_nchw, weight, bias, gamma, beta, run_mean, run_var, *,
                   compute_dtype=jnp.bfloat16,
                   vmem_budget_bytes=20 * 1024 * 1024):
    """Forward pass of ConvDropNorm (eval semantics). x_nchw: (N, Cin, H, W)."""
    N, Cin, H, W = x_nchw.shape
    Cout, _, KH, KW = weight.shape
    ph, pw = (KH - 1) // 2, (KW - 1) // 2           # 'same' padding (=1 for 3x3)
    Wp = W + 2 * pw

    Cin_p = max(8, ((Cin + 7) // 8) * 8)            # aligned contraction dim
    Cout_p = ((Cout + 127) // 128) * 128            # lane-dense output channels
    K_tot = KH * KW * Cin_p
    fuse_taps = Cin_p < 128                         # single K=KH*KW*Cin matmul

    # ---- rows per grid step (TH): keep per-step working set well under VMEM
    # on all generations (v7x only has 64 MiB physical).
    if fuse_taps:
        bytes_per_row = 4 * Cin_p + 8 * Cout_p + 2 * K_tot
    else:
        bytes_per_row = 4 * Cin_p + 12 * Cout_p
    TH = max(1, min(H, vmem_budget_bytes // (bytes_per_row * Wp)))
    RB = -(-H // TH)                                # row blocks per image
    M = TH * Wp                                     # output rows per step (flat)
    # Flat rows read per step: M + (KH-1)-row halo + (KW-1) shifted-slice
    # over-read, rounded up to a sublane multiple.
    BL = ((M + (KH - 1) * Wp + (KW - 1) + 7) // 8) * 8

    # ---- wrapper glue: bf16 FIRST, then one merged pad, then halo gather. ---
    x = jnp.transpose(x_nchw.astype(compute_dtype), (0, 2, 3, 1))     # NHWC bf16
    rows_needed = (RB - 1) * TH * Wp + BL                             # flat rows
    Hp_ext = max(H + 2 * ph, -(-rows_needed // Wp))
    xp = jnp.pad(x, ((0, 0), (ph, Hp_ext - ph - H), (pw, pw), (0, Cin_p - Cin)))
    xflat = xp.reshape(N, Hp_ext * Wp, Cin_p)
    # Replicate the (KH-1)-row halo per row block so plain Blocked BlockSpecs
    # (auto-pipelined) can be used.  Cost ~ (TH+KH)/TH extra bf16 input traffic.
    row_idx = jnp.arange(RB)[:, None] * (TH * Wp) + jnp.arange(BL)[None, :]
    x_blk = jnp.take(xflat, row_idx, axis=1)        # (N, RB, BL, Cin_p)

    # ---- fold conv-bias + BatchNorm (running stats, affine). ----------------
    # scale goes into the weights (in f32, BEFORE the bf16 cast); shift stays f32.
    f32 = jnp.float32
    scale = gamma.astype(f32) * jax.lax.rsqrt(run_var.astype(f32) + EPS)
    shift = (bias.astype(f32) - run_mean.astype(f32)) * scale + beta.astype(f32)
    w = jnp.transpose(weight.astype(f32), (2, 3, 1, 0)) * scale       # (KH,KW,Cin,Cout)
    w = jnp.pad(w, ((0, 0), (0, 0), (0, Cin_p - Cin), (0, Cout_p - Cout)))
    w = w.reshape(K_tot, Cout_p).astype(compute_dtype)
    shift = jnp.pad(shift.reshape(1, Cout), ((0, 0), (0, Cout_p - Cout)))

    kernel = functools.partial(_conv_bn_lrelu_kernel, n_rows=M, Wp=Wp, KH=KH,
                               KW=KW, Cin=Cin_p, fuse_taps=fuse_taps)
    if fuse_taps:
        scratch = pltpu.VMEM((M, K_tot), compute_dtype)   # im2col patch
    else:
        scratch = pltpu.VMEM((M, Cout_p), jnp.float32)    # f32 accumulator

    out = pl.pallas_call(
        kernel,
        out_shape=jax.ShapeDtypeStruct((N, RB, M, Cout_p), compute_dtype),
        grid=(N, RB),
        in_specs=[
            pl.BlockSpec((pl.Squeezed(), pl.Squeezed(), BL, Cin_p),
                         lambda n, rb: (n, rb, 0, 0)),                # image rows
            pl.BlockSpec((K_tot, Cout_p), lambda n, rb: (0, 0)),      # weights (resident)
            pl.BlockSpec((1, Cout_p), lambda n, rb: (0, 0)),          # shift
        ],
        out_specs=pl.BlockSpec((pl.Squeezed(), pl.Squeezed(), M, Cout_p),
                               lambda n, rb: (n, rb, 0, 0)),
        scratch_shapes=[scratch],
        compiler_params=pltpu.CompilerParams(
            dimension_semantics=("parallel", "parallel"),   # batch + row blocks
            vmem_limit_bytes=48 * 1024 * 1024),              # safe on v5e/v6e/v7x
    )(x_blk, w, shift)

    # Drop row/column/channel padding; back to NCHW (f32 to match module dtype).
    y = out.reshape(N, RB * TH, Wp, Cout_p)[:, :H, :W, :Cout]
    return jnp.transpose(y, (0, 3, 1, 2)).astype(jnp.float32)


def _reference(x, weight, bias, gamma, beta, mean, var):
    y = jax.lax.conv_general_dilated(
        x, weight, window_strides=(1, 1), padding=((1, 1), (1, 1)),
        dimension_numbers=("NCHW", "OIHW", "NCHW"))
    rs = lambda v: v.reshape(1, -1, 1, 1)
    y = y + rs(bias)
    y = (y - rs(mean)) * jax.lax.rsqrt(rs(var) + EPS) * rs(gamma) + rs(beta)
    return jnp.where(y >= 0, y, NEG_SLOPE * y)


def _reference_matched(x, weight, bias, gamma, beta, mean, var):
    """Mirrors the kernel math exactly: bf16 inputs / bf16(scale-folded weights),
    f32 accumulate + epilogue, bf16 rounding at the output store."""
    f32 = jnp.float32
    scale = gamma.astype(f32) * jax.lax.rsqrt(var.astype(f32) + EPS)
    shift = (bias.astype(f32) - mean.astype(f32)) * scale + beta.astype(f32)
    w_s = (weight.astype(f32) * scale[:, None, None, None]).astype(jnp.bfloat16)
    y = jax.lax.conv_general_dilated(
        x.astype(jnp.bfloat16), w_s, window_strides=(1, 1),
        padding=((1, 1), (1, 1)), dimension_numbers=("NCHW", "OIHW", "NCHW"),
        preferred_element_type=f32)
    y = y + shift.reshape(1, -1, 1, 1)
    y = jnp.where(y >= 0, y, NEG_SLOPE * y)
    return y.astype(jnp.bfloat16).astype(f32)


if __name__ == "__main__":
    key = jax.random.PRNGKey(0)
    kx, kw, kb, kg, kbe, km, kv = jax.random.split(key, 7)

    N, Cin, Cout, H, W = 2, 4, 8, 16, 16

    x = jax.random.normal(kx, (N, Cin, H, W), dtype=jnp.float32)
    weight = 0.1 * jax.random.normal(kw, (Cout, Cin, 3, 3), dtype=jnp.float32)
    bias = 0.1 * jax.random.normal(kb, (Cout,), dtype=jnp.float32)
    gamma = 1.0 + 0.1 * jax.random.normal(kg, (Cout,), dtype=jnp.float32)
    beta = 0.1 * jax.random.normal(kbe, (Cout,), dtype=jnp.float32)
    run_mean = 0.05 * jax.random.normal(km, (Cout,), dtype=jnp.float32)
    run_var = jax.random.uniform(kv, (Cout,), minval=0.5, maxval=1.5,
                                 dtype=jnp.float32)

    out = conv_drop_norm(x, weight, bias, gamma, beta, run_mean, run_var)
    out = jax.block_until_ready(out)
    assert out.shape == (N, Cout, H, W)

    # Loose check vs the pure-f32 reference (kernel streams bf16 + bf16 output).
    ref = _reference(x, weight, bias, gamma, beta, run_mean, run_var)
    assert jnp.allclose(out, ref, atol=5e-2, rtol=5e-2), "mismatch vs f32 reference"

    # Tighter check vs a reference that mirrors the kernel's exact numerics.
    ref_m = _reference_matched(x, weight, bias, gamma, beta, run_mean, run_var)
    assert jnp.allclose(out, ref_m, atol=1e-2, rtol=1e-2), \
        "mismatch vs numerics-matched reference"

    print("KERNEL_OK")
</pallas_src>

<mosaic_0001>
module attributes {stable_mosaic.version = 11 : i64} {
  func.func @_conv_bn_lrelu_kernel(%arg0: i32, %arg1: i32, %arg2: memref<1x1x328x8xbf16, #tpu.memory_space<vmem>>, %arg3: memref<72x128xbf16, #tpu.memory_space<vmem>>, %arg4: memref<1x128xf32, #tpu.memory_space<vmem>>, %arg5: memref<1x1x288x128xbf16, #tpu.memory_space<vmem>>, %arg6: memref<288x72xbf16, #tpu.memory_space<vmem>>) attributes {dimension_semantics = [#tpu.dimension_semantics<parallel>, #tpu.dimension_semantics<parallel>], iteration_bounds = array<i64: 2, 1>, scalar_prefetch = 0 : i64, scratch_operands = 1 : i64, tpu.core_type = #tpu.core_type<tc>, window_params = [{transform_indices = @transform_0, window_bounds = array<i64: 1, 1, 328, 8>}, {pipeline_mode = #tpu.pipeline_mode<synchronous>, transform_indices = @transform_1, window_bounds = array<i64: 72, 128>}, {pipeline_mode = #tpu.pipeline_mode<synchronous>, transform_indices = @transform_2, window_bounds = array<i64: 1, 128>}, {transform_indices = @transform_3, window_bounds = array<i64: 1, 1, 288, 128>}]} {
    %c0 = arith.constant 0 : index
    %c0_0 = arith.constant 0 : index
    %c0_1 = arith.constant 0 : index
    %c0_2 = arith.constant 0 : index
    %0 = vector.load %arg2[%c0, %c0_0, %c0_1, %c0_2] : memref<1x1x328x8xbf16, #tpu.memory_space<vmem>>, vector<1x1x288x8xbf16>
    %1 = vector.shape_cast %0 : vector<1x1x288x8xbf16> to vector<288x8xbf16>
    %c0_3 = arith.constant 0 : index
    %c0_4 = arith.constant 0 : index
    %2 = vector.load %arg6[%c0_3, %c0_4] : memref<288x72xbf16, #tpu.memory_space<vmem>>, vector<288x8xbf16>
    tpu.vector_store %arg6[%c0_3, %c0_4], %1 {strides = array<i32>} : memref<288x72xbf16, #tpu.memory_space<vmem>>, vector<288x8xbf16>,
    %c0_5 = arith.constant 0 : index
    %c0_6 = arith.constant 0 : index
    %c1 = arith.constant 1 : index
    %c0_7 = arith.constant 0 : index
    %3 = vector.load %arg2[%c0_5, %c0_6, %c1, %c0_7] : memref<1x1x328x8xbf16, #tpu.memory_space<vmem>>, vector<1x1x288x8xbf16>
    %4 = vector.shape_cast %3 : vector<1x1x288x8xbf16> to vector<288x8xbf16>
    %c0_8 = arith.constant 0 : index
    %c8 = arith.constant 8 : index
    %5 = vector.load %arg6[%c0_8, %c8] : memref<288x72xbf16, #tpu.memory_space<vmem>>, vector<288x8xbf16>
    tpu.vector_store %arg6[%c0_8, %c8], %4 {strides = array<i32>} : memref<288x72xbf16, #tpu.memory_space<vmem>>, vector<288x8xbf16>,
    %c0_9 = arith.constant 0 : index
    %c0_10 = arith.constant 0 : index
    %c2 = arith.constant 2 : index
    %c0_11 = arith.constant 0 : index
    %6 = vector.load %arg2[%c0_9, %c0_10, %c2, %c0_11] : memref<1x1x328x8xbf16, #tpu.memory_space<vmem>>, vector<1x1x288x8xbf16>
    %7 = vector.shape_cast %6 : vector<1x1x288x8xbf16> to vector<288x8xbf16>
    %c0_12 = arith.constant 0 : index
    %c16 = arith.constant 16 : index
    %8 = vector.load %arg6[%c0_12, %c16] : memref<288x72xbf16, #tpu.memory_space<vmem>>, vector<288x8xbf16>
    tpu.vector_store %arg6[%c0_12, %c16], %7 {strides = array<i32>} : memref<288x72xbf16, #tpu.memory_space<vmem>>, vector<288x8xbf16>,
    %c0_13 = arith.constant 0 : index
    %c0_14 = arith.constant 0 : index
    %c18 = arith.constant 18 : index
    %c0_15 = arith.constant 0 : index
    %9 = vector.load %arg2[%c0_13, %c0_14, %c18, %c0_15] : memref<1x1x328x8xbf16, #tpu.memory_space<vmem>>, vector<1x1x288x8xbf16>
    %10 = vector.shape_cast %9 : vector<1x1x288x8xbf16> to vector<288x8xbf16>
    %c0_16 = arith.constant 0 : index
    %c24 = arith.constant 24 : index
    %11 = vector.load %arg6[%c0_16, %c24] : memref<288x72xbf16, #tpu.memory_space<vmem>>, vector<288x8xbf16>
    tpu.vector_store %arg6[%c0_16, %c24], %10 {strides = array<i32>} : memref<288x72xbf16, #tpu.memory_space<vmem>>, vector<288x8xbf16>,
    %c0_17 = arith.constant 0 : index
    %c0_18 = arith.constant 0 : index
    %c19 = arith.constant 19 : index
    %c0_19 = arith.constant 0 : index
    %12 = vector.load %arg2[%c0_17, %c0_18, %c19, %c0_19] : memref<1x1x328x8xbf16, #tpu.memory_space<vmem>>, vector<1x1x288x8xbf16>
    %13 = vector.shape_cast %12 : vector<1x1x288x8xbf16> to vector<288x8xbf16>
    %c0_20 = arith.constant 0 : index
    %c32 = arith.constant 32 : index
    %14 = vector.load %arg6[%c0_20, %c32] : memref<288x72xbf16, #tpu.memory_space<vmem>>, vector<288x8xbf16>
    tpu.vector_store %arg6[%c0_20, %c32], %13 {strides = array<i32>} : memref<288x72xbf16, #tpu.memory_space<vmem>>, vector<288x8xbf16>,
    %c0_21 = arith.constant 0 : index
    %c0_22 = arith.constant 0 : index
    %c20 = arith.constant 20 : index
    %c0_23 = arith.constant 0 : index
    %15 = vector.load %arg2[%c0_21, %c0_22, %c20, %c0_23] : memref<1x1x328x8xbf16, #tpu.memory_space<vmem>>, vector<1x1x288x8xbf16>
    %16 = vector.shape_cast %15 : vector<1x1x288x8xbf16> to vector<288x8xbf16>
    %c0_24 = arith.constant 0 : index
    %c40 = arith.constant 40 : index
    %17 = vector.load %arg6[%c0_24, %c40] : memref<288x72xbf16, #tpu.memory_space<vmem>>, vector<288x8xbf16>
    tpu.vector_store %arg6[%c0_24, %c40], %16 {strides = array<i32>} : memref<288x72xbf16, #tpu.memory_space<vmem>>, vector<288x8xbf16>,
    %c0_25 = arith.constant 0 : index
    %c0_26 = arith.constant 0 : index
    %c36 = arith.constant 36 : index
    %c0_27 = arith.constant 0 : index
    %18 = vector.load %arg2[%c0_25, %c0_26, %c36, %c0_27] : memref<1x1x328x8xbf16, #tpu.memory_space<vmem>>, vector<1x1x288x8xbf16>
    %19 = vector.shape_cast %18 : vector<1x1x288x8xbf16> to vector<288x8xbf16>
    %c0_28 = arith.constant 0 : index
    %c48 = arith.constant 48 : index
    %20 = vector.load %arg6[%c0_28, %c48] : memref<288x72xbf16, #tpu.memory_space<vmem>>, vector<288x8xbf16>
    tpu.vector_store %arg6[%c0_28, %c48], %19 {strides = array<i32>} : memref<288x72xbf16, #tpu.memory_space<vmem>>, vector<288x8xbf16>,
    %c0_29 = arith.constant 0 : index
    %c0_30 = arith.constant 0 : index
    %c37 = arith.constant 37 : index
    %c0_31 = arith.constant 0 : index
    %21 = vector.load %arg2[%c0_29, %c0_30, %c37, %c0_31] : memref<1x1x328x8xbf16, #tpu.memory_space<vmem>>, vector<1x1x288x8xbf16>
    %22 = vector.shape_cast %21 : vector<1x1x288x8xbf16> to vector<288x8xbf16>
    %c0_32 = arith.constant 0 : index
    %c56 = arith.constant 56 : index
    %23 = vector.load %arg6[%c0_32, %c56] : memref<288x72xbf16, #tpu.memory_space<vmem>>, vector<288x8xbf16>
    tpu.vector_store %arg6[%c0_32, %c56], %22 {strides = array<i32>} : memref<288x72xbf16, #tpu.memory_space<vmem>>, vector<288x8xbf16>,
    %c0_33 = arith.constant 0 : index
    %c0_34 = arith.constant 0 : index
    %c38 = arith.constant 38 : index
    %c0_35 = arith.constant 0 : index
    %24 = vector.load %arg2[%c0_33, %c0_34, %c38, %c0_35] : memref<1x1x328x8xbf16, #tpu.memory_space<vmem>>, vector<1x1x288x8xbf16>
    %25 = vector.shape_cast %24 : vector<1x1x288x8xbf16> to vector<288x8xbf16>
    %c0_36 = arith.constant 0 : index
    %c64 = arith.constant 64 : index
    %26 = vector.load %arg6[%c0_36, %c64] : memref<288x72xbf16, #tpu.memory_space<vmem>>, vector<288x8xbf16>
    tpu.vector_store %arg6[%c0_36, %c64], %25 {strides = array<i32>} : memref<288x72xbf16, #tpu.memory_space<vmem>>, vector<288x8xbf16>,
    %c0_37 = arith.constant 0 : index
    %c0_38 = arith.constant 0 : index
    %27 = vector.load %arg6[%c0_37, %c0_38] : memref<288x72xbf16, #tpu.memory_space<vmem>>, vector<288x72xbf16>
    %c0_39 = arith.constant 0 : index
    %c0_40 = arith.constant 0 : index
    %28 = vector.load %arg3[%c0_39, %c0_40] : memref<72x128xbf16, #tpu.memory_space<vmem>>, vector<72x128xbf16>
    %cst = arith.constant dense<0.000000e+00> : vector<288x128xf32>
    %29 = tpu.matmul %27, %28, %cst {dimension_numbers = #tpu.dot_dimension_numbers<[1], [0], [0], [1], [0, 0, 1, 1], [], []>} : vector<288x72xbf16>, vector<72x128xbf16>, vector<288x128xf32> -> vector<288x128xf32>
    %c0_41 = arith.constant 0 : index
    %c0_42 = arith.constant 0 : index
    %30 = vector.load %arg4[%c0_41, %c0_42] : memref<1x128xf32, #tpu.memory_space<vmem>>, vector<1x128xf32>
    %31 = vector.broadcast %30 : vector<1x128xf32> to vector<288x128xf32>
    %32 = arith.addf %29, %31 : vector<288x128xf32>
    %cst_43 = arith.constant 0.000000e+00 : f32
    %33 = vector.broadcast %cst_43 : f32 to vector<288x128xf32>
    %34 = arith.cmpf oge, %32, %33 : vector<288x128xf32>
    %cst_44 = arith.constant 0.00999999977 : f32
    %35 = vector.broadcast %cst_44 : f32 to vector<288x128xf32>
    %36 = arith.mulf %35, %32 : vector<288x128xf32>
    %37 = arith.select %34, %32, %36 : vector<288x128xi1>, vector<288x128xf32>
    %38 = arith.truncf %37 : vector<288x128xf32> to vector<288x128xbf16>
    %c0_45 = arith.constant 0 : index
    %c0_46 = arith.constant 0 : index
    %c0_47 = arith.constant 0 : index
    %c0_48 = arith.constant 0 : index
    %39 = vector.load %arg5[%c0_45, %c0_46, %c0_47, %c0_48] : memref<1x1x288x128xbf16, #tpu.memory_space<vmem>>, vector<1x1x288x128xbf16>
    %40 = vector.shape_cast %39 : vector<1x1x288x128xbf16> to vector<288x128xbf16>
    %41 = vector.shape_cast %38 : vector<288x128xbf16> to vector<1x1x288x128xbf16>
    tpu.vector_store %arg5[%c0_45, %c0_46, %c0_47, %c0_48], %41 {strides = array<i32>} : memref<1x1x288x128xbf16, #tpu.memory_space<vmem>>, vector<1x1x288x128xbf16>,
    return
  }
  func.func @transform_0(%arg0: i32, %arg1: i32) -> (i32, i32, i32, i32) {
    %c0_i32 = arith.constant 0 : i32
    %c0_i32_0 = arith.constant 0 : i32
    %c0_i32_1 = arith.constant 0 : i32
    return %arg0, %arg1, %c0_i32, %c0_i32_0 : i32, i32, i32, i32
  }
  func.func @transform_1(%arg0: i32, %arg1: i32) -> (i32, i32) {
    %c0_i32 = arith.constant 0 : i32
    %c0_i32_0 = arith.constant 0 : i32
    %c0_i32_1 = arith.constant 0 : i32
    return %c0_i32, %c0_i32_0 : i32, i32
  }
  func.func @transform_2(%arg0: i32, %arg1: i32) -> (i32, i32) {
    %c0_i32 = arith.constant 0 : i32
    %c0_i32_0 = arith.constant 0 : i32
    %c0_i32_1 = arith.constant 0 : i32
    return %c0_i32, %c0_i32_0 : i32, i32
  }
  func.func @transform_3(%arg0: i32, %arg1: i32) -> (i32, i32, i32, i32) {
    %c0_i32 = arith.constant 0 : i32
    %c0_i32_0 = arith.constant 0 : i32
    %c0_i32_1 = arith.constant 0 : i32
    return %arg0, %arg1, %c0_i32, %c0_i32_0 : i32, i32, i32, i32
  }
}

</mosaic_0001>

<llo_original>
// kernel: tpu_custom_call.1
$region0: #{tpu_custom_call.1}
  #allocation0 [shape = 'u32[]', space=smem, size = 0x4, offset = 0x4, fixed_abs, tag = 'smem constant byte address 0x4 - core index']
  #allocation1 [shape = 'u32[144,128]{1,0:T(1,128)}', space=vmem, size = 0x12000, scoped, tag = 'internal scratch']
  #allocation2 [shape = 'bf16[288,72]{1,0:T(8,128)(2,1)}', space=vmem, size = 0x12000, scoped, tag = 'scratch operand']
  %s0 = inlined_call_operand.vmem [shape: bf16[2,1,328,8], index: 0, kind: input, shape index: {}]
  %s1 = inlined_call_operand.vmem [shape: bf16[72,128], index: 1, kind: input, shape index: {}]
  %s2 = inlined_call_operand.vmem [shape: f32[1,128], index: 2, kind: input, shape index: {}]
  %s3 = inlined_call_operand.hbm [shape: bf16[2,1,288,128], index: 3, kind: output, shape index: {}]
  %s4 = sld [smem:[#allocation0]]
  $region45: #{tpu_custom_call.1} parent=0
    _
  %s6 = ssub.s32 1, %s4
  %s7 = scalar_select 0, %s6, %s4
  $region1: #{tpu_custom_call.1} parent=0
    #allocation3 [shape = 'u8[147456]{0}', space=vmem, size = 0x24000, scoped, tag = 'output window, operand 0']
    #allocation4 [shape = 's32[2]{0}', space=sflag, size = 0x8, scoped, tag = 'scoped memory for tpu_custom_call.1']
    %8 = vsyncpa [#allocation4], 0
    %s9 = scalar_lea.sflag [#allocation4], 1
    %10 = vsyncpa %s9, 0
    loop: start=0, step=1, limit=4
    $region2: #{tpu_custom_call.1} parent=1 // loop_pre_header
      _
    $region3: #{tpu_custom_call.1} parent=1 // loop_header
      %s12 = sphi 0, %s16
      %p13 = scmp.ge.s32.totalorder %s12, 4
      %s19 = sphi 0, %s31
      %s20 = sphi 0, %s27
      %s21 = sphi 0, %s19
      %s22 = sphi 0, %s20
      %s23 = sphi 0, %s21
      %s24 = sphi 0, %s22
      %s36 = sphi 0, %s38
      %s39 = sphi 0, %s36
      %s40 = sphi 0, %s39
      %s56 = sphi 0, %s40
      %s60 = sphi 0, %s60
      %s62 = sphi 0, %s60
      %s63 = sphi 0, %s62
      %s77 = sphi 0, %s63
      %s81 = sphi 0, %s81
      %s83 = sphi 0, %s81
      %s84 = sphi 0, %s83
      %s98 = sphi 0, %s84
      %s106 = sphi 0, %s108
      %s109 = sphi 0, %s106
      %s110 = sphi 0, %s109
      %s126 = sphi 0, %s110
    $region4: #{tpu_custom_call.1} parent=1 // loop_header_branch
      %15 = sbr.rel (%p13) target = $region8
    $region5: #{tpu_custom_call.1} parent=1 // loop_body
      %s17 = ssub.s32 %s12, 1
      %s18 = ssub.s32 %s12, 2
      %s25 = sadd.s32 1, %s20
      %p26 = scmp.ge.s32.totalorder %s25, 1
      %s27 = scalar_select %p26, 0, %s25
      %s28 = sadd.s32 1, %s19
      %s29 = scalar_select %p26, %s28, %s19
      %p30 = scmp.ge.s32.totalorder %s29, 2
      %s31 = scalar_select %p30, 0, %s29
      %s32 = ssub.s32 %s19, %s31
      %s33 = ssub.s32 %s20, %s27
      %s34 = sor.u32 %s32, %s33
      %p35 = scmp.eq.s32.totalorder %s34, 0
      %s37 = sadd.s32 %s36, 1
      %s38 = scalar_select %p35, %s36, %s37
      %p41 = pneg %p35
      %p42 = scmp.eq.s32.totalorder %s12, 1
      %p43 = por %p41, %p42
      %p44 = scmp.ne.s32.totalorder %s36, %s39
      %p45 = scmp.eq.s32.totalorder %s12, 0
      %p46 = por %p44, %p45
      %p47 = scmp.ne.s32.totalorder %s36, %s39
      %p48 = scmp.eq.s32.totalorder %s17, 1
      %p49 = por %p47, %p48
      %p50 = scmp.ne.s32.totalorder %s39, %s40
      %p51 = scmp.eq.s32.totalorder %s17, 0
      %p52 = por %p50, %p51
      %p53 = scmp.ne.s32.totalorder %s39, %s40
      %p54 = scmp.eq.s32.totalorder %s18, 1
      %p55 = por %p53, %p54
      %p57 = scmp.ne.s32.totalorder %s40, %s56
      %p58 = scmp.eq.s32.totalorder %s18, 0
      %p59 = por %p57, %p58
      %s61 = sadd.s32 %s60, 1
      %p64 = scmp.eq.s32.totalorder %s12, 1
      %p65 = scmp.ne.s32.totalorder %s60, %s62
      %p66 = scmp.eq.s32.totalorder %s12, 0
      %p67 = por %p65, %p66
      %p68 = scmp.ne.s32.totalorder %s60, %s62
      %p69 = scmp.eq.s32.totalorder %s17, 1
      %p70 = por %p68, %p69
      %p71 = scmp.ne.s32.totalorder %s62, %s63
      %p72 = scmp.eq.s32.totalorder %s17, 0
      %p73 = por %p71, %p72
      %p74 = scmp.ne.s32.totalorder %s62, %s63
      %p75 = scmp.eq.s32.totalorder %s18, 1
      %p76 = por %p74, %p75
      %p78 = scmp.ne.s32.totalorder %s63, %s77
      %p79 = scmp.eq.s32.totalorder %s18, 0
      %p80 = por %p78, %p79
      %s82 = sadd.s32 %s81, 1
      %p85 = scmp.eq.s32.totalorder %s12, 1
      %p86 = scmp.ne.s32.totalorder %s81, %s83
      %p87 = scmp.eq.s32.totalorder %s12, 0
      %p88 = por %p86, %p87
      %p89 = scmp.ne.s32.totalorder %s81, %s83
      %p90 = scmp.eq.s32.totalorder %s17, 1
      %p91 = por %p89, %p90
      %p92 = scmp.ne.s32.totalorder %s83, %s84
      %p93 = scmp.eq.s32.totalorder %s17, 0
      %p94 = por %p92, %p93
      %p95 = scmp.ne.s32.totalorder %s83, %s84
      %p96 = scmp.eq.s32.totalorder %s18, 1
      %p97 = por %p95, %p96
      %p99 = scmp.ne.s32.totalorder %s84, %s98
      %p100 = scmp.eq.s32.totalorder %s18, 0
      %p101 = por %p99, %p100
      %s102 = ssub.s32 %s19, %s31
      %s103 = ssub.s32 %s20, %s27
      %s104 = sor.u32 %s102, %s103
      %p105 = scmp.eq.s32.totalorder %s104, 0
      %s107 = sadd.s32 %s106, 1
      %s108 = scalar_select %p105, %s106, %s107
      %p111 = pneg %p105
      %p112 = scmp.eq.s32.totalorder %s12, 1
      %p113 = por %p111, %p112
      %p114 = scmp.ne.s32.totalorder %s106, %s109
      %p115 = scmp.eq.s32.totalorder %s12, 0
      %p116 = por %p114, %p115
      %p117 = scmp.ne.s32.totalorder %s106, %s109
      %p118 = scmp.eq.s32.totalorder %s17, 1
      %p119 = por %p117, %p118
      %p120 = scmp.ne.s32.totalorder %s109, %s110
      %p121 = scmp.eq.s32.totalorder %s17, 0
      %p122 = por %p120, %p121
      %p123 = scmp.ne.s32.totalorder %s109, %s110
      %p124 = scmp.eq.s32.totalorder %s18, 1
      %p125 = por %p123, %p124
      %p127 = scmp.ne.s32.totalorder %s110, %s126
      %p128 = scmp.eq.s32.totalorder %s18, 0
      %p129 = por %p127, %p128
      %p130 = scmp.le.s32.totalorder 1, %s12
      %p131 = scmp.lt.s32.totalorder %s12, 3
      %p132 = pnand %p130, %p131
      %p133 = pneg %p132
      // Predicated region
      $region9: #{tpu_custom_call.1} parent=5 // pred_check
        _
      $region10: #{tpu_custom_call.1} parent=5 // pred_check_branch
        %135 = sbr.rel (%p132) target = $region12
      $region11: #{tpu_custom_call.1} parent=5 // pred_region
        %s136 = ssub.s32 %s12, 1
        // Predicated region
        $region13: #{tpu_custom_call.1} parent=11 // pred_check
          %p137 = pneg %p73
        $region14: #{tpu_custom_call.1} parent=11 // pred_check_branch
          %139 = sbr.rel (%p137) target = $region16
        $region15: #{tpu_custom_call.1} parent=11 // pred_region
          _
        $region16: #{tpu_custom_call.1} parent=11 // pred_fallthru
          _
        // Predicated region
        $region17: #{tpu_custom_call.1} parent=11 // pred_check
          %p140 = pneg %p94
        $region18: #{tpu_custom_call.1} parent=11 // pred_check_branch
          %142 = sbr.rel (%p140) target = $region20
        $region19: #{tpu_custom_call.1} parent=11 // pred_region
          _
        $region20: #{tpu_custom_call.1} parent=11 // pred_fallthru
          _
      $region12: #{tpu_custom_call.1} parent=5 // pred_fallthru
        _
      %p143 = scmp.lt.s32.totalorder %s12, 2
      // Predicated region
      $region21: #{tpu_custom_call.1} parent=5 // pred_check
        %p144 = pneg %p143
      $region22: #{tpu_custom_call.1} parent=5 // pred_check_branch
        %146 = sbr.rel (%p144) target = $region24
      $region23: #{tpu_custom_call.1} parent=5 // pred_region
        // Predicated region
        $region25: #{tpu_custom_call.1} parent=23 // pred_check
          %p147 = pneg %p46
        $region26: #{tpu_custom_call.1} parent=23 // pred_check_branch
          %149 = sbr.rel (%p147) target = $region28
        $region27: #{tpu_custom_call.1} parent=23 // pred_region
          %p150 = scmp.lt.s32.totalorder %s19, 1
          %s151 = scalar_select %p150, %s19, 1
          %p152 = scmp.lt.s32.totalorder %s20, 0
          %s153 = scalar_select %p152, %s20, 0
          %s154 = smul.addr %s153, 41
          %s155 = smul.addr %s151, 41
          %s156 = sadd.s32 %s154, %s155
          %s157 = smul.addr %s156, 4
          %s158 = scalar_lea.vmem %s0, %s157
        $region28: #{tpu_custom_call.1} parent=23 // pred_fallthru
          _
      $region24: #{tpu_custom_call.1} parent=5 // pred_fallthru
        _
      %p159 = scmp.le.s32.totalorder 1, %s12
      %p160 = scmp.lt.s32.totalorder %s12, 3
      %p161 = pnand %p159, %p160
      %p162 = pneg %p161
      // Predicated region
      $region29: #{tpu_custom_call.1} parent=5 // pred_check
        _
      $region30: #{tpu_custom_call.1} parent=5 // pred_check_branch
        %164 = sbr.rel (%p161) target = $region32
      $region31: #{tpu_custom_call.1} parent=5 // pred_region
        %s165 = ssub.s32 %s12, 1
        %p166 = scmp.lt.s32.totalorder %s21, 1
        %s167 = scalar_select %p166, %s21, 1
        %p168 = scmp.lt.s32.totalorder %s22, 0
        %s169 = scalar_select %p168, %s22, 0
        %s170 = smul.addr %s169, 41
        %s171 = smul.addr %s167, 41
        %s172 = sadd.s32 %s170, %s171
        %s173 = smul.addr %s172, 4
        %s174 = scalar_lea.vmem %s0, %s173
        %p175 = pneg %p52
        %p176 = pneg %p49
        %p177 = pneg %p73
        %p178 = pneg %p70
        %p179 = pneg %p94
        %p180 = pneg %p91
        %p181 = pneg %p122
        %p182 = pneg %p119
        %s183 = sand.u32 %s109, 1
        %s184 = scalar_lea.sflag [#allocation4], %s183
        %s185 = sand.u32 %s109, 1
        %s186 = smul.addr %s185, 144
        %s187 = scalar_lea.vmem [#allocation3], %s186
        %p188 = scmp.lt.s32.totalorder %s21, 1
        %s189 = scalar_select %p188, %s21, 1
        %p190 = scmp.lt.s32.totalorder %s22, 0
        %s191 = scalar_select %p190, %s22, 0
        %s192 = smul.addr %s191, 41
        %s193 = smul.addr %s189, 41
        %s194 = sadd.s32 %s192, %s193
        %s195 = smul.addr %s194, 4
        %s196 = scalar_lea.vmem %s0, %s195
        %v198 = vld [vmem:[%s196] sm:$0xf]
        %v199 = vld [vmem:[%s196 + $0x4] sm:$0xf]
        %v200 = vld [vmem:[%s196 + $0x8] sm:$0xf]
        %v201 = vld [vmem:[%s196 + $0xc] sm:$0xf]
        %v202 = vld [vmem:[%s196 + $0x10] sm:$0xf]
        %v203 = vld [vmem:[%s196 + $0x14] sm:$0xf]
        %v204 = vld [vmem:[%s196 + $0x18] sm:$0xf]
        %v205 = vld [vmem:[%s196 + $0x1c] sm:$0xf]
        %v206 = vld [vmem:[%s196 + $0x20] sm:$0xf]
        %v207 = vld [vmem:[%s196 + $0x24] sm:$0xf]
        %v208 = vld [vmem:[%s196 + $0x28] sm:$0xf]
        %v209 = vld [vmem:[%s196 + $0x2c] sm:$0xf]
        %v210 = vld [vmem:[%s196 + $0x30] sm:$0xf]
        %v211 = vld [vmem:[%s196 + $0x34] sm:$0xf]
        %v212 = vld [vmem:[%s196 + $0x38] sm:$0xf]
        %v213 = vld [vmem:[%s196 + $0x3c] sm:$0xf]
        %v214 = vld [vmem:[%s196 + $0x40] sm:$0xf]
        %v215 = vld [vmem:[%s196 + $0x44] sm:$0xf]
        %v216 = vld [vmem:[%s196 + $0x48] sm:$0xf]
        %v217 = vld [vmem:[%s196 + $0x4c] sm:$0xf]
        %v218 = vld [vmem:[%s196 + $0x50] sm:$0xf]
        %v219 = vld [vmem:[%s196 + $0x54] sm:$0xf]
        %v220 = vld [vmem:[%s196 + $0x58] sm:$0xf]
        %v221 = vld [vmem:[%s196 + $0x5c] sm:$0xf]
        %v222 = vld [vmem:[%s196 + $0x60] sm:$0xf]
        %v223 = vld [vmem:[%s196 + $0x64] sm:$0xf]
        %v224 = vld [vmem:[%s196 + $0x68] sm:$0xf]
        %v225 = vld [vmem:[%s196 + $0x6c] sm:$0xf]
        %v226 = vld [vmem:[%s196 + $0x70] sm:$0xf]
        %v227 = vld [vmem:[%s196 + $0x74] sm:$0xf]
        %v228 = vld [vmem:[%s196 + $0x78] sm:$0xf]
        %v229 = vld [vmem:[%s196 + $0x7c] sm:$0xf]
        %v230 = vld [vmem:[%s196 + $0x80] sm:$0xf]
        %v231 = vld [vmem:[%s196 + $0x84] sm:$0xf]
        %v232 = vld [vmem:[%s196 + $0x88] sm:$0xf]
        %v233 = vld [vmem:[%s196 + $0x8c] sm:$0xf]
        %vm234 = vcmask 60416
        %235 = vst.msk [vmem:[#allocation2] sm:$0xf] %vm234, %v198
        %236 = vst.msk [vmem:[#allocation2 + $0x4] sm:$0xf] %vm234, %v199
        %237 = vst.msk [vmem:[#allocation2 + $0x8] sm:$0xf] %vm234, %v200
        %238 = vst.msk [vmem:[#allocation2 + $0xc] sm:$0xf] %vm234, %v201
        %239 = vst.msk [vmem:[#allocation2 + $0x10] sm:$0xf] %vm234, %v202
        %240 = vst.msk [vmem:[#allocation2 + $0x14] sm:$0xf] %vm234, %v203
        %241 = vst.msk [vmem:[#allocation2 + $0x18] sm:$0xf] %vm234, %v204
        %242 = vst.msk [vmem:[#allocation2 + $0x1c] sm:$0xf] %vm234, %v205
        %243 = vst.msk [vmem:[#allocation2 + $0x20] sm:$0xf] %vm234, %v206
        %244 = vst.msk [vmem:[#allocation2 + $0x24] sm:$0xf] %vm234, %v207
        %245 = vst.msk [vmem:[#allocation2 + $0x28] sm:$0xf] %vm234, %v208
        %246 = vst.msk [vmem:[#allocation2 + $0x2c] sm:$0xf] %vm234, %v209
        %247 = vst.msk [vmem:[#allocation2 + $0x30] sm:$0xf] %vm234, %v210
        %248 = vst.msk [vmem:[#allocation2 + $0x34] sm:$0xf] %vm234, %v211
        %249 = vst.msk [vmem:[#allocation2 + $0x38] sm:$0xf] %vm234, %v212
        %250 = vst.msk [vmem:[#allocation2 + $0x3c] sm:$0xf] %vm234, %v213
        %251 = vst.msk [vmem:[#allocation2 + $0x40] sm:$0xf] %vm234, %v214
        %252 = vst.msk [vmem:[#allocation2 + $0x44] sm:$0xf] %vm234, %v215
        %253 = vst.msk [vmem:[#allocation2 + $0x48] sm:$0xf] %vm234, %v216
        %254 = vst.msk [vmem:[#allocation2 + $0x4c] sm:$0xf] %vm234, %v217
        %255 = vst.msk [vmem:[#allocation2 + $0x50] sm:$0xf] %vm234, %v218
        %256 = vst.msk [vmem:[#allocation2 + $0x54] sm:$0xf] %vm234, %v219
        %257 = vst.msk [vmem:[#allocation2 + $0x58] sm:$0xf] %vm234, %v220
        %258 = vst.msk [vmem:[#allocation2 + $0x5c] sm:$0xf] %vm234, %v221
        %259 = vst.msk [vmem:[#allocation2 + $0x60] sm:$0xf] %vm234, %v222
        %260 = vst.msk [vmem:[#allocation2 + $0x64] sm:$0xf] %vm234, %v223
        %261 = vst.msk [vmem:[#allocation2 + $0x68] sm:$0xf] %vm234, %v224
        %262 = vst.msk [vmem:[#allocation2 + $0x6c] sm:$0xf] %vm234, %v225
        %263 = vst.msk [vmem:[#allocation2 + $0x70] sm:$0xf] %vm234, %v226
        %264 = vst.msk [vmem:[#allocation2 + $0x74] sm:$0xf] %vm234, %v227
        %265 = vst.msk [vmem:[#allocation2 + $0x78] sm:$0xf] %vm234, %v228
        %266 = vst.msk [vmem:[#allocation2 + $0x7c] sm:$0xf] %vm234, %v229
        %267 = vst.msk [vmem:[#allocation2 + $0x80] sm:$0xf] %vm234, %v230
        %268 = vst.msk [vmem:[#allocation2 + $0x84] sm:$0xf] %vm234, %v231
        %269 = vst.msk [vmem:[#allocation2 + $0x88] sm:$0xf] %vm234, %v232
        %270 = vst.msk [vmem:[#allocation2 + $0x8c] sm:$0xf] %vm234, %v233
        %v271 = vld [vmem:[%s196] sm:$0xf]
        %v272 = vld [vmem:[%s196 + $0x4] sm:$0xf]
        %v273 = vld [vmem:[%s196 + $0x8] sm:$0xf]
        %v274 = vld [vmem:[%s196 + $0xc] sm:$0xf]
        %v275 = vld [vmem:[%s196 + $0x10] sm:$0xf]
        %v276 = vld [vmem:[%s196 + $0x14] sm:$0xf]
        %v277 = vld [vmem:[%s196 + $0x18] sm:$0xf]
        %v278 = vld [vmem:[%s196 + $0x1c] sm:$0xf]
        %v279 = vld [vmem:[%s196 + $0x20] sm:$0xf]
        %v280 = vld [vmem:[%s196 + $0x24] sm:$0xf]
        %v281 = vld [vmem:[%s196 + $0x28] sm:$0xf]
        %v282 = vld [vmem:[%s196 + $0x2c] sm:$0xf]
        %v283 = vld [vmem:[%s196 + $0x30] sm:$0xf]
        %v284 = vld [vmem:[%s196 + $0x34] sm:$0xf]
        %v285 = vld [vmem:[%s196 + $0x38] sm:$0xf]
        %v286 = vld [vmem:[%s196 + $0x3c] sm:$0xf]
        %v287 = vld [vmem:[%s196 + $0x40] sm:$0xf]
        %v288 = vld [vmem:[%s196 + $0x44] sm:$0xf]
        %v289 = vld [vmem:[%s196 + $0x48] sm:$0xf]
        %v290 = vld [vmem:[%s196 + $0x4c] sm:$0xf]
        %v291 = vld [vmem:[%s196 + $0x50] sm:$0xf]
        %v292 = vld [vmem:[%s196 + $0x54] sm:$0xf]
        %v293 = vld [vmem:[%s196 + $0x58] sm:$0xf]
        %v294 = vld [vmem:[%s196 + $0x5c] sm:$0xf]
        %v295 = vld [vmem:[%s196 + $0x60] sm:$0xf]
        %v296 = vld [vmem:[%s196 + $0x64] sm:$0xf]
        %v297 = vld [vmem:[%s196 + $0x68] sm:$0xf]
        %v298 = vld [vmem:[%s196 + $0x6c] sm:$0xf]
        %v299 = vld [vmem:[%s196 + $0x70] sm:$0xf]
        %v300 = vld [vmem:[%s196 + $0x74] sm:$0xf]
        %v301 = vld [vmem:[%s196 + $0x78] sm:$0xf]
        %v302 = vld [vmem:[%s196 + $0x7c] sm:$0xf]
        %v303 = vld [vmem:[%s196 + $0x80] sm:$0xf]
        %v304 = vld [vmem:[%s196 + $0x84] sm:$0xf]
        %v305 = vld [vmem:[%s196 + $0x88] sm:$0xf]
        %v306 = vld [vmem:[%s196 + $0x8c] sm:$0xf]
        %v307 = vld [vmem:[%s196 + $0x90] sm:$0x1]
        %vm308 = vsmask.f32 3328
        %vm309 = vsmask.f32 7440
        %vm310 = vmor %vm308, %vm309
        %v312 = vshrl.u32 %v271, 16
        %v314 = vrot.slane %v312, 4
        %v315 = vshll.u32 %v271, 16
        %v317 = vrot.slane %v315, 5
        %v318 = vor.u32 %v314, %v317
        %v319 = vrot.slane %v318, 4
        %v321 = vshll.u32 %v272, 16
        %v323 = vrot.slane %v321, 5
        %v324 = vsel %vm310, %v319, %v323
        %v325 = vshrl.u32 %v272, 16
        %v327 = vrot.slane %v325, 4
        %v328 = vor.u32 %v327, %v323
        %v329 = vrot.slane %v328, 4
        %v331 = vshll.u32 %v273, 16
        %v333 = vrot.slane %v331, 5
        %v334 = vsel %vm310, %v329, %v333
        %v335 = vshrl.u32 %v273, 16
        %v337 = vrot.slane %v335, 4
        %v338 = vor.u32 %v337, %v333
        %v339 = vrot.slane %v338, 4
        %v341 = vshll.u32 %v274, 16
        %v343 = vrot.slane %v341, 5
        %v344 = vsel %vm310, %v339, %v343
        %v345 = vshrl.u32 %v274, 16
        %v347 = vrot.slane %v345, 4
        %v348 = vor.u32 %v347, %v343
        %v349 = vrot.slane %v348, 4
        %v351 = vshll.u32 %v275, 16
        %v353 = vrot.slane %v351, 5
        %v354 = vsel %vm310, %v349, %v353
        %v355 = vshrl.u32 %v275, 16
        %v357 = vrot.slane %v355, 4
        %v358 = vor.u32 %v357, %v353
        %v359 = vrot.slane %v358, 4
        %v361 = vshll.u32 %v276, 16
        %v363 = vrot.slane %v361, 5
        %v364 = vsel %vm310, %v359, %v363
        %v365 = vshrl.u32 %v276, 16
        %v367 = vrot.slane %v365, 4
        %v368 = vor.u32 %v367, %v363
        %v369 = vrot.slane %v368, 4
        %v371 = vshll.u32 %v277, 16
        %v373 = vrot.slane %v371, 5
        %v374 = vsel %vm310, %v369, %v373
        %v375 = vshrl.u32 %v277, 16
        %v377 = vrot.slane %v375, 4
        %v378 = vor.u32 %v377, %v373
        %v379 = vrot.slane %v378, 4
        %v381 = vshll.u32 %v278, 16
        %v383 = vrot.slane %v381, 5
        %v384 = vsel %vm310, %v379, %v383
        %v385 = vshrl.u32 %v278, 16
        %v387 = vrot.slane %v385, 4
        %v388 = vor.u32 %v387, %v383
        %v389 = vrot.slane %v388, 4
        %v391 = vshll.u32 %v279, 16
        %v393 = vrot.slane %v391, 5
        %v394 = vsel %vm310, %v389, %v393
        %v395 = vshrl.u32 %v279, 16
        %v397 = vrot.slane %v395, 4
        %v398 = vor.u32 %v397, %v393
        %v399 = vrot.slane %v398, 4
        %v401 = vshll.u32 %v280, 16
        %v403 = vrot.slane %v401, 5
        %v404 = vsel %vm310, %v399, %v403
        %v405 = vshrl.u32 %v280, 16
        %v407 = vrot.slane %v405, 4
        %v408 = vor.u32 %v407, %v403
        %v409 = vrot.slane %v408, 4
        %v411 = vshll.u32 %v281, 16
        %v413 = vrot.slane %v411, 5
        %v414 = vsel %vm310, %v409, %v413
        %v415 = vshrl.u32 %v281, 16
        %v417 = vrot.slane %v415, 4
        %v418 = vor.u32 %v417, %v413
        %v419 = vrot.slane %v418, 4
        %v421 = vshll.u32 %v282, 16
        %v423 = vrot.slane %v421, 5
        %v424 = vsel %vm310, %v419, %v423
        %v425 = vshrl.u32 %v282, 16
        %v427 = vrot.slane %v425, 4
        %v428 = vor.u32 %v427, %v423
        %v429 = vrot.slane %v428, 4
        %v431 = vshll.u32 %v283, 16
        %v433 = vrot.slane %v431, 5
        %v434 = vsel %vm310, %v429, %v433
        %v435 = vshrl.u32 %v283, 16
        %v437 = vrot.slane %v435, 4
        %v438 = vor.u32 %v437, %v433
        %v439 = vrot.slane %v438, 4
        %v441 = vshll.u32 %v284, 16
        %v443 = vrot.slane %v441, 5
        %v444 = vsel %vm310, %v439, %v443
        %v445 = vshrl.u32 %v284, 16
        %v447 = vrot.slane %v445, 4
        %v448 = vor.u32 %v447, %v443
        %v449 = vrot.slane %v448, 4
        %v451 = vshll.u32 %v285, 16
        %v453 = vrot.slane %v451, 5
        %v454 = vsel %vm310, %v449, %v453
        %v455 = vshrl.u32 %v285, 16
        %v457 = vrot.slane %v455, 4
        %v458 = vor.u32 %v457, %v453
        %v459 = vrot.slane %v458, 4
        %v461 = vshll.u32 %v286, 16
        %v463 = vrot.slane %v461, 5
        %v464 = vsel %vm310, %v459, %v463
        %v465 = vshrl.u32 %v286, 16
        %v467 = vrot.slane %v465, 4
        %v468 = vor.u32 %v467, %v463
        %v469 = vrot.slane %v468, 4
        %v471 = vshll.u32 %v287, 16
        %v473 = vrot.slane %v471, 5
        %v474 = vsel %vm310, %v469, %v473
        %v475 = vshrl.u32 %v287, 16
        %v477 = vrot.slane %v475, 4
        %v478 = vor.u32 %v477, %v473
        %v479 = vrot.slane %v478, 4
        %v481 = vshll.u32 %v288, 16
        %v483 = vrot.slane %v481, 5
        %v484 = vsel %vm310, %v479, %v483
        %v485 = vshrl.u32 %v288, 16
        %v487 = vrot.slane %v485, 4
        %v488 = vor.u32 %v487, %v483
        %v489 = vrot.slane %v488, 4
        %v491 = vshll.u32 %v289, 16
        %v493 = vrot.slane %v491, 5
        %v494 = vsel %vm310, %v489, %v493
        %v495 = vshrl.u32 %v289, 16
        %v497 = vrot.slane %v495, 4
        %v498 = vor.u32 %v497, %v493
        %v499 = vrot.slane %v498, 4
        %v501 = vshll.u32 %v290, 16
        %v503 = vrot.slane %v501, 5
        %v504 = vsel %vm310, %v499, %v503
        %v505 = vshrl.u32 %v290, 16
        %v507 = vrot.slane %v505, 4
        %v508 = vor.u32 %v507, %v503
        %v509 = vrot.slane %v508, 4
        %v511 = vshll.u32 %v291, 16
        %v513 = vrot.slane %v511, 5
        %v514 = vsel %vm310, %v509, %v513
        %v515 = vshrl.u32 %v291, 16
        %v517 = vrot.slane %v515, 4
        %v518 = vor.u32 %v517, %v513
        %v519 = vrot.slane %v518, 4
        %v521 = vshll.u32 %v292, 16
        %v523 = vrot.slane %v521, 5
        %v524 = vsel %vm310, %v519, %v523
        %v525 = vshrl.u32 %v292, 16
        %v527 = vrot.slane %v525, 4
        %v528 = vor.u32 %v527, %v523
        %v529 = vrot.slane %v528, 4
        %v531 = vshll.u32 %v293, 16
        %v533 = vrot.slane %v531, 5
        %v534 = vsel %vm310, %v529, %v533
        %v535 = vshrl.u32 %v293, 16
        %v537 = vrot.slane %v535, 4
        %v538 = vor.u32 %v537, %v533
        %v539 = vrot.slane %v538, 4
        %v541 = vshll.u32 %v294, 16
        %v543 = vrot.slane %v541, 5
        %v544 = vsel %vm310, %v539, %v543
        %v545 = vshrl.u32 %v294, 16
        %v547 = vrot.slane %v545, 4
        %v548 = vor.u32 %v547, %v543
        %v549 = vrot.slane %v548, 4
        %v551 = vshll.u32 %v295, 16
        %v553 = vrot.slane %v551, 5
        %v554 = vsel %vm310, %v549, %v553
        %v555 = vshrl.u32 %v295, 16
        %v557 = vrot.slane %v555, 4
        %v558 = vor.u32 %v557, %v553
        %v559 = vrot.slane %v558, 4
        %v561 = vshll.u32 %v296, 16
        %v563 = vrot.slane %v561, 5
        %v564 = vsel %vm310, %v559, %v563
        %v565 = vshrl.u32 %v296, 16
        %v567 = vrot.slane %v565, 4
        %v568 = vor.u32 %v567, %v563
        %v569 = vrot.slane %v568, 4
        %v571 = vshll.u32 %v297, 16
        %v573 = vrot.slane %v571, 5
        %v574 = vsel %vm310, %v569, %v573
        %v575 = vshrl.u32 %v297, 16
        %v577 = vrot.slane %v575, 4
        %v578 = vor.u32 %v577, %v573
        %v579 = vrot.slane %v578, 4
        %v581 = vshll.u32 %v298, 16
        %v583 = vrot.slane %v581, 5
        %v584 = vsel %vm310, %v579, %v583
        %v585 = vshrl.u32 %v298, 16
        %v587 = vrot.slane %v585, 4
        %v588 = vor.u32 %v587, %v583
        %v589 = vrot.slane %v588, 4
        %v591 = vshll.u32 %v299, 16
        %v593 = vrot.slane %v591, 5
        %v594 = vsel %vm310, %v589, %v593
        %v595 = vshrl.u32 %v299, 16
        %v597 = vrot.slane %v595, 4
        %v598 = vor.u32 %v597, %v593
        %v599 = vrot.slane %v598, 4
        %v601 = vshll.u32 %v300, 16
        %v603 = vrot.slane %v601, 5
        %v604 = vsel %vm310, %v599, %v603
        %v605 = vshrl.u32 %v300, 16
        %v607 = vrot.slane %v605, 4
        %v608 = vor.u32 %v607, %v603
        %v609 = vrot.slane %v608, 4
        %v611 = vshll.u32 %v301, 16
        %v613 = vrot.slane %v611, 5
        %v614 = vsel %vm310, %v609, %v613
        %v615 = vshrl.u32 %v301, 16
        %v617 = vrot.slane %v615, 4
        %v618 = vor.u32 %v617, %v613
        %v619 = vrot.slane %v618, 4
        %v621 = vshll.u32 %v302, 16
        %v623 = vrot.slane %v621, 5
        %v624 = vsel %vm310, %v619, %v623
        %v625 = vshrl.u32 %v302, 16
        %v627 = vrot.slane %v625, 4
        %v628 = vor.u32 %v627, %v623
        %v629 = vrot.slane %v628, 4
        %v631 = vshll.u32 %v303, 16
        %v633 = vrot.slane %v631, 5
        %v634 = vsel %vm310, %v629, %v633
        %v635 = vshrl.u32 %v303, 16
        %v637 = vrot.slane %v635, 4
        %v638 = vor.u32 %v637, %v633
        %v639 = vrot.slane %v638, 4
        %v641 = vshll.u32 %v304, 16
        %v643 = vrot.slane %v641, 5
        %v644 = vsel %vm310, %v639, %v643
        %v645 = vshrl.u32 %v304, 16
        %v647 = vrot.slane %v645, 4
        %v648 = vor.u32 %v647, %v643
        %v649 = vrot.slane %v648, 4
        %v651 = vshll.u32 %v305, 16
        %v653 = vrot.slane %v651, 5
        %v654 = vsel %vm310, %v649, %v653
        %v655 = vshrl.u32 %v305, 16
        %v657 = vrot.slane %v655, 4
        %v658 = vor.u32 %v657, %v653
        %v659 = vrot.slane %v658, 4
        %v661 = vshll.u32 %v306, 16
        %v663 = vrot.slane %v661, 5
        %v664 = vsel %vm310, %v659, %v663
        %v665 = vshrl.u32 %v306, 16
        %v667 = vrot.slane %v665, 4
        %v668 = vor.u32 %v667, %v663
        %v669 = vrot.slane %v668, 4
        %v671 = vshll.u32 %v307, 16
        %v673 = vrot.slane %v671, 5
        %v674 = vsel %vm310, %v669, %v673
        %675 = vrot.lane.b32.xlu0 %v324, 8
        %v676 = vpop.permute.xlu0 %675
        %677 = vrot.lane.b32.xlu0 %v334, 8
        %v678 = vpop.permute.xlu0 %677
        %679 = vrot.lane.b32.xlu0 %v344, 8
        %v680 = vpop.permute.xlu0 %679
        %681 = vrot.lane.b32.xlu0 %v354, 8
        %v682 = vpop.permute.xlu0 %681
        %683 = vrot.lane.b32.xlu0 %v364, 8
        %v684 = vpop.permute.xlu0 %683
        %685 = vrot.lane.b32.xlu0 %v374, 8
        %v686 = vpop.permute.xlu0 %685
        %687 = vrot.lane.b32.xlu0 %v384, 8
        %v688 = vpop.permute.xlu0 %687
        %689 = vrot.lane.b32.xlu0 %v394, 8
        %v690 = vpop.permute.xlu0 %689
        %691 = vrot.lane.b32.xlu0 %v404, 8
        %v692 = vpop.permute.xlu0 %691
        %693 = vrot.lane.b32.xlu0 %v414, 8
        %v694 = vpop.permute.xlu0 %693
        %695 = vrot.lane.b32.xlu0 %v424, 8
        %v696 = vpop.permute.xlu0 %695
        %697 = vrot.lane.b32.xlu0 %v434, 8
        %v698 = vpop.permute.xlu0 %697
        %699 = vrot.lane.b32.xlu0 %v444, 8
        %v700 = vpop.permute.xlu0 %699
        %701 = vrot.lane.b32.xlu0 %v454, 8
        %v702 = vpop.permute.xlu0 %701
        %703 = vrot.lane.b32.xlu0 %v464, 8
        %v704 = vpop.permute.xlu0 %703
        %705 = vrot.lane.b32.xlu0 %v474, 8
        %v706 = vpop.permute.xlu0 %705
        %707 = vrot.lane.b32.xlu0 %v484, 8
        %v708 = vpop.permute.xlu0 %707
        %709 = vrot.lane.b32.xlu0 %v494, 8
        %v710 = vpop.permute.xlu0 %709
        %711 = vrot.lane.b32.xlu0 %v504, 8
        %v712 = vpop.permute.xlu0 %711
        %713 = vrot.lane.b32.xlu0 %v514, 8
        %v714 = vpop.permute.xlu0 %713
        %715 = vrot.lane.b32.xlu0 %v524, 8
        %v716 = vpop.permute.xlu0 %715
        %717 = vrot.lane.b32.xlu0 %v534, 8
        %v718 = vpop.permute.xlu0 %717
        %719 = vrot.lane.b32.xlu0 %v544, 8
        %v720 = vpop.permute.xlu0 %719
        %721 = vrot.lane.b32.xlu0 %v554, 8
        %v722 = vpop.permute.xlu0 %721
        %723 = vrot.lane.b32.xlu0 %v564, 8
        %v724 = vpop.permute.xlu0 %723
        %725 = vrot.lane.b32.xlu0 %v574, 8
        %v726 = vpop.permute.xlu0 %725
        %727 = vrot.lane.b32.xlu0 %v584, 8
        %v728 = vpop.permute.xlu0 %727
        %729 = vrot.lane.b32.xlu0 %v594, 8
        %v730 = vpop.permute.xlu0 %729
        %731 = vrot.lane.b32.xlu0 %v604, 8
        %v732 = vpop.permute.xlu0 %731
        %733 = vrot.lane.b32.xlu0 %v614, 8
        %v734 = vpop.permute.xlu0 %733
        %735 = vrot.lane.b32.xlu0 %v624, 8
        %v736 = vpop.permute.xlu0 %735
        %737 = vrot.lane.b32.xlu0 %v634, 8
        %v738 = vpop.permute.xlu0 %737
        %739 = vrot.lane.b32.xlu0 %v644, 8
        %v740 = vpop.permute.xlu0 %739
        %741 = vrot.lane.b32.xlu0 %v654, 8
        %v742 = vpop.permute.xlu0 %741
        %743 = vrot.lane.b32.xlu0 %v664, 8
        %v744 = vpop.permute.xlu0 %743
        %745 = vrot.lane.b32.xlu0 %v674, 8
        %v746 = vpop.permute.xlu0 %745
        %vm783 = vcmask 126016
        %784 = vst.msk [vmem:[#allocation2] sm:$0xf] %vm783, %v676
        %785 = vst.msk [vmem:[#allocation2 + $0x4] sm:$0xf] %vm783, %v678
        %786 = vst.msk [vmem:[#allocation2 + $0x8] sm:$0xf] %vm783, %v680
        %787 = vst.msk [vmem:[#allocation2 + $0xc] sm:$0xf] %vm783, %v682
        %788 = vst.msk [vmem:[#allocation2 + $0x10] sm:$0xf] %vm783, %v684
        %789 = vst.msk [vmem:[#allocation2 + $0x14] sm:$0xf] %vm783, %v686
        %790 = vst.msk [vmem:[#allocation2 + $0x18] sm:$0xf] %vm783, %v688
        %791 = vst.msk [vmem:[#allocation2 + $0x1c] sm:$0xf] %vm783, %v690
        %792 = vst.msk [vmem:[#allocation2 + $0x20] sm:$0xf] %vm783, %v692
        %793 = vst.msk [vmem:[#allocation2 + $0x24] sm:$0xf] %vm783, %v694
        %794 = vst.msk [vmem:[#allocation2 + $0x28] sm:$0xf] %vm783, %v696
        %795 = vst.msk [vmem:[#allocation2 + $0x2c] sm:$0xf] %vm783, %v698
        %796 = vst.msk [vmem:[#allocation2 + $0x30] sm:$0xf] %vm783, %v700
        %797 = vst.msk [vmem:[#allocation2 + $0x34] sm:$0xf] %vm783, %v702
        %798 = vst.msk [vmem:[#allocation2 + $0x38] sm:$0xf] %vm783, %v704
        %799 = vst.msk [vmem:[#allocation2 + $0x3c] sm:$0xf] %vm783, %v706
        %800 = vst.msk [vmem:[#allocation2 + $0x40] sm:$0xf] %vm783, %v708
        %801 = vst.msk [vmem:[#allocation2 + $0x44] sm:$0xf] %vm783, %v710
        %802 = vst.msk [vmem:[#allocation2 + $0x48] sm:$0xf] %vm783, %v712
        %803 = vst.msk [vmem:[#allocation2 + $0x4c] sm:$0xf] %vm783, %v714
        %804 = vst.msk [vmem:[#allocation2 + $0x50] sm:$0xf] %vm783, %v716
        %805 = vst.msk [vmem:[#allocation2 + $0x54] sm:$0xf] %vm783, %v718
        %806 = vst.msk [vmem:[#allocation2 + $0x58] sm:$0xf] %vm783, %v720
        %807 = vst.msk [vmem:[#allocation2 + $0x5c] sm:$0xf] %vm783, %v722
        %808 = vst.msk [vmem:[#allocation2 + $0x60] sm:$0xf] %vm783, %v724
        %809 = vst.msk [vmem:[#allocation2 + $0x64] sm:$0xf] %vm783, %v726
        %810 = vst.msk [vmem:[#allocation2 + $0x68] sm:$0xf] %vm783, %v728
        %811 = vst.msk [vmem:[#allocation2 + $0x6c] sm:$0xf] %vm783, %v730
        %812 = vst.msk [vmem:[#allocation2 + $0x70] sm:$0xf] %vm783, %v732
        %813 = vst.msk [vmem:[#allocation2 + $0x74] sm:$0xf] %vm783, %v734
        %814 = vst.msk [vmem:[#allocation2 + $0x78] sm:$0xf] %vm783, %v736
        %815 = vst.msk [vmem:[#allocation2 + $0x7c] sm:$0xf] %vm783, %v738
        %816 = vst.msk [vmem:[#allocation2 + $0x80] sm:$0xf] %vm783, %v740
        %817 = vst.msk [vmem:[#allocation2 + $0x84] sm:$0xf] %vm783, %v742
        %818 = vst.msk [vmem:[#allocation2 + $0x88] sm:$0xf] %vm783, %v744
        %819 = vst.msk [vmem:[#allocation2 + $0x8c] sm:$0xf] %vm783, %v746
        %v820 = vld [vmem:[%s196] sm:$0xe]
        %v821 = vld [vmem:[%s196 + $0x4] sm:$0xf]
        %v822 = vld [vmem:[%s196 + $0x8] sm:$0xf]
        %v823 = vld [vmem:[%s196 + $0xc] sm:$0xf]
        %v824 = vld [vmem:[%s196 + $0x10] sm:$0xf]
        %v825 = vld [vmem:[%s196 + $0x14] sm:$0xf]
        %v826 = vld [vmem:[%s196 + $0x18] sm:$0xf]
        %v827 = vld [vmem:[%s196 + $0x1c] sm:$0xf]
        %v828 = vld [vmem:[%s196 + $0x20] sm:$0xf]
        %v829 = vld [vmem:[%s196 + $0x24] sm:$0xf]
        %v830 = vld [vmem:[%s196 + $0x28] sm:$0xf]
        %v831 = vld [vmem:[%s196 + $0x2c] sm:$0xf]
        %v832 = vld [vmem:[%s196 + $0x30] sm:$0xf]
        %v833 = vld [vmem:[%s196 + $0x34] sm:$0xf]
        %v834 = vld [vmem:[%s196 + $0x38] sm:$0xf]
        %v835 = vld [vmem:[%s196 + $0x3c] sm:$0xf]
        %v836 = vld [vmem:[%s196 + $0x40] sm:$0xf]
        %v837 = vld [vmem:[%s196 + $0x44] sm:$0xf]
        %v838 = vld [vmem:[%s196 + $0x48] sm:$0xf]
        %v839 = vld [vmem:[%s196 + $0x4c] sm:$0xf]
        %v840 = vld [vmem:[%s196 + $0x50] sm:$0xf]
        %v841 = vld [vmem:[%s196 + $0x54] sm:$0xf]
        %v842 = vld [vmem:[%s196 + $0x58] sm:$0xf]
        %v843 = vld [vmem:[%s196 + $0x5c] sm:$0xf]
        %v844 = vld [vmem:[%s196 + $0x60] sm:$0xf]
        %v845 = vld [vmem:[%s196 + $0x64] sm:$0xf]
        %v846 = vld [vmem:[%s196 + $0x68] sm:$0xf]
        %v847 = vld [vmem:[%s196 + $0x6c] sm:$0xf]
        %v848 = vld [vmem:[%s196 + $0x70] sm:$0xf]
        %v849 = vld [vmem:[%s196 + $0x74] sm:$0xf]
        %v850 = vld [vmem:[%s196 + $0x78] sm:$0xf]
        %v851 = vld [vmem:[%s196 + $0x7c] sm:$0xf]
        %v852 = vld [vmem:[%s196 + $0x80] sm:$0xf]
        %v853 = vld [vmem:[%s196 + $0x84] sm:$0xf]
        %v854 = vld [vmem:[%s196 + $0x88] sm:$0xf]
        %v855 = vld [vmem:[%s196 + $0x8c] sm:$0xf]
        %v856 = vld [vmem:[%s196 + $0x90] sm:$0x1]
        %vm894 = vcmask 1042432
        %vm895 = vcmask 1046532
        %vm896 = vmor %vm894, %vm895
        %v897 = vrot.slane %v820, 5
        %v898 = vrot.slane %v897, 4
        %v899 = vrot.slane %v821, 5
        %v900 = vsel %vm896, %v898, %v899
        %v901 = vrot.slane %v899, 4
        %v902 = vrot.slane %v822, 5
        %v903 = vsel %vm896, %v901, %v902
        %v904 = vrot.slane %v902, 4
        %v905 = vrot.slane %v823, 5
        %v906 = vsel %vm896, %v904, %v905
        %v907 = vrot.slane %v905, 4
        %v908 = vrot.slane %v824, 5
        %v909 = vsel %vm896, %v907, %v908
        %v910 = vrot.slane %v908, 4
        %v911 = vrot.slane %v825, 5
        %v912 = vsel %vm896, %v910, %v911
        %v913 = vrot.slane %v911, 4
        %v914 = vrot.slane %v826, 5
        %v915 = vsel %vm896, %v913, %v914
        %v916 = vrot.slane %v914, 4
        %v917 = vrot.slane %v827, 5
        %v918 = vsel %vm896, %v916, %v917
        %v919 = vrot.slane %v917, 4
        %v920 = vrot.slane %v828, 5
        %v921 = vsel %vm896, %v919, %v920
        %v922 = vrot.slane %v920, 4
        %v923 = vrot.slane %v829, 5
        %v924 = vsel %vm896, %v922, %v923
        %v925 = vrot.slane %v923, 4
        %v926 = vrot.slane %v830, 5
        %v927 = vsel %vm896, %v925, %v926
        %v928 = vrot.slane %v926, 4
        %v929 = vrot.slane %v831, 5
        %v930 = vsel %vm896, %v928, %v929
        %v931 = vrot.slane %v929, 4
        %v932 = vrot.slane %v832, 5
        %v933 = vsel %vm896, %v931, %v932
        %v934 = vrot.slane %v932, 4
        %v935 = vrot.slane %v833, 5
        %v936 = vsel %vm896, %v934, %v935
        %v937 = vrot.slane %v935, 4
        %v938 = vrot.slane %v834, 5
        %v939 = vsel %vm896, %v937, %v938
        %v940 = vrot.slane %v938, 4
        %v941 = vrot.slane %v835, 5
        %v942 = vsel %vm896, %v940, %v941
        %v943 = vrot.slane %v941, 4
        %v944 = vrot.slane %v836, 5
        %v945 = vsel %vm896, %v943, %v944
        %v946 = vrot.slane %v944, 4
        %v947 = vrot.slane %v837, 5
        %v948 = vsel %vm896, %v946, %v947
        %v949 = vrot.slane %v947, 4
        %v950 = vrot.slane %v838, 5
        %v951 = vsel %vm896, %v949, %v950
        %v952 = vrot.slane %v950, 4
        %v953 = vrot.slane %v839, 5
        %v954 = vsel %vm896, %v952, %v953
        %v955 = vrot.slane %v953, 4
        %v956 = vrot.slane %v840, 5
        %v957 = vsel %vm896, %v955, %v956
        %v958 = vrot.slane %v956, 4
        %v959 = vrot.slane %v841, 5
        %v960 = vsel %vm896, %v958, %v959
        %v961 = vrot.slane %v959, 4
        %v962 = vrot.slane %v842, 5
        %v963 = vsel %vm896, %v961, %v962
        %v964 = vrot.slane %v962, 4
        %v965 = vrot.slane %v843, 5
        %v966 = vsel %vm896, %v964, %v965
        %v967 = vrot.slane %v965, 4
        %v968 = vrot.slane %v844, 5
        %v969 = vsel %vm896, %v967, %v968
        %v970 = vrot.slane %v968, 4
        %v971 = vrot.slane %v845, 5
        %v972 = vsel %vm896, %v970, %v971
        %v973 = vrot.slane %v971, 4
        %v974 = vrot.slane %v846, 5
        %v975 = vsel %vm896, %v973, %v974
        %v976 = vrot.slane %v974, 4
        %v977 = vrot.slane %v847, 5
        %v978 = vsel %vm896, %v976, %v977
        %v979 = vrot.slane %v977, 4
        %v980 = vrot.slane %v848, 5
        %v981 = vsel %vm896, %v979, %v980
        %v982 = vrot.slane %v980, 4
        %v983 = vrot.slane %v849, 5
        %v984 = vsel %vm896, %v982, %v983
        %v985 = vrot.slane %v983, 4
        %v986 = vrot.slane %v850, 5
        %v987 = vsel %vm896, %v985, %v986
        %v988 = vrot.slane %v986, 4
        %v989 = vrot.slane %v851, 5
        %v990 = vsel %vm896, %v988, %v989
        %v991 = vrot.slane %v989, 4
        %v992 = vrot.slane %v852, 5
        %v993 = vsel %vm896, %v991, %v992
        %v994 = vrot.slane %v992, 4
        %v995 = vrot.slane %v853, 5
        %v996 = vsel %vm896, %v994, %v995
        %v997 = vrot.slane %v995, 4
        %v998 = vrot.slane %v854, 5
        %v999 = vsel %vm896, %v997, %v998
        %v1000 = vrot.slane %v998, 4
        %v1001 = vrot.slane %v855, 5
        %v1002 = vsel %vm896, %v1000, %v1001
        %v1003 = vrot.slane %v1001, 4
        %v1004 = vrot.slane %v856, 5
        %v1005 = vsel %vm896, %v1003, %v1004
        %1006 = vrot.lane.b32.xlu0 %v900, 16
        %v1007 = vpop.permute.xlu0 %1006
        %1008 = vrot.lane.b32.xlu0 %v903, 16
        %v1009 = vpop.permute.xlu0 %1008
        %1010 = vrot.lane.b32.xlu0 %v906, 16
        %v1011 = vpop.permute.xlu0 %1010
        %1012 = vrot.lane.b32.xlu0 %v909, 16
        %v1013 = vpop.permute.xlu0 %1012
        %1014 = vrot.lane.b32.xlu0 %v912, 16
        %v1015 = vpop.permute.xlu0 %1014
        %1016 = vrot.lane.b32.xlu0 %v915, 16
        %v1017 = vpop.permute.xlu0 %1016
        %1018 = vrot.lane.b32.xlu0 %v918, 16
        %v1019 = vpop.permute.xlu0 %1018
        %1020 = vrot.lane.b32.xlu0 %v921, 16
        %v1021 = vpop.permute.xlu0 %1020
        %1022 = vrot.lane.b32.xlu0 %v924, 16
        %v1023 = vpop.permute.xlu0 %1022
        %1024 = vrot.lane.b32.xlu0 %v927, 16
        %v1025 = vpop.permute.xlu0 %1024
        %1026 = vrot.lane.b32.xlu0 %v930, 16
        %v1027 = vpop.permute.xlu0 %1026
        %1028 = vrot.lane.b32.xlu0 %v933, 16
        %v1029 = vpop.permute.xlu0 %1028
        %1030 = vrot.lane.b32.xlu0 %v936, 16
        %v1031 = vpop.permute.xlu0 %1030
        %1032 = vrot.lane.b32.xlu0 %v939, 16
        %v1033 = vpop.permute.xlu0 %1032
        %1034 = vrot.lane.b32.xlu0 %v942, 16
        %v1035 = vpop.permute.xlu0 %1034
        %1036 = vrot.lane.b32.xlu0 %v945, 16
        %v1037 = vpop.permute.xlu0 %1036
        %1038 = vrot.lane.b32.xlu0 %v948, 16
        %v1039 = vpop.permute.xlu0 %1038
        %1040 = vrot.lane.b32.xlu0 %v951, 16
        %v1041 = vpop.permute.xlu0 %1040
        %1042 = vrot.lane.b32.xlu0 %v954, 16
        %v1043 = vpop.permute.xlu0 %1042
        %1044 = vrot.lane.b32.xlu0 %v957, 16
        %v1045 = vpop.permute.xlu0 %1044
        %1046 = vrot.lane.b32.xlu0 %v960, 16
        %v1047 = vpop.permute.xlu0 %1046
        %1048 = vrot.lane.b32.xlu0 %v963, 16
        %v1049 = vpop.permute.xlu0 %1048
        %1050 = vrot.lane.b32.xlu0 %v966, 16
        %v1051 = vpop.permute.xlu0 %1050
        %1052 = vrot.lane.b32.xlu0 %v969, 16
        %v1053 = vpop.permute.xlu0 %1052
        %1054 = vrot.lane.b32.xlu0 %v972, 16
        %v1055 = vpop.permute.xlu0 %1054
        %1056 = vrot.lane.b32.xlu0 %v975, 16
        %v1057 = vpop.permute.xlu0 %1056
        %1058 = vrot.lane.b32.xlu0 %v978, 16
        %v1059 = vpop.permute.xlu0 %1058
        %1060 = vrot.lane.b32.xlu0 %v981, 16
        %v1061 = vpop.permute.xlu0 %1060
        %1062 = vrot.lane.b32.xlu0 %v984, 16
        %v1063 = vpop.permute.xlu0 %1062
        %1064 = vrot.lane.b32.xlu0 %v987, 16
        %v1065 = vpop.permute.xlu0 %1064
        %1066 = vrot.lane.b32.xlu0 %v990, 16
        %v1067 = vpop.permute.xlu0 %1066
        %1068 = vrot.lane.b32.xlu0 %v993, 16
        %v1069 = vpop.permute.xlu0 %1068
        %1070 = vrot.lane.b32.xlu0 %v996, 16
        %v1071 = vpop.permute.xlu0 %1070
        %1072 = vrot.lane.b32.xlu0 %v999, 16
        %v1073 = vpop.permute.xlu0 %1072
        %1074 = vrot.lane.b32.xlu0 %v1002, 16
        %v1075 = vpop.permute.xlu0 %1074
        %1076 = vrot.lane.b32.xlu0 %v1005, 16
        %v1077 = vpop.permute.xlu0 %1076
        %vm1114 = vcmask 191616
        %1115 = vst.msk [vmem:[#allocation2] sm:$0xf] %vm1114, %v1007
        %1116 = vst.msk [vmem:[#allocation2 + $0x4] sm:$0xf] %vm1114, %v1009
        %1117 = vst.msk [vmem:[#allocation2 + $0x8] sm:$0xf] %vm1114, %v1011
        %1118 = vst.msk [vmem:[#allocation2 + $0xc] sm:$0xf] %vm1114, %v1013
        %1119 = vst.msk [vmem:[#allocation2 + $0x10] sm:$0xf] %vm1114, %v1015
        %1120 = vst.msk [vmem:[#allocation2 + $0x14] sm:$0xf] %vm1114, %v1017
        %1121 = vst.msk [vmem:[#allocation2 + $0x18] sm:$0xf] %vm1114, %v1019
        %1122 = vst.msk [vmem:[#allocation2 + $0x1c] sm:$0xf] %vm1114, %v1021
        %1123 = vst.msk [vmem:[#allocation2 + $0x20] sm:$0xf] %vm1114, %v1023
        %1124 = vst.msk [vmem:[#allocation2 + $0x24] sm:$0xf] %vm1114, %v1025
        %1125 = vst.msk [vmem:[#allocation2 + $0x28] sm:$0xf] %vm1114, %v1027
        %1126 = vst.msk [vmem:[#allocation2 + $0x2c] sm:$0xf] %vm1114, %v1029
        %1127 = vst.msk [vmem:[#allocation2 + $0x30] sm:$0xf] %vm1114, %v1031
        %1128 = vst.msk [vmem:[#allocation2 + $0x34] sm:$0xf] %vm1114, %v1033
        %1129 = vst.msk [vmem:[#allocation2 + $0x38] sm:$0xf] %vm1114, %v1035
        %1130 = vst.msk [vmem:[#allocation2 + $0x3c] sm:$0xf] %vm1114, %v1037
        %1131 = vst.msk [vmem:[#allocation2 + $0x40] sm:$0xf] %vm1114, %v1039
        %1132 = vst.msk [vmem:[#allocation2 + $0x44] sm:$0xf] %vm1114, %v1041
        %1133 = vst.msk [vmem:[#allocation2 + $0x48] sm:$0xf] %vm1114, %v1043
        %1134 = vst.msk [vmem:[#allocation2 + $0x4c] sm:$0xf] %vm1114, %v1045
        %1135 = vst.msk [vmem:[#allocation2 + $0x50] sm:$0xf] %vm1114, %v1047
        %1136 = vst.msk [vmem:[#allocation2 + $0x54] sm:$0xf] %vm1114, %v1049
        %1137 = vst.msk [vmem:[#allocation2 + $0x58] sm:$0xf] %vm1114, %v1051
        %1138 = vst.msk [vmem:[#allocation2 + $0x5c] sm:$0xf] %vm1114, %v1053
        %1139 = vst.msk [vmem:[#allocation2 + $0x60] sm:$0xf] %vm1114, %v1055
        %1140 = vst.msk [vmem:[#allocation2 + $0x64] sm:$0xf] %vm1114, %v1057
        %1141 = vst.msk [vmem:[#allocation2 + $0x68] sm:$0xf] %vm1114, %v1059
        %1142 = vst.msk [vmem:[#allocation2 + $0x6c] sm:$0xf] %vm1114, %v1061
        %1143 = vst.msk [vmem:[#allocation2 + $0x70] sm:$0xf] %vm1114, %v1063
        %1144 = vst.msk [vmem:[#allocation2 + $0x74] sm:$0xf] %vm1114, %v1065
        %1145 = vst.msk [vmem:[#allocation2 + $0x78] sm:$0xf] %vm1114, %v1067
        %1146 = vst.msk [vmem:[#allocation2 + $0x7c] sm:$0xf] %vm1114, %v1069
        %1147 = vst.msk [vmem:[#allocation2 + $0x80] sm:$0xf] %vm1114, %v1071
        %1148 = vst.msk [vmem:[#allocation2 + $0x84] sm:$0xf] %vm1114, %v1073
        %1149 = vst.msk [vmem:[#allocation2 + $0x88] sm:$0xf] %vm1114, %v1075
        %1150 = vst.msk [vmem:[#allocation2 + $0x8c] sm:$0xf] %vm1114, %v1077
        %v1151 = vld [vmem:[%s196 + $0x8] sm:$0xe]
        %v1152 = vld [vmem:[%s196 + $0xc] sm:$0xf]
        %v1153 = vld [vmem:[%s196 + $0x10] sm:$0xf]
        %v1154 = vld [vmem:[%s196 + $0x14] sm:$0xf]
        %v1155 = vld [vmem:[%s196 + $0x18] sm:$0xf]
        %v1156 = vld [vmem:[%s196 + $0x1c] sm:$0xf]
        %v1157 = vld [vmem:[%s196 + $0x20] sm:$0xf]
        %v1158 = vld [vmem:[%s196 + $0x24] sm:$0xf]
        %v1159 = vld [vmem:[%s196 + $0x28] sm:$0xf]
        %v1160 = vld [vmem:[%s196 + $0x2c] sm:$0xf]
        %v1161 = vld [vmem:[%s196 + $0x30] sm:$0xf]
        %v1162 = vld [vmem:[%s196 + $0x34] sm:$0xf]
        %v1163 = vld [vmem:[%s196 + $0x38] sm:$0xf]
        %v1164 = vld [vmem:[%s196 + $0x3c] sm:$0xf]
        %v1165 = vld [vmem:[%s196 + $0x40] sm:$0xf]
        %v1166 = vld [vmem:[%s196 + $0x44] sm:$0xf]
        %v1167 = vld [vmem:[%s196 + $0x48] sm:$0xf]
        %v1168 = vld [vmem:[%s196 + $0x4c] sm:$0xf]
        %v1169 = vld [vmem:[%s196 + $0x50] sm:$0xf]
        %v1170 = vld [vmem:[%s196 + $0x54] sm:$0xf]
        %v1171 = vld [vmem:[%s196 + $0x58] sm:$0xf]
        %v1172 = vld [vmem:[%s196 + $0x5c] sm:$0xf]
        %v1173 = vld [vmem:[%s196 + $0x60] sm:$0xf]
        %v1174 = vld [vmem:[%s196 + $0x64] sm:$0xf]
        %v1175 = vld [vmem:[%s196 + $0x68] sm:$0xf]
        %v1176 = vld [vmem:[%s196 + $0x6c] sm:$0xf]
        %v1177 = vld [vmem:[%s196 + $0x70] sm:$0xf]
        %v1178 = vld [vmem:[%s196 + $0x74] sm:$0xf]
        %v1179 = vld [vmem:[%s196 + $0x78] sm:$0xf]
        %v1180 = vld [vmem:[%s196 + $0x7c] sm:$0xf]
        %v1181 = vld [vmem:[%s196 + $0x80] sm:$0xf]
        %v1182 = vld [vmem:[%s196 + $0x84] sm:$0xf]
        %v1183 = vld [vmem:[%s196 + $0x88] sm:$0xf]
        %v1184 = vld [vmem:[%s196 + $0x8c] sm:$0xf]
        %v1185 = vld [vmem:[%s196 + $0x90] sm:$0xf]
        %v1186 = vld [vmem:[%s196 + $0x94] sm:$0xf]
        %v1187 = vld [vmem:[%s196 + $0x98] sm:$0x1]
        %v1225 = vrot.slane %v1151, 5
        %v1226 = vrot.slane %v1225, 4
        %v1227 = vrot.slane %v1152, 5
        %v1228 = vsel %vm896, %v1226, %v1227
        %v1229 = vrot.slane %v1227, 4
        %v1230 = vrot.slane %v1153, 5
        %v1231 = vsel %vm896, %v1229, %v1230
        %v1232 = vrot.slane %v1230, 4
        %v1233 = vrot.slane %v1154, 5
        %v1234 = vsel %vm896, %v1232, %v1233
        %v1235 = vrot.slane %v1233, 4
        %v1236 = vrot.slane %v1155, 5
        %v1237 = vsel %vm896, %v1235, %v1236
        %v1238 = vrot.slane %v1236, 4
        %v1239 = vrot.slane %v1156, 5
        %v1240 = vsel %vm896, %v1238, %v1239
        %v1241 = vrot.slane %v1239, 4
        %v1242 = vrot.slane %v1157, 5
        %v1243 = vsel %vm896, %v1241, %v1242
        %v1244 = vrot.slane %v1242, 4
        %v1245 = vrot.slane %v1158, 5
        %v1246 = vsel %vm896, %v1244, %v1245
        %v1247 = vrot.slane %v1245, 4
        %v1248 = vrot.slane %v1159, 5
        %v1249 = vsel %vm896, %v1247, %v1248
        %v1250 = vrot.slane %v1248, 4
        %v1251 = vrot.slane %v1160, 5
        %v1252 = vsel %vm896, %v1250, %v1251
        %v1253 = vrot.slane %v1251, 4
        %v1254 = vrot.slane %v1161, 5
        %v1255 = vsel %vm896, %v1253, %v1254
        %v1256 = vrot.slane %v1254, 4
        %v1257 = vrot.slane %v1162, 5
        %v1258 = vsel %vm896, %v1256, %v1257
        %v1259 = vrot.slane %v1257, 4
        %v1260 = vrot.slane %v1163, 5
        %v1261 = vsel %vm896, %v1259, %v1260
        %v1262 = vrot.slane %v1260, 4
        %v1263 = vrot.slane %v1164, 5
        %v1264 = vsel %vm896, %v1262, %v1263
        %v1265 = vrot.slane %v1263, 4
        %v1266 = vrot.slane %v1165, 5
        %v1267 = vsel %vm896, %v1265, %v1266
        %v1268 = vrot.slane %v1266, 4
        %v1269 = vrot.slane %v1166, 5
        %v1270 = vsel %vm896, %v1268, %v1269
        %v1271 = vrot.slane %v1269, 4
        %v1272 = vrot.slane %v1167, 5
        %v1273 = vsel %vm896, %v1271, %v1272
        %v1274 = vrot.slane %v1272, 4
        %v1275 = vrot.slane %v1168, 5
        %v1276 = vsel %vm896, %v1274, %v1275
        %v1277 = vrot.slane %v1275, 4
        %v1278 = vrot.slane %v1169, 5
        %v1279 = vsel %vm896, %v1277, %v1278
        %v1280 = vrot.slane %v1278, 4
        %v1281 = vrot.slane %v1170, 5
        %v1282 = vsel %vm896, %v1280, %v1281
        %v1283 = vrot.slane %v1281, 4
        %v1284 = vrot.slane %v1171, 5
        %v1285 = vsel %vm896, %v1283, %v1284
        %v1286 = vrot.slane %v1284, 4
        %v1287 = vrot.slane %v1172, 5
        %v1288 = vsel %vm896, %v1286, %v1287
        %v1289 = vrot.slane %v1287, 4
        %v1290 = vrot.slane %v1173, 5
        %v1291 = vsel %vm896, %v1289, %v1290
        %v1292 = vrot.slane %v1290, 4
        %v1293 = vrot.slane %v1174, 5
        %v1294 = vsel %vm896, %v1292, %v1293
        %v1295 = vrot.slane %v1293, 4
        %v1296 = vrot.slane %v1175, 5
        %v1297 = vsel %vm896, %v1295, %v1296
        %v1298 = vrot.slane %v1296, 4
        %v1299 = vrot.slane %v1176, 5
        %v1300 = vsel %vm896, %v1298, %v1299
        %v1301 = vrot.slane %v1299, 4
        %v1302 = vrot.slane %v1177, 5
        %v1303 = vsel %vm896, %v1301, %v1302
        %v1304 = vrot.slane %v1302, 4
        %v1305 = vrot.slane %v1178, 5
        %v1306 = vsel %vm896, %v1304, %v1305
        %v1307 = vrot.slane %v1305, 4
        %v1308 = vrot.slane %v1179, 5
        %v1309 = vsel %vm896, %v1307, %v1308
        %v1310 = vrot.slane %v1308, 4
        %v1311 = vrot.slane %v1180, 5
        %v1312 = vsel %vm896, %v1310, %v1311
        %v1313 = vrot.slane %v1311, 4
        %v1314 = vrot.slane %v1181, 5
        %v1315 = vsel %vm896, %v1313, %v1314
        %v1316 = vrot.slane %v1314, 4
        %v1317 = vrot.slane %v1182, 5
        %v1318 = vsel %vm896, %v1316, %v1317
        %v1319 = vrot.slane %v1317, 4
        %v1320 = vrot.slane %v1183, 5
        %v1321 = vsel %vm896, %v1319, %v1320
        %v1322 = vrot.slane %v1320, 4
        %v1323 = vrot.slane %v1184, 5
        %v1324 = vsel %vm896, %v1322, %v1323
        %v1325 = vrot.slane %v1323, 4
        %v1326 = vrot.slane %v1185, 5
        %v1327 = vsel %vm896, %v1325, %v1326
        %v1328 = vrot.slane %v1326, 4
        %v1329 = vrot.slane %v1186, 5
        %v1330 = vsel %vm896, %v1328, %v1329
        %v1331 = vrot.slane %v1329, 4
        %v1332 = vrot.slane %v1187, 5
        %v1333 = vsel %vm896, %v1331, %v1332
        %1334 = vrot.lane.b32.xlu0 %v1228, 24
        %v1335 = vpop.permute.xlu0 %1334
        %1336 = vrot.lane.b32.xlu0 %v1231, 24
        %v1337 = vpop.permute.xlu0 %1336
        %1338 = vrot.lane.b32.xlu0 %v1234, 24
        %v1339 = vpop.permute.xlu0 %1338
        %1340 = vrot.lane.b32.xlu0 %v1237, 24
        %v1341 = vpop.permute.xlu0 %1340
        %1342 = vrot.lane.b32.xlu0 %v1240, 24
        %v1343 = vpop.permute.xlu0 %1342
        %1344 = vrot.lane.b32.xlu0 %v1243, 24
        %v1345 = vpop.permute.xlu0 %1344
        %1346 = vrot.lane.b32.xlu0 %v1246, 24
        %v1347 = vpop.permute.xlu0 %1346
        %1348 = vrot.lane.b32.xlu0 %v1249, 24
        %v1349 = vpop.permute.xlu0 %1348
        %1350 = vrot.lane.b32.xlu0 %v1252, 24
        %v1351 = vpop.permute.xlu0 %1350
        %1352 = vrot.lane.b32.xlu0 %v1255, 24
        %v1353 = vpop.permute.xlu0 %1352
        %1354 = vrot.lane.b32.xlu0 %v1258, 24
        %v1355 = vpop.permute.xlu0 %1354
        %1356 = vrot.lane.b32.xlu0 %v1261, 24
        %v1357 = vpop.permute.xlu0 %1356
        %1358 = vrot.lane.b32.xlu0 %v1264, 24
        %v1359 = vpop.permute.xlu0 %1358
        %1360 = vrot.lane.b32.xlu0 %v1267, 24
        %v1361 = vpop.permute.xlu0 %1360
        %1362 = vrot.lane.b32.xlu0 %v1270, 24
        %v1363 = vpop.permute.xlu0 %1362
        %1364 = vrot.lane.b32.xlu0 %v1273, 24
        %v1365 = vpop.permute.xlu0 %1364
        %1366 = vrot.lane.b32.xlu0 %v1276, 24
        %v1367 = vpop.permute.xlu0 %1366
        %1368 = vrot.lane.b32.xlu0 %v1279, 24
        %v1369 = vpop.permute.xlu0 %1368
        %1370 = vrot.lane.b32.xlu0 %v1282, 24
        %v1371 = vpop.permute.xlu0 %1370
        %1372 = vrot.lane.b32.xlu0 %v1285, 24
        %v1373 = vpop.permute.xlu0 %1372
        %1374 = vrot.lane.b32.xlu0 %v1288, 24
        %v1375 = vpop.permute.xlu0 %1374
        %1376 = vrot.lane.b32.xlu0 %v1291, 24
        %v1377 = vpop.permute.xlu0 %1376
        %1378 = vrot.lane.b32.xlu0 %v1294, 24
        %v1379 = vpop.permute.xlu0 %1378
        %1380 = vrot.lane.b32.xlu0 %v1297, 24
        %v1381 = vpop.permute.xlu0 %1380
        %1382 = vrot.lane.b32.xlu0 %v1300, 24
        %v1383 = vpop.permute.xlu0 %1382
        %1384 = vrot.lane.b32.xlu0 %v1303, 24
        %v1385 = vpop.permute.xlu0 %1384
        %1386 = vrot.lane.b32.xlu0 %v1306, 24
        %v1387 = vpop.permute.xlu0 %1386
        %1388 = vrot.lane.b32.xlu0 %v1309, 24
        %v1389 = vpop.permute.xlu0 %1388
        %1390 = vrot.lane.b32.xlu0 %v1312, 24
        %v1391 = vpop.permute.xlu0 %1390
        %1392 = vrot.lane.b32.xlu0 %v1315, 24
        %v1393 = vpop.permute.xlu0 %1392
        %1394 = vrot.lane.b32.xlu0 %v1318, 24
        %v1395 = vpop.permute.xlu0 %1394
        %1396 = vrot.lane.b32.xlu0 %v1321, 24
        %v1397 = vpop.permute.xlu0 %1396
        %1398 = vrot.lane.b32.xlu0 %v1324, 24
        %v1399 = vpop.permute.xlu0 %1398
        %1400 = vrot.lane.b32.xlu0 %v1327, 24
        %v1401 = vpop.permute.xlu0 %1400
        %1402 = vrot.lane.b32.xlu0 %v1330, 24
        %v1403 = vpop.permute.xlu0 %1402
        %1404 = vrot.lane.b32.xlu0 %v1333, 24
        %v1405 = vpop.permute.xlu0 %1404
        %vm1442 = vcmask 257216
        %1443 = vst.msk [vmem:[#allocation2] sm:$0xf] %vm1442, %v1335
        %1444 = vst.msk [vmem:[#allocation2 + $0x4] sm:$0xf] %vm1442, %v1337
        %1445 = vst.msk [vmem:[#allocation2 + $0x8] sm:$0xf] %vm1442, %v1339
        %1446 = vst.msk [vmem:[#allocation2 + $0xc] sm:$0xf] %vm1442, %v1341
        %1447 = vst.msk [vmem:[#allocation2 + $0x10] sm:$0xf] %vm1442, %v1343
        %1448 = vst.msk [vmem:[#allocation2 + $0x14] sm:$0xf] %vm1442, %v1345
        %1449 = vst.msk [vmem:[#allocation2 + $0x18] sm:$0xf] %vm1442, %v1347
        %1450 = vst.msk [vmem:[#allocation2 + $0x1c] sm:$0xf] %vm1442, %v1349
        %1451 = vst.msk [vmem:[#allocation2 + $0x20] sm:$0xf] %vm1442, %v1351
        %1452 = vst.msk [vmem:[#allocation2 + $0x24] sm:$0xf] %vm1442, %v1353
        %1453 = vst.msk [vmem:[#allocation2 + $0x28] sm:$0xf] %vm1442, %v1355
        %1454 = vst.msk [vmem:[#allocation2 + $0x2c] sm:$0xf] %vm1442, %v1357
        %1455 = vst.msk [vmem:[#allocation2 + $0x30] sm:$0xf] %vm1442, %v1359
        %1456 = vst.msk [vmem:[#allocation2 + $0x34] sm:$0xf] %vm1442, %v1361
        %1457 = vst.msk [vmem:[#allocation2 + $0x38] sm:$0xf] %vm1442, %v1363
        %1458 = vst.msk [vmem:[#allocation2 + $0x3c] sm:$0xf] %vm1442, %v1365
        %1459 = vst.msk [vmem:[#allocation2 + $0x40] sm:$0xf] %vm1442, %v1367
        %1460 = vst.msk [vmem:[#allocation2 + $0x44] sm:$0xf] %vm1442, %v1369
        %1461 = vst.msk [vmem:[#allocation2 + $0x48] sm:$0xf] %vm1442, %v1371
        %1462 = vst.msk [vmem:[#allocation2 + $0x4c] sm:$0xf] %vm1442, %v1373
        %1463 = vst.msk [vmem:[#allocation2 + $0x50] sm:$0xf] %vm1442, %v1375
        %1464 = vst.msk [vmem:[#allocation2 + $0x54] sm:$0xf] %vm1442, %v1377
        %1465 = vst.msk [vmem:[#allocation2 + $0x58] sm:$0xf] %vm1442, %v1379
        %1466 = vst.msk [vmem:[#allocation2 + $0x5c] sm:$0xf] %vm1442, %v1381
        %1467 = vst.msk [vmem:[#allocation2 + $0x60] sm:$0xf] %vm1442, %v1383
        %1468 = vst.msk [vmem:[#allocation2 + $0x64] sm:$0xf] %vm1442, %v1385
        %1469 = vst.msk [vmem:[#allocation2 + $0x68] sm:$0xf] %vm1442, %v1387
        %1470 = vst.msk [vmem:[#allocation2 + $0x6c] sm:$0xf] %vm1442, %v1389
        %1471 = vst.msk [vmem:[#allocation2 + $0x70] sm:$0xf] %vm1442, %v1391
        %1472 = vst.msk [vmem:[#allocation2 + $0x74] sm:$0xf] %vm1442, %v1393
        %1473 = vst.msk [vmem:[#allocation2 + $0x78] sm:$0xf] %vm1442, %v1395
        %1474 = vst.msk [vmem:[#allocation2 + $0x7c] sm:$0xf] %vm1442, %v1397
        %1475 = vst.msk [vmem:[#allocation2 + $0x80] sm:$0xf] %vm1442, %v1399
        %1476 = vst.msk [vmem:[#allocation2 + $0x84] sm:$0xf] %vm1442, %v1401
        %1477 = vst.msk [vmem:[#allocation2 + $0x88] sm:$0xf] %vm1442, %v1403
        %1478 = vst.msk [vmem:[#allocation2 + $0x8c] sm:$0xf] %vm1442, %v1405
        %v1479 = vld [vmem:[%s196 + $0x8] sm:$0xe]
        %v1480 = vld [vmem:[%s196 + $0xc] sm:$0xf]
        %v1481 = vld [vmem:[%s196 + $0x10] sm:$0xf]
        %v1482 = vld [vmem:[%s196 + $0x14] sm:$0xf]
        %v1483 = vld [vmem:[%s196 + $0x18] sm:$0xf]
        %v1484 = vld [vmem:[%s196 + $0x1c] sm:$0xf]
        %v1485 = vld [vmem:[%s196 + $0x20] sm:$0xf]
        %v1486 = vld [vmem:[%s196 + $0x24] sm:$0xf]
        %v1487 = vld [vmem:[%s196 + $0x28] sm:$0xf]
        %v1488 = vld [vmem:[%s196 + $0x2c] sm:$0xf]
        %v1489 = vld [vmem:[%s196 + $0x30] sm:$0xf]
        %v1490 = vld [vmem:[%s196 + $0x34] sm:$0xf]
        %v1491 = vld [vmem:[%s196 + $0x38] sm:$0xf]
        %v1492 = vld [vmem:[%s196 + $0x3c] sm:$0xf]
        %v1493 = vld [vmem:[%s196 + $0x40] sm:$0xf]
        %v1494 = vld [vmem:[%s196 + $0x44] sm:$0xf]
        %v1495 = vld [vmem:[%s196 + $0x48] sm:$0xf]
        %v1496 = vld [vmem:[%s196 + $0x4c] sm:$0xf]
        %v1497 = vld [vmem:[%s196 + $0x50] sm:$0xf]
        %v1498 = vld [vmem:[%s196 + $0x54] sm:$0xf]
        %v1499 = vld [vmem:[%s196 + $0x58] sm:$0xf]
        %v1500 = vld [vmem:[%s196 + $0x5c] sm:$0xf]
        %v1501 = vld [vmem:[%s196 + $0x60] sm:$0xf]
        %v1502 = vld [vmem:[%s196 + $0x64] sm:$0xf]
        %v1503 = vld [vmem:[%s196 + $0x68] sm:$0xf]
        %v1504 = vld [vmem:[%s196 + $0x6c] sm:$0xf]
        %v1505 = vld [vmem:[%s196 + $0x70] sm:$0xf]
        %v1506 = vld [vmem:[%s196 + $0x74] sm:$0xf]
        %v1507 = vld [vmem:[%s196 + $0x78] sm:$0xf]
        %v1508 = vld [vmem:[%s196 + $0x7c] sm:$0xf]
        %v1509 = vld [vmem:[%s196 + $0x80] sm:$0xf]
        %v1510 = vld [vmem:[%s196 + $0x84] sm:$0xf]
        %v1511 = vld [vmem:[%s196 + $0x88] sm:$0xf]
        %v1512 = vld [vmem:[%s196 + $0x8c] sm:$0xf]
        %v1513 = vld [vmem:[%s196 + $0x90] sm:$0xf]
        %v1514 = vld [vmem:[%s196 + $0x94] sm:$0xf]
        %v1515 = vld [vmem:[%s196 + $0x98] sm:$0x3]
        %vm1516 = vsmask.f32 2304
        %vm1517 = vsmask.f32 6416
        %vm1518 = vmor %vm1516, %vm1517
        %v1520 = vshrl.u32 %v1479, 16
        %v1522 = vrot.slane %v1520, 5
        %v1523 = vshll.u32 %v1479, 16
        %v1525 = vrot.slane %v1523, 6
        %v1526 = vor.u32 %v1522, %v1525
        %v1527 = vrot.slane %v1526, 4
        %v1529 = vshrl.u32 %v1480, 16
        %v1531 = vrot.slane %v1529, 5
        %v1532 = vshll.u32 %v1480, 16
        %v1534 = vrot.slane %v1532, 6
        %v1535 = vor.u32 %v1531, %v1534
        %v1536 = vsel %vm1518, %v1527, %v1535
        %v1537 = vrot.slane %v1535, 4
        %v1539 = vshrl.u32 %v1481, 16
        %v1541 = vrot.slane %v1539, 5
        %v1542 = vshll.u32 %v1481, 16
        %v1544 = vrot.slane %v1542, 6
        %v1545 = vor.u32 %v1541, %v1544
        %v1546 = vsel %vm1518, %v1537, %v1545
        %v1547 = vrot.slane %v1545, 4
        %v1549 = vshrl.u32 %v1482, 16
        %v1551 = vrot.slane %v1549, 5
        %v1552 = vshll.u32 %v1482, 16
        %v1554 = vrot.slane %v1552, 6
        %v1555 = vor.u32 %v1551, %v1554
        %v1556 = vsel %vm1518, %v1547, %v1555
        %v1557 = vrot.slane %v1555, 4
        %v1559 = vshrl.u32 %v1483, 16
        %v1561 = vrot.slane %v1559, 5
        %v1562 = vshll.u32 %v1483, 16
        %v1564 = vrot.slane %v1562, 6
        %v1565 = vor.u32 %v1561, %v1564
        %v1566 = vsel %vm1518, %v1557, %v1565
        %v1567 = vrot.slane %v1565, 4
        %v1569 = vshrl.u32 %v1484, 16
        %v1571 = vrot.slane %v1569, 5
        %v1572 = vshll.u32 %v1484, 16
        %v1574 = vrot.slane %v1572, 6
        %v1575 = vor.u32 %v1571, %v1574
        %v1576 = vsel %vm1518, %v1567, %v1575
        %v1577 = vrot.slane %v1575, 4
        %v1579 = vshrl.u32 %v1485, 16
        %v1581 = vrot.slane %v1579, 5
        %v1582 = vshll.u32 %v1485, 16
        %v1584 = vrot.slane %v1582, 6
        %v1585 = vor.u32 %v1581, %v1584
        %v1586 = vsel %vm1518, %v1577, %v1585
        %v1587 = vrot.slane %v1585, 4
        %v1589 = vshrl.u32 %v1486, 16
        %v1591 = vrot.slane %v1589, 5
        %v1592 = vshll.u32 %v1486, 16
        %v1594 = vrot.slane %v1592, 6
        %v1595 = vor.u32 %v1591, %v1594
        %v1596 = vsel %vm1518, %v1587, %v1595
        %v1597 = vrot.slane %v1595, 4
        %v1599 = vshrl.u32 %v1487, 16
        %v1601 = vrot.slane %v1599, 5
        %v1602 = vshll.u32 %v1487, 16
        %v1604 = vrot.slane %v1602, 6
        %v1605 = vor.u32 %v1601, %v1604
        %v1606 = vsel %vm1518, %v1597, %v1605
        %v1607 = vrot.slane %v1605, 4
        %v1609 = vshrl.u32 %v1488, 16
        %v1611 = vrot.slane %v1609, 5
        %v1612 = vshll.u32 %v1488, 16
        %v1614 = vrot.slane %v1612, 6
        %v1615 = vor.u32 %v1611, %v1614
        %v1616 = vsel %vm1518, %v1607, %v1615
        %v1617 = vrot.slane %v1615, 4
        %v1619 = vshrl.u32 %v1489, 16
        %v1621 = vrot.slane %v1619, 5
        %v1622 = vshll.u32 %v1489, 16
        %v1624 = vrot.slane %v1622, 6
        %v1625 = vor.u32 %v1621, %v1624
        %v1626 = vsel %vm1518, %v1617, %v1625
        %v1627 = vrot.slane %v1625, 4
        %v1629 = vshrl.u32 %v1490, 16
        %v1631 = vrot.slane %v1629, 5
        %v1632 = vshll.u32 %v1490, 16
        %v1634 = vrot.slane %v1632, 6
        %v1635 = vor.u32 %v1631, %v1634
        %v1636 = vsel %vm1518, %v1627, %v1635
        %v1637 = vrot.slane %v1635, 4
        %v1639 = vshrl.u32 %v1491, 16
        %v1641 = vrot.slane %v1639, 5
        %v1642 = vshll.u32 %v1491, 16
        %v1644 = vrot.slane %v1642, 6
        %v1645 = vor.u32 %v1641, %v1644
        %v1646 = vsel %vm1518, %v1637, %v1645
        %v1647 = vrot.slane %v1645, 4
        %v1649 = vshrl.u32 %v1492, 16
        %v1651 = vrot.slane %v1649, 5
        %v1652 = vshll.u32 %v1492, 16
        %v1654 = vrot.slane %v1652, 6
        %v1655 = vor.u32 %v1651, %v1654
        %v1656 = vsel %vm1518, %v1647, %v1655
        %v1657 = vrot.slane %v1655, 4
        %v1659 = vshrl.u32 %v1493, 16
        %v1661 = vrot.slane %v1659, 5
        %v1662 = vshll.u32 %v1493, 16
        %v1664 = vrot.slane %v1662, 6
        %v1665 = vor.u32 %v1661, %v1664
        %v1666 = vsel %vm1518, %v1657, %v1665
        %v1667 = vrot.slane %v1665, 4
        %v1669 = vshrl.u32 %v1494, 16
        %v1671 = vrot.slane %v1669, 5
        %v1672 = vshll.u32 %v1494, 16
        %v1674 = vrot.slane %v1672, 6
        %v1675 = vor.u32 %v1671, %v1674
        %v1676 = vsel %vm1518, %v1667, %v1675
        %v1677 = vrot.slane %v1675, 4
        %v1679 = vshrl.u32 %v1495, 16
        %v1681 = vrot.slane %v1679, 5
        %v1682 = vshll.u32 %v1495, 16
        %v1684 = vrot.slane %v1682, 6
        %v1685 = vor.u32 %v1681, %v1684
        %v1686 = vsel %vm1518, %v1677, %v1685
        %v1687 = vrot.slane %v1685, 4
        %v1689 = vshrl.u32 %v1496, 16
        %v1691 = vrot.slane %v1689, 5
        %v1692 = vshll.u32 %v1496, 16
        %v1694 = vrot.slane %v1692, 6
        %v1695 = vor.u32 %v1691, %v1694
        %v1696 = vsel %vm1518, %v1687, %v1695
        %v1697 = vrot.slane %v1695, 4
        %v1699 = vshrl.u32 %v1497, 16
        %v1701 = vrot.slane %v1699, 5
        %v1702 = vshll.u32 %v1497, 16
        %v1704 = vrot.slane %v1702, 6
        %v1705 = vor.u32 %v1701, %v1704
        %v1706 = vsel %vm1518, %v1697, %v1705
        %v1707 = vrot.slane %v1705, 4
        %v1709 = vshrl.u32 %v1498, 16
        %v1711 = vrot.slane %v1709, 5
        %v1712 = vshll.u32 %v1498, 16
        %v1714 = vrot.slane %v1712, 6
        %v1715 = vor.u32 %v1711, %v1714
        %v1716 = vsel %vm1518, %v1707, %v1715
        %v1717 = vrot.slane %v1715, 4
        %v1719 = vshrl.u32 %v1499, 16
        %v1721 = vrot.slane %v1719, 5
        %v1722 = vshll.u32 %v1499, 16
        %v1724 = vrot.slane %v1722, 6
        %v1725 = vor.u32 %v1721, %v1724
        %v1726 = vsel %vm1518, %v1717, %v1725
        %v1727 = vrot.slane %v1725, 4
        %v1729 = vshrl.u32 %v1500, 16
        %v1731 = vrot.slane %v1729, 5
        %v1732 = vshll.u32 %v1500, 16
        %v1734 = vrot.slane %v1732, 6
        %v1735 = vor.u32 %v1731, %v1734
        %v1736 = vsel %vm1518, %v1727, %v1735
        %v1737 = vrot.slane %v1735, 4
        %v1739 = vshrl.u32 %v1501, 16
        %v1741 = vrot.slane %v1739, 5
        %v1742 = vshll.u32 %v1501, 16
        %v1744 = vrot.slane %v1742, 6
        %v1745 = vor.u32 %v1741, %v1744
        %v1746 = vsel %vm1518, %v1737, %v1745
        %v1747 = vrot.slane %v1745, 4
        %v1749 = vshrl.u32 %v1502, 16
        %v1751 = vrot.slane %v1749, 5
        %v1752 = vshll.u32 %v1502, 16
        %v1754 = vrot.slane %v1752, 6
        %v1755 = vor.u32 %v1751, %v1754
        %v1756 = vsel %vm1518, %v1747, %v1755
        %v1757 = vrot.slane %v1755, 4
        %v1759 = vshrl.u32 %v1503, 16
        %v1761 = vrot.slane %v1759, 5
        %v1762 = vshll.u32 %v1503, 16
        %v1764 = vrot.slane %v1762, 6
        %v1765 = vor.u32 %v1761, %v1764
        %v1766 = vsel %vm1518, %v1757, %v1765
        %v1767 = vrot.slane %v1765, 4
        %v1769 = vshrl.u32 %v1504, 16
        %v1771 = vrot.slane %v1769, 5
        %v1772 = vshll.u32 %v1504, 16
        %v1774 = vrot.slane %v1772, 6
        %v1775 = vor.u32 %v1771, %v1774
        %v1776 = vsel %vm1518, %v1767, %v1775
        %v1777 = vrot.slane %v1775, 4
        %v1779 = vshrl.u32 %v1505, 16
        %v1781 = vrot.slane %v1779, 5
        %v1782 = vshll.u32 %v1505, 16
        %v1784 = vrot.slane %v1782, 6
        %v1785 = vor.u32 %v1781, %v1784
        %v1786 = vsel %vm1518, %v1777, %v1785
        %v1787 = vrot.slane %v1785, 4
        %v1789 = vshrl.u32 %v1506, 16
        %v1791 = vrot.slane %v1789, 5
        %v1792 = vshll.u32 %v1506, 16
        %v1794 = vrot.slane %v1792, 6
        %v1795 = vor.u32 %v1791, %v1794
        %v1796 = vsel %vm1518, %v1787, %v1795
        %v1797 = vrot.slane %v1795, 4
        %v1799 = vshrl.u32 %v1507, 16
        %v1801 = vrot.slane %v1799, 5
        %v1802 = vshll.u32 %v1507, 16
        %v1804 = vrot.slane %v1802, 6
        %v1805 = vor.u32 %v1801, %v1804
        %v1806 = vsel %vm1518, %v1797, %v1805
        %v1807 = vrot.slane %v1805, 4
        %v1809 = vshrl.u32 %v1508, 16
        %v1811 = vrot.slane %v1809, 5
        %v1812 = vshll.u32 %v1508, 16
        %v1814 = vrot.slane %v1812, 6
        %v1815 = vor.u32 %v1811, %v1814
        %v1816 = vsel %vm1518, %v1807, %v1815
        %v1817 = vrot.slane %v1815, 4
        %v1819 = vshrl.u32 %v1509, 16
        %v1821 = vrot.slane %v1819, 5
        %v1822 = vshll.u32 %v1509, 16
        %v1824 = vrot.slane %v1822, 6
        %v1825 = vor.u32 %v1821, %v1824
        %v1826 = vsel %vm1518, %v1817, %v1825
        %v1827 = vrot.slane %v1825, 4
        %v1829 = vshrl.u32 %v1510, 16
        %v1831 = vrot.slane %v1829, 5
        %v1832 = vshll.u32 %v1510, 16
        %v1834 = vrot.slane %v1832, 6
        %v1835 = vor.u32 %v1831, %v1834
        %v1836 = vsel %vm1518, %v1827, %v1835
        %v1837 = vrot.slane %v1835, 4
        %v1839 = vshrl.u32 %v1511, 16
        %v1841 = vrot.slane %v1839, 5
        %v1842 = vshll.u32 %v1511, 16
        %v1844 = vrot.slane %v1842, 6
        %v1845 = vor.u32 %v1841, %v1844
        %v1846 = vsel %vm1518, %v1837, %v1845
        %v1847 = vrot.slane %v1845, 4
        %v1849 = vshrl.u32 %v1512, 16
        %v1851 = vrot.slane %v1849, 5
        %v1852 = vshll.u32 %v1512, 16
        %v1854 = vrot.slane %v1852, 6
        %v1855 = vor.u32 %v1851, %v1854
        %v1856 = vsel %vm1518, %v1847, %v1855
        %v1857 = vrot.slane %v1855, 4
        %v1859 = vshrl.u32 %v1513, 16
        %v1861 = vrot.slane %v1859, 5
        %v1862 = vshll.u32 %v1513, 16
        %v1864 = vrot.slane %v1862, 6
        %v1865 = vor.u32 %v1861, %v1864
        %v1866 = vsel %vm1518, %v1857, %v1865
        %v1867 = vrot.slane %v1865, 4
        %v1869 = vshrl.u32 %v1514, 16
        %v1871 = vrot.slane %v1869, 5
        %v1872 = vshll.u32 %v1514, 16
        %v1874 = vrot.slane %v1872, 6
        %v1875 = vor.u32 %v1871, %v1874
        %v1876 = vsel %vm1518, %v1867, %v1875
        %v1877 = vrot.slane %v1875, 4
        %v1879 = vshrl.u32 %v1515, 16
        %v1881 = vrot.slane %v1879, 5
        %v1882 = vshll.u32 %v1515, 16
        %v1884 = vrot.slane %v1882, 6
        %v1885 = vor.u32 %v1881, %v1884
        %v1886 = vsel %vm1518, %v1877, %v1885
        %1887 = vrot.lane.b32.xlu0 %v1536, 32
        %v1888 = vpop.permute.xlu0 %1887
        %1889 = vrot.lane.b32.xlu0 %v1546, 32
        %v1890 = vpop.permute.xlu0 %1889
        %1891 = vrot.lane.b32.xlu0 %v1556, 32
        %v1892 = vpop.permute.xlu0 %1891
        %1893 = vrot.lane.b32.xlu0 %v1566, 32
        %v1894 = vpop.permute.xlu0 %1893
        %1895 = vrot.lane.b32.xlu0 %v1576, 32
        %v1896 = vpop.permute.xlu0 %1895
        %1897 = vrot.lane.b32.xlu0 %v1586, 32
        %v1898 = vpop.permute.xlu0 %1897
        %1899 = vrot.lane.b32.xlu0 %v1596, 32
        %v1900 = vpop.permute.xlu0 %1899
        %1901 = vrot.lane.b32.xlu0 %v1606, 32
        %v1902 = vpop.permute.xlu0 %1901
        %1903 = vrot.lane.b32.xlu0 %v1616, 32
        %v1904 = vpop.permute.xlu0 %1903
        %1905 = vrot.lane.b32.xlu0 %v1626, 32
        %v1906 = vpop.permute.xlu0 %1905
        %1907 = vrot.lane.b32.xlu0 %v1636, 32
        %v1908 = vpop.permute.xlu0 %1907
        %1909 = vrot.lane.b32.xlu0 %v1646, 32
        %v1910 = vpop.permute.xlu0 %1909
        %1911 = vrot.lane.b32.xlu0 %v1656, 32
        %v1912 = vpop.permute.xlu0 %1911
        %1913 = vrot.lane.b32.xlu0 %v1666, 32
        %v1914 = vpop.permute.xlu0 %1913
        %1915 = vrot.lane.b32.xlu0 %v1676, 32
        %v1916 = vpop.permute.xlu0 %1915
        %1917 = vrot.lane.b32.xlu0 %v1686, 32
        %v1918 = vpop.permute.xlu0 %1917
        %1919 = vrot.lane.b32.xlu0 %v1696, 32
        %v1920 = vpop.permute.xlu0 %1919
        %1921 = vrot.lane.b32.xlu0 %v1706, 32
        %v1922 = vpop.permute.xlu0 %1921
        %1923 = vrot.lane.b32.xlu0 %v1716, 32
        %v1924 = vpop.permute.xlu0 %1923
        %1925 = vrot.lane.b32.xlu0 %v1726, 32
        %v1926 = vpop.permute.xlu0 %1925
        %1927 = vrot.lane.b32.xlu0 %v1736, 32
        %v1928 = vpop.permute.xlu0 %1927
        %1929 = vrot.lane.b32.xlu0 %v1746, 32
        %v1930 = vpop.permute.xlu0 %1929
        %1931 = vrot.lane.b32.xlu0 %v1756, 32
        %v1932 = vpop.permute.xlu0 %1931
        %1933 = vrot.lane.b32.xlu0 %v1766, 32
        %v1934 = vpop.permute.xlu0 %1933
        %1935 = vrot.lane.b32.xlu0 %v1776, 32
        %v1936 = vpop.permute.xlu0 %1935
        %1937 = vrot.lane.b32.xlu0 %v1786, 32
        %v1938 = vpop.permute.xlu0 %1937
        %1939 = vrot.lane.b32.xlu0 %v1796, 32
        %v1940 = vpop.permute.xlu0 %1939
        %1941 = vrot.lane.b32.xlu0 %v1806, 32
        %v1942 = vpop.permute.xlu0 %1941
        %1943 = vrot.lane.b32.xlu0 %v1816, 32
        %v1944 = vpop.permute.xlu0 %1943
        %1945 = vrot.lane.b32.xlu0 %v1826, 32
        %v1946 = vpop.permute.xlu0 %1945
        %1947 = vrot.lane.b32.xlu0 %v1836, 32
        %v1948 = vpop.permute.xlu0 %1947
        %1949 = vrot.lane.b32.xlu0 %v1846, 32
        %v1950 = vpop.permute.xlu0 %1949
        %1951 = vrot.lane.b32.xlu0 %v1856, 32
        %v1952 = vpop.permute.xlu0 %1951
        %1953 = vrot.lane.b32.xlu0 %v1866, 32
        %v1954 = vpop.permute.xlu0 %1953
        %1955 = vrot.lane.b32.xlu0 %v1876, 32
        %v1956 = vpop.permute.xlu0 %1955
        %1957 = vrot.lane.b32.xlu0 %v1886, 32
        %v1958 = vpop.permute.xlu0 %1957
        %vm1995 = vcmask 322816
        %1996 = vst.msk [vmem:[#allocation2] sm:$0xf] %vm1995, %v1888
        %1997 = vst.msk [vmem:[#allocation2 + $0x4] sm:$0xf] %vm1995, %v1890
        %1998 = vst.msk [vmem:[#allocation2 + $0x8] sm:$0xf] %vm1995, %v1892
        %1999 = vst.msk [vmem:[#allocation2 + $0xc] sm:$0xf] %vm1995, %v1894
        %2000 = vst.msk [vmem:[#allocation2 + $0x10] sm:$0xf] %vm1995, %v1896
        %2001 = vst.msk [vmem:[#allocation2 + $0x14] sm:$0xf] %vm1995, %v1898
        %2002 = vst.msk [vmem:[#allocation2 + $0x18] sm:$0xf] %vm1995, %v1900
        %2003 = vst.msk [vmem:[#allocation2 + $0x1c] sm:$0xf] %vm1995, %v1902
        %2004 = vst.msk [vmem:[#allocation2 + $0x20] sm:$0xf] %vm1995, %v1904
        %2005 = vst.msk [vmem:[#allocation2 + $0x24] sm:$0xf] %vm1995, %v1906
        %2006 = vst.msk [vmem:[#allocation2 + $0x28] sm:$0xf] %vm1995, %v1908
        %2007 = vst.msk [vmem:[#allocation2 + $0x2c] sm:$0xf] %vm1995, %v1910
        %2008 = vst.msk [vmem:[#allocation2 + $0x30] sm:$0xf] %vm1995, %v1912
        %2009 = vst.msk [vmem:[#allocation2 + $0x34] sm:$0xf] %vm1995, %v1914
        %2010 = vst.msk [vmem:[#allocation2 + $0x38] sm:$0xf] %vm1995, %v1916
        %2011 = vst.msk [vmem:[#allocation2 + $0x3c] sm:$0xf] %vm1995, %v1918
        %2012 = vst.msk [vmem:[#allocation2 + $0x40] sm:$0xf] %vm1995, %v1920
        %2013 = vst.msk [vmem:[#allocation2 + $0x44] sm:$0xf] %vm1995, %v1922
        %2014 = vst.msk [vmem:[#allocation2 + $0x48] sm:$0xf] %vm1995, %v1924
        %2015 = vst.msk [vmem:[#allocation2 + $0x4c] sm:$0xf] %vm1995, %v1926
        %2016 = vst.msk [vmem:[#allocation2 + $0x50] sm:$0xf] %vm1995, %v1928
        %2017 = vst.msk [vmem:[#allocation2 + $0x54] sm:$0xf] %vm1995, %v1930
        %2018 = vst.msk [vmem:[#allocation2 + $0x58] sm:$0xf] %vm1995, %v1932
        %2019 = vst.msk [vmem:[#allocation2 + $0x5c] sm:$0xf] %vm1995, %v1934
        %2020 = vst.msk [vmem:[#allocation2 + $0x60] sm:$0xf] %vm1995, %v1936
        %2021 = vst.msk [vmem:[#allocation2 + $0x64] sm:$0xf] %vm1995, %v1938
        %2022 = vst.msk [vmem:[#allocation2 + $0x68] sm:$0xf] %vm1995, %v1940
        %2023 = vst.msk [vmem:[#allocation2 + $0x6c] sm:$0xf] %vm1995, %v1942
        %2024 = vst.msk [vmem:[#allocation2 + $0x70] sm:$0xf] %vm1995, %v1944
        %2025 = vst.msk [vmem:[#allocation2 + $0x74] sm:$0xf] %vm1995, %v1946
        %2026 = vst.msk [vmem:[#allocation2 + $0x78] sm:$0xf] %vm1995, %v1948
        %2027 = vst.msk [vmem:[#allocation2 + $0x7c] sm:$0xf] %vm1995, %v1950
        %2028 = vst.msk [vmem:[#allocation2 + $0x80] sm:$0xf] %vm1995, %v1952
        %2029 = vst.msk [vmem:[#allocation2 + $0x84] sm:$0xf] %vm1995, %v1954
        %2030 = vst.msk [vmem:[#allocation2 + $0x88] sm:$0xf] %vm1995, %v1956
        %2031 = vst.msk [vmem:[#allocation2 + $0x8c] sm:$0xf] %vm1995, %v1958
        %v2032 = vld [vmem:[%s196 + $0x8] sm:$0xc]
        %v2033 = vld [vmem:[%s196 + $0xc] sm:$0xf]
        %v2034 = vld [vmem:[%s196 + $0x10] sm:$0xf]
        %v2035 = vld [vmem:[%s196 + $0x14] sm:$0xf]
        %v2036 = vld [vmem:[%s196 + $0x18] sm:$0xf]
        %v2037 = vld [vmem:[%s196 + $0x1c] sm:$0xf]
        %v2038 = vld [vmem:[%s196 + $0x20] sm:$0xf]
        %v2039 = vld [vmem:[%s196 + $0x24] sm:$0xf]
        %v2040 = vld [vmem:[%s196 + $0x28] sm:$0xf]
        %v2041 = vld [vmem:[%s196 + $0x2c] sm:$0xf]
        %v2042 = vld [vmem:[%s196 + $0x30] sm:$0xf]
        %v2043 = vld [vmem:[%s196 + $0x34] sm:$0xf]
        %v2044 = vld [vmem:[%s196 + $0x38] sm:$0xf]
        %v2045 = vld [vmem:[%s196 + $0x3c] sm:$0xf]
        %v2046 = vld [vmem:[%s196 + $0x40] sm:$0xf]
        %v2047 = vld [vmem:[%s196 + $0x44] sm:$0xf]
        %v2048 = vld [vmem:[%s196 + $0x48] sm:$0xf]
        %v2049 = vld [vmem:[%s196 + $0x4c] sm:$0xf]
        %v2050 = vld [vmem:[%s196 + $0x50] sm:$0xf]
        %v2051 = vld [vmem:[%s196 + $0x54] sm:$0xf]
        %v2052 = vld [vmem:[%s196 + $0x58] sm:$0xf]
        %v2053 = vld [vmem:[%s196 + $0x5c] sm:$0xf]
        %v2054 = vld [vmem:[%s196 + $0x60] sm:$0xf]
        %v2055 = vld [vmem:[%s196 + $0x64] sm:$0xf]
        %v2056 = vld [vmem:[%s196 + $0x68] sm:$0xf]
        %v2057 = vld [vmem:[%s196 + $0x6c] sm:$0xf]
        %v2058 = vld [vmem:[%s196 + $0x70] sm:$0xf]
        %v2059 = vld [vmem:[%s196 + $0x74] sm:$0xf]
        %v2060 = vld [vmem:[%s196 + $0x78] sm:$0xf]
        %v2061 = vld [vmem:[%s196 + $0x7c] sm:$0xf]
        %v2062 = vld [vmem:[%s196 + $0x80] sm:$0xf]
        %v2063 = vld [vmem:[%s196 + $0x84] sm:$0xf]
        %v2064 = vld [vmem:[%s196 + $0x88] sm:$0xf]
        %v2065 = vld [vmem:[%s196 + $0x8c] sm:$0xf]
        %v2066 = vld [vmem:[%s196 + $0x90] sm:$0xf]
        %v2067 = vld [vmem:[%s196 + $0x94] sm:$0xf]
        %v2068 = vld [vmem:[%s196 + $0x98] sm:$0x3]
        %vm2106 = vcmask 1041408
        %vm2107 = vcmask 1045508
        %vm2108 = vmor %vm2106, %vm2107
        %v2109 = vrot.slane %v2032, 6
        %v2110 = vrot.slane %v2109, 4
        %v2111 = vrot.slane %v2033, 6
        %v2112 = vsel %vm2108, %v2110, %v2111
        %v2113 = vrot.slane %v2111, 4
        %v2114 = vrot.slane %v2034, 6
        %v2115 = vsel %vm2108, %v2113, %v2114
        %v2116 = vrot.slane %v2114, 4
        %v2117 = vrot.slane %v2035, 6
        %v2118 = vsel %vm2108, %v2116, %v2117
        %v2119 = vrot.slane %v2117, 4
        %v2120 = vrot.slane %v2036, 6
        %v2121 = vsel %vm2108, %v2119, %v2120
        %v2122 = vrot.slane %v2120, 4
        %v2123 = vrot.slane %v2037, 6
        %v2124 = vsel %vm2108, %v2122, %v2123
        %v2125 = vrot.slane %v2123, 4
        %v2126 = vrot.slane %v2038, 6
        %v2127 = vsel %vm2108, %v2125, %v2126
        %v2128 = vrot.slane %v2126, 4
        %v2129 = vrot.slane %v2039, 6
        %v2130 = vsel %vm2108, %v2128, %v2129
        %v2131 = vrot.slane %v2129, 4
        %v2132 = vrot.slane %v2040, 6
        %v2133 = vsel %vm2108, %v2131, %v2132
        %v2134 = vrot.slane %v2132, 4
        %v2135 = vrot.slane %v2041, 6
        %v2136 = vsel %vm2108, %v2134, %v2135
        %v2137 = vrot.slane %v2135, 4
        %v2138 = vrot.slane %v2042, 6
        %v2139 = vsel %vm2108, %v2137, %v2138
        %v2140 = vrot.slane %v2138, 4
        %v2141 = vrot.slane %v2043, 6
        %v2142 = vsel %vm2108, %v2140, %v2141
        %v2143 = vrot.slane %v2141, 4
        %v2144 = vrot.slane %v2044, 6
        %v2145 = vsel %vm2108, %v2143, %v2144
        %v2146 = vrot.slane %v2144, 4
        %v2147 = vrot.slane %v2045, 6
        %v2148 = vsel %vm2108, %v2146, %v2147
        %v2149 = vrot.slane %v2147, 4
        %v2150 = vrot.slane %v2046, 6
        %v2151 = vsel %vm2108, %v2149, %v2150
        %v2152 = vrot.slane %v2150, 4
        %v2153 = vrot.slane %v2047, 6
        %v2154 = vsel %vm2108, %v2152, %v2153
        %v2155 = vrot.slane %v2153, 4
        %v2156 = vrot.slane %v2048, 6
        %v2157 = vsel %vm2108, %v2155, %v2156
        %v2158 = vrot.slane %v2156, 4
        %v2159 = vrot.slane %v2049, 6
        %v2160 = vsel %vm2108, %v2158, %v2159
        %v2161 = vrot.slane %v2159, 4
        %v2162 = vrot.slane %v2050, 6
        %v2163 = vsel %vm2108, %v2161, %v2162
        %v2164 = vrot.slane %v2162, 4
        %v2165 = vrot.slane %v2051, 6
        %v2166 = vsel %vm2108, %v2164, %v2165
        %v2167 = vrot.slane %v2165, 4
        %v2168 = vrot.slane %v2052, 6
        %v2169 = vsel %vm2108, %v2167, %v2168
        %v2170 = vrot.slane %v2168, 4
        %v2171 = vrot.slane %v2053, 6
        %v2172 = vsel %vm2108, %v2170, %v2171
        %v2173 = vrot.slane %v2171, 4
        %v2174 = vrot.slane %v2054, 6
        %v2175 = vsel %vm2108, %v2173, %v2174
        %v2176 = vrot.slane %v2174, 4
        %v2177 = vrot.slane %v2055, 6
        %v2178 = vsel %vm2108, %v2176, %v2177
        %v2179 = vrot.slane %v2177, 4
        %v2180 = vrot.slane %v2056, 6
        %v2181 = vsel %vm2108, %v2179, %v2180
        %v2182 = vrot.slane %v2180, 4
        %v2183 = vrot.slane %v2057, 6
        %v2184 = vsel %vm2108, %v2182, %v2183
        %v2185 = vrot.slane %v2183, 4
        %v2186 = vrot.slane %v2058, 6
        %v2187 = vsel %vm2108, %v2185, %v2186
        %v2188 = vrot.slane %v2186, 4
        %v2189 = vrot.slane %v2059, 6
        %v2190 = vsel %vm2108, %v2188, %v2189
        %v2191 = vrot.slane %v2189, 4
        %v2192 = vrot.slane %v2060, 6
        %v2193 = vsel %vm2108, %v2191, %v2192
        %v2194 = vrot.slane %v2192, 4
        %v2195 = vrot.slane %v2061, 6
        %v2196 = vsel %vm2108, %v2194, %v2195
        %v2197 = vrot.slane %v2195, 4
        %v2198 = vrot.slane %v2062, 6
        %v2199 = vsel %vm2108, %v2197, %v2198
        %v2200 = vrot.slane %v2198, 4
        %v2201 = vrot.slane %v2063, 6
        %v2202 = vsel %vm2108, %v2200, %v2201
        %v2203 = vrot.slane %v2201, 4
        %v2204 = vrot.slane %v2064, 6
        %v2205 = vsel %vm2108, %v2203, %v2204
        %v2206 = vrot.slane %v2204, 4
        %v2207 = vrot.slane %v2065, 6
        %v2208 = vsel %vm2108, %v2206, %v2207
        %v2209 = vrot.slane %v2207, 4
        %v2210 = vrot.slane %v2066, 6
        %v2211 = vsel %vm2108, %v2209, %v2210
        %v2212 = vrot.slane %v2210, 4
        %v2213 = vrot.slane %v2067, 6
        %v2214 = vsel %vm2108, %v2212, %v2213
        %v2215 = vrot.slane %v2213, 4
        %v2216 = vrot.slane %v2068, 6
        %v2217 = vsel %vm2108, %v2215, %v2216
        %2218 = vrot.lane.b32.xlu0 %v2112, 40
        %v2219 = vpop.permute.xlu0 %2218
        %2220 = vrot.lane.b32.xlu0 %v2115, 40
        %v2221 = vpop.permute.xlu0 %2220
        %2222 = vrot.lane.b32.xlu0 %v2118, 40
        %v2223 = vpop.permute.xlu0 %2222
        %2224 = vrot.lane.b32.xlu0 %v2121, 40
        %v2225 = vpop.permute.xlu0 %2224
        %2226 = vrot.lane.b32.xlu0 %v2124, 40
        %v2227 = vpop.permute.xlu0 %2226
        %2228 = vrot.lane.b32.xlu0 %v2127, 40
        %v2229 = vpop.permute.xlu0 %2228
        %2230 = vrot.lane.b32.xlu0 %v2130, 40
        %v2231 = vpop.permute.xlu0 %2230
        %2232 = vrot.lane.b32.xlu0 %v2133, 40
        %v2233 = vpop.permute.xlu0 %2232
        %2234 = vrot.lane.b32.xlu0 %v2136, 40
        %v2235 = vpop.permute.xlu0 %2234
        %2236 = vrot.lane.b32.xlu0 %v2139, 40
        %v2237 = vpop.permute.xlu0 %2236
        %2238 = vrot.lane.b32.xlu0 %v2142, 40
        %v2239 = vpop.permute.xlu0 %2238
        %2240 = vrot.lane.b32.xlu0 %v2145, 40
        %v2241 = vpop.permute.xlu0 %2240
        %2242 = vrot.lane.b32.xlu0 %v2148, 40
        %v2243 = vpop.permute.xlu0 %2242
        %2244 = vrot.lane.b32.xlu0 %v2151, 40
        %v2245 = vpop.permute.xlu0 %2244
        %2246 = vrot.lane.b32.xlu0 %v2154, 40
        %v2247 = vpop.permute.xlu0 %2246
        %2248 = vrot.lane.b32.xlu0 %v2157, 40
        %v2249 = vpop.permute.xlu0 %2248
        %2250 = vrot.lane.b32.xlu0 %v2160, 40
        %v2251 = vpop.permute.xlu0 %2250
        %2252 = vrot.lane.b32.xlu0 %v2163, 40
        %v2253 = vpop.permute.xlu0 %2252
        %2254 = vrot.lane.b32.xlu0 %v2166, 40
        %v2255 = vpop.permute.xlu0 %2254
        %2256 = vrot.lane.b32.xlu0 %v2169, 40
        %v2257 = vpop.permute.xlu0 %2256
        %2258 = vrot.lane.b32.xlu0 %v2172, 40
        %v2259 = vpop.permute.xlu0 %2258
        %2260 = vrot.lane.b32.xlu0 %v2175, 40
        %v2261 = vpop.permute.xlu0 %2260
        %2262 = vrot.lane.b32.xlu0 %v2178, 40
        %v2263 = vpop.permute.xlu0 %2262
        %2264 = vrot.lane.b32.xlu0 %v2181, 40
        %v2265 = vpop.permute.xlu0 %2264
        %2266 = vrot.lane.b32.xlu0 %v2184, 40
        %v2267 = vpop.permute.xlu0 %2266
        %2268 = vrot.lane.b32.xlu0 %v2187, 40
        %v2269 = vpop.permute.xlu0 %2268
        %2270 = vrot.lane.b32.xlu0 %v2190, 40
        %v2271 = vpop.permute.xlu0 %2270
        %2272 = vrot.lane.b32.xlu0 %v2193, 40
        %v2273 = vpop.permute.xlu0 %2272
        %2274 = vrot.lane.b32.xlu0 %v2196, 40
        %v2275 = vpop.permute.xlu0 %2274
        %2276 = vrot.lane.b32.xlu0 %v2199, 40
        %v2277 = vpop.permute.xlu0 %2276
        %2278 = vrot.lane.b32.xlu0 %v2202, 40
        %v2279 = vpop.permute.xlu0 %2278
        %2280 = vrot.lane.b32.xlu0 %v2205, 40
        %v2281 = vpop.permute.xlu0 %2280
        %2282 = vrot.lane.b32.xlu0 %v2208, 40
        %v2283 = vpop.permute.xlu0 %2282
        %2284 = vrot.lane.b32.xlu0 %v2211, 40
        %v2285 = vpop.permute.xlu0 %2284
        %2286 = vrot.lane.b32.xlu0 %v2214, 40
        %v2287 = vpop.permute.xlu0 %2286
        %2288 = vrot.lane.b32.xlu0 %v2217, 40
        %v2289 = vpop.permute.xlu0 %2288
        %vm2326 = vcmask 388416
        %2327 = vst.msk [vmem:[#allocation2] sm:$0xf] %vm2326, %v2219
        %2328 = vst.msk [vmem:[#allocation2 + $0x4] sm:$0xf] %vm2326, %v2221
        %2329 = vst.msk [vmem:[#allocation2 + $0x8] sm:$0xf] %vm2326, %v2223
        %2330 = vst.msk [vmem:[#allocation2 + $0xc] sm:$0xf] %vm2326, %v2225
        %2331 = vst.msk [vmem:[#allocation2 + $0x10] sm:$0xf] %vm2326, %v2227
        %2332 = vst.msk [vmem:[#allocation2 + $0x14] sm:$0xf] %vm2326, %v2229
        %2333 = vst.msk [vmem:[#allocation2 + $0x18] sm:$0xf] %vm2326, %v2231
        %2334 = vst.msk [vmem:[#allocation2 + $0x1c] sm:$0xf] %vm2326, %v2233
        %2335 = vst.msk [vmem:[#allocation2 + $0x20] sm:$0xf] %vm2326, %v2235
        %2336 = vst.msk [vmem:[#allocation2 + $0x24] sm:$0xf] %vm2326, %v2237
        %2337 = vst.msk [vmem:[#allocation2 + $0x28] sm:$0xf] %vm2326, %v2239
        %2338 = vst.msk [vmem:[#allocation2 + $0x2c] sm:$0xf] %vm2326, %v2241
        %2339 = vst.msk [vmem:[#allocation2 + $0x30] sm:$0xf] %vm2326, %v2243
        %2340 = vst.msk [vmem:[#allocation2 + $0x34] sm:$0xf] %vm2326, %v2245
        %2341 = vst.msk [vmem:[#allocation2 + $0x38] sm:$0xf] %vm2326, %v2247
        %2342 = vst.msk [vmem:[#allocation2 + $0x3c] sm:$0xf] %vm2326, %v2249
        %2343 = vst.msk [vmem:[#allocation2 + $0x40] sm:$0xf] %vm2326, %v2251
        %2344 = vst.msk [vmem:[#allocation2 + $0x44] sm:$0xf] %vm2326, %v2253
        %2345 = vst.msk [vmem:[#allocation2 + $0x48] sm:$0xf] %vm2326, %v2255
        %2346 = vst.msk [vmem:[#allocation2 + $0x4c] sm:$0xf] %vm2326, %v2257
        %2347 = vst.msk [vmem:[#allocation2 + $0x50] sm:$0xf] %vm2326, %v2259
        %2348 = vst.msk [vmem:[#allocation2 + $0x54] sm:$0xf] %vm2326, %v2261
        %2349 = vst.msk [vmem:[#allocation2 + $0x58] sm:$0xf] %vm2326, %v2263
        %2350 = vst.msk [vmem:[#allocation2 + $0x5c] sm:$0xf] %vm2326, %v2265
        %2351 = vst.msk [vmem:[#allocation2 + $0x60] sm:$0xf] %vm2326, %v2267
        %2352 = vst.msk [vmem:[#allocation2 + $0x64] sm:$0xf] %vm2326, %v2269
        %2353 = vst.msk [vmem:[#allocation2 + $0x68] sm:$0xf] %vm2326, %v2271
        %2354 = vst.msk [vmem:[#allocation2 + $0x6c] sm:$0xf] %vm2326, %v2273
        %2355 = vst.msk [vmem:[#allocation2 + $0x70] sm:$0xf] %vm2326, %v2275
        %2356 = vst.msk [vmem:[#allocation2 + $0x74] sm:$0xf] %vm2326, %v2277
        %2357 = vst.msk [vmem:[#allocation2 + $0x78] sm:$0xf] %vm2326, %v2279
        %2358 = vst.msk [vmem:[#allocation2 + $0x7c] sm:$0xf] %vm2326, %v2281
        %2359 = vst.msk [vmem:[#allocation2 + $0x80] sm:$0xf] %vm2326, %v2283
        %2360 = vst.msk [vmem:[#allocation2 + $0x84] sm:$0xf] %vm2326, %v2285
        %2361 = vst.msk [vmem:[#allocation2 + $0x88] sm:$0xf] %vm2326, %v2287
        %2362 = vst.msk [vmem:[#allocation2 + $0x8c] sm:$0xf] %vm2326, %v2289
        %v2363 = vld [vmem:[%s196 + $0x10] sm:$0xc]
        %v2364 = vld [vmem:[%s196 + $0x14] sm:$0xf]
        %v2365 = vld [vmem:[%s196 + $0x18] sm:$0xf]
        %v2366 = vld [vmem:[%s196 + $0x1c] sm:$0xf]
        %v2367 = vld [vmem:[%s196 + $0x20] sm:$0xf]
        %v2368 = vld [vmem:[%s196 + $0x24] sm:$0xf]
        %v2369 = vld [vmem:[%s196 + $0x28] sm:$0xf]
        %v2370 = vld [vmem:[%s196 + $0x2c] sm:$0xf]
        %v2371 = vld [vmem:[%s196 + $0x30] sm:$0xf]
        %v2372 = vld [vmem:[%s196 + $0x34] sm:$0xf]
        %v2373 = vld [vmem:[%s196 + $0x38] sm:$0xf]
        %v2374 = vld [vmem:[%s196 + $0x3c] sm:$0xf]
        %v2375 = vld [vmem:[%s196 + $0x40] sm:$0xf]
        %v2376 = vld [vmem:[%s196 + $0x44] sm:$0xf]
        %v2377 = vld [vmem:[%s196 + $0x48] sm:$0xf]
        %v2378 = vld [vmem:[%s196 + $0x4c] sm:$0xf]
        %v2379 = vld [vmem:[%s196 + $0x50] sm:$0xf]
        %v2380 = vld [vmem:[%s196 + $0x54] sm:$0xf]
        %v2381 = vld [vmem:[%s196 + $0x58] sm:$0xf]
        %v2382 = vld [vmem:[%s196 + $0x5c] sm:$0xf]
        %v2383 = vld [vmem:[%s196 + $0x60] sm:$0xf]
        %v2384 = vld [vmem:[%s196 + $0x64] sm:$0xf]
        %v2385 = vld [vmem:[%s196 + $0x68] sm:$0xf]
        %v2386 = vld [vmem:[%s196 + $0x6c] sm:$0xf]
        %v2387 = vld [vmem:[%s196 + $0x70] sm:$0xf]
        %v2388 = vld [vmem:[%s196 + $0x74] sm:$0xf]
        %v2389 = vld [vmem:[%s196 + $0x78] sm:$0xf]
        %v2390 = vld [vmem:[%s196 + $0x7c] sm:$0xf]
        %v2391 = vld [vmem:[%s196 + $0x80] sm:$0xf]
        %v2392 = vld [vmem:[%s196 + $0x84] sm:$0xf]
        %v2393 = vld [vmem:[%s196 + $0x88] sm:$0xf]
        %v2394 = vld [vmem:[%s196 + $0x8c] sm:$0xf]
        %v2395 = vld [vmem:[%s196 + $0x90] sm:$0xf]
        %v2396 = vld [vmem:[%s196 + $0x94] sm:$0xf]
        %v2397 = vld [vmem:[%s196 + $0x98] sm:$0xf]
        %v2398 = vld [vmem:[%s196 + $0x9c] sm:$0xf]
        %v2399 = vld [vmem:[%s196 + $0xa0] sm:$0x3]
        %v2437 = vrot.slane %v2363, 6
        %v2438 = vrot.slane %v2437, 4
        %v2439 = vrot.slane %v2364, 6
        %v2440 = vsel %vm2108, %v2438, %v2439
        %v2441 = vrot.slane %v2439, 4
        %v2442 = vrot.slane %v2365, 6
        %v2443 = vsel %vm2108, %v2441, %v2442
        %v2444 = vrot.slane %v2442, 4
        %v2445 = vrot.slane %v2366, 6
        %v2446 = vsel %vm2108, %v2444, %v2445
        %v2447 = vrot.slane %v2445, 4
        %v2448 = vrot.slane %v2367, 6
        %v2449 = vsel %vm2108, %v2447, %v2448
        %v2450 = vrot.slane %v2448, 4
        %v2451 = vrot.slane %v2368, 6
        %v2452 = vsel %vm2108, %v2450, %v2451
        %v2453 = vrot.slane %v2451, 4
        %v2454 = vrot.slane %v2369, 6
        %v2455 = vsel %vm2108, %v2453, %v2454
        %v2456 = vrot.slane %v2454, 4
        %v2457 = vrot.slane %v2370, 6
        %v2458 = vsel %vm2108, %v2456, %v2457
        %v2459 = vrot.slane %v2457, 4
        %v2460 = vrot.slane %v2371, 6
        %v2461 = vsel %vm2108, %v2459, %v2460
        %v2462 = vrot.slane %v2460, 4
        %v2463 = vrot.slane %v2372, 6
        %v2464 = vsel %vm2108, %v2462, %v2463
        %v2465 = vrot.slane %v2463, 4
        %v2466 = vrot.slane %v2373, 6
        %v2467 = vsel %vm2108, %v2465, %v2466
        %v2468 = vrot.slane %v2466, 4
        %v2469 = vrot.slane %v2374, 6
        %v2470 = vsel %vm2108, %v2468, %v2469
        %v2471 = vrot.slane %v2469, 4
        %v2472 = vrot.slane %v2375, 6
        %v2473 = vsel %vm2108, %v2471, %v2472
        %v2474 = vrot.slane %v2472, 4
        %v2475 = vrot.slane %v2376, 6
        %v2476 = vsel %vm2108, %v2474, %v2475
        %v2477 = vrot.slane %v2475, 4
        %v2478 = vrot.slane %v2377, 6
        %v2479 = vsel %vm2108, %v2477, %v2478
        %v2480 = vrot.slane %v2478, 4
        %v2481 = vrot.slane %v2378, 6
        %v2482 = vsel %vm2108, %v2480, %v2481
        %v2483 = vrot.slane %v2481, 4
        %v2484 = vrot.slane %v2379, 6
        %v2485 = vsel %vm2108, %v2483, %v2484
        %v2486 = vrot.slane %v2484, 4
        %v2487 = vrot.slane %v2380, 6
        %v2488 = vsel %vm2108, %v2486, %v2487
        %v2489 = vrot.slane %v2487, 4
        %v2490 = vrot.slane %v2381, 6
        %v2491 = vsel %vm2108, %v2489, %v2490
        %v2492 = vrot.slane %v2490, 4
        %v2493 = vrot.slane %v2382, 6
        %v2494 = vsel %vm2108, %v2492, %v2493
        %v2495 = vrot.slane %v2493, 4
        %v2496 = vrot.slane %v2383, 6
        %v2497 = vsel %vm2108, %v2495, %v2496
        %v2498 = vrot.slane %v2496, 4
        %v2499 = vrot.slane %v2384, 6
        %v2500 = vsel %vm2108, %v2498, %v2499
        %v2501 = vrot.slane %v2499, 4
        %v2502 = vrot.slane %v2385, 6
        %v2503 = vsel %vm2108, %v2501, %v2502
        %v2504 = vrot.slane %v2502, 4
        %v2505 = vrot.slane %v2386, 6
        %v2506 = vsel %vm2108, %v2504, %v2505
        %v2507 = vrot.slane %v2505, 4
        %v2508 = vrot.slane %v2387, 6
        %v2509 = vsel %vm2108, %v2507, %v2508
        %v2510 = vrot.slane %v2508, 4
        %v2511 = vrot.slane %v2388, 6
        %v2512 = vsel %vm2108, %v2510, %v2511
        %v2513 = vrot.slane %v2511, 4
        %v2514 = vrot.slane %v2389, 6
        %v2515 = vsel %vm2108, %v2513, %v2514
        %v2516 = vrot.slane %v2514, 4
        %v2517 = vrot.slane %v2390, 6
        %v2518 = vsel %vm2108, %v2516, %v2517
        %v2519 = vrot.slane %v2517, 4
        %v2520 = vrot.slane %v2391, 6
        %v2521 = vsel %vm2108, %v2519, %v2520
        %v2522 = vrot.slane %v2520, 4
        %v2523 = vrot.slane %v2392, 6
        %v2524 = vsel %vm2108, %v2522, %v2523
        %v2525 = vrot.slane %v2523, 4
        %v2526 = vrot.slane %v2393, 6
        %v2527 = vsel %vm2108, %v2525, %v2526
        %v2528 = vrot.slane %v2526, 4
        %v2529 = vrot.slane %v2394, 6
        %v2530 = vsel %vm2108, %v2528, %v2529
        %v2531 = vrot.slane %v2529, 4
        %v2532 = vrot.slane %v2395, 6
        %v2533 = vsel %vm2108, %v2531, %v2532
        %v2534 = vrot.slane %v2532, 4
        %v2535 = vrot.slane %v2396, 6
        %v2536 = vsel %vm2108, %v2534, %v2535
        %v2537 = vrot.slane %v2535, 4
        %v2538 = vrot.slane %v2397, 6
        %v2539 = vsel %vm2108, %v2537, %v2538
        %v2540 = vrot.slane %v2538, 4
        %v2541 = vrot.slane %v2398, 6
        %v2542 = vsel %vm2108, %v2540, %v2541
        %v2543 = vrot.slane %v2541, 4
        %v2544 = vrot.slane %v2399, 6
        %v2545 = vsel %vm2108, %v2543, %v2544
        %2546 = vrot.lane.b32.xlu0 %v2440, 48
        %v2547 = vpop.permute.xlu0 %2546
        %2548 = vrot.lane.b32.xlu0 %v2443, 48
        %v2549 = vpop.permute.xlu0 %2548
        %2550 = vrot.lane.b32.xlu0 %v2446, 48
        %v2551 = vpop.permute.xlu0 %2550
        %2552 = vrot.lane.b32.xlu0 %v2449, 48
        %v2553 = vpop.permute.xlu0 %2552
        %2554 = vrot.lane.b32.xlu0 %v2452, 48
        %v2555 = vpop.permute.xlu0 %2554
        %2556 = vrot.lane.b32.xlu0 %v2455, 48
        %v2557 = vpop.permute.xlu0 %2556
        %2558 = vrot.lane.b32.xlu0 %v2458, 48
        %v2559 = vpop.permute.xlu0 %2558
        %2560 = vrot.lane.b32.xlu0 %v2461, 48
        %v2561 = vpop.permute.xlu0 %2560
        %2562 = vrot.lane.b32.xlu0 %v2464, 48
        %v2563 = vpop.permute.xlu0 %2562
        %2564 = vrot.lane.b32.xlu0 %v2467, 48
        %v2565 = vpop.permute.xlu0 %2564
        %2566 = vrot.lane.b32.xlu0 %v2470, 48
        %v2567 = vpop.permute.xlu0 %2566
        %2568 = vrot.lane.b32.xlu0 %v2473, 48
        %v2569 = vpop.permute.xlu0 %2568
        %2570 = vrot.lane.b32.xlu0 %v2476, 48
        %v2571 = vpop.permute.xlu0 %2570
        %2572 = vrot.lane.b32.xlu0 %v2479, 48
        %v2573 = vpop.permute.xlu0 %2572
        %2574 = vrot.lane.b32.xlu0 %v2482, 48
        %v2575 = vpop.permute.xlu0 %2574
        %2576 = vrot.lane.b32.xlu0 %v2485, 48
        %v2577 = vpop.permute.xlu0 %2576
        %2578 = vrot.lane.b32.xlu0 %v2488, 48
        %v2579 = vpop.permute.xlu0 %2578
        %2580 = vrot.lane.b32.xlu0 %v2491, 48
        %v2581 = vpop.permute.xlu0 %2580
        %2582 = vrot.lane.b32.xlu0 %v2494, 48
        %v2583 = vpop.permute.xlu0 %2582
        %2584 = vrot.lane.b32.xlu0 %v2497, 48
        %v2585 = vpop.permute.xlu0 %2584
        %2586 = vrot.lane.b32.xlu0 %v2500, 48
        %v2587 = vpop.permute.xlu0 %2586
        %2588 = vrot.lane.b32.xlu0 %v2503, 48
        %v2589 = vpop.permute.xlu0 %2588
        %2590 = vrot.lane.b32.xlu0 %v2506, 48
        %v2591 = vpop.permute.xlu0 %2590
        %2592 = vrot.lane.b32.xlu0 %v2509, 48
        %v2593 = vpop.permute.xlu0 %2592
        %2594 = vrot.lane.b32.xlu0 %v2512, 48
        %v2595 = vpop.permute.xlu0 %2594
        %2596 = vrot.lane.b32.xlu0 %v2515, 48
        %v2597 = vpop.permute.xlu0 %2596
        %2598 = vrot.lane.b32.xlu0 %v2518, 48
        %v2599 = vpop.permute.xlu0 %2598
        %2600 = vrot.lane.b32.xlu0 %v2521, 48
        %v2601 = vpop.permute.xlu0 %2600
        %2602 = vrot.lane.b32.xlu0 %v2524, 48
        %v2603 = vpop.permute.xlu0 %2602
        %2604 = vrot.lane.b32.xlu0 %v2527, 48
        %v2605 = vpop.permute.xlu0 %2604
        %2606 = vrot.lane.b32.xlu0 %v2530, 48
        %v2607 = vpop.permute.xlu0 %2606
        %2608 = vrot.lane.b32.xlu0 %v2533, 48
        %v2609 = vpop.permute.xlu0 %2608
        %2610 = vrot.lane.b32.xlu0 %v2536, 48
        %v2611 = vpop.permute.xlu0 %2610
        %2612 = vrot.lane.b32.xlu0 %v2539, 48
        %v2613 = vpop.permute.xlu0 %2612
        %2614 = vrot.lane.b32.xlu0 %v2542, 48
        %v2615 = vpop.permute.xlu0 %2614
        %2616 = vrot.lane.b32.xlu0 %v2545, 48
        %v2617 = vpop.permute.xlu0 %2616
        %vm2654 = vcmask 454016
        %2655 = vst.msk [vmem:[#allocation2] sm:$0xf] %vm2654, %v2547
        %2656 = vst.msk [vmem:[#allocation2 + $0x4] sm:$0xf] %vm2654, %v2549
        %2657 = vst.msk [vmem:[#allocation2 + $0x8] sm:$0xf] %vm2654, %v2551
        %2658 = vst.msk [vmem:[#allocation2 + $0xc] sm:$0xf] %vm2654, %v2553
        %2659 = vst.msk [vmem:[#allocation2 + $0x10] sm:$0xf] %vm2654, %v2555
        %2660 = vst.msk [vmem:[#allocation2 + $0x14] sm:$0xf] %vm2654, %v2557
        %2661 = vst.msk [vmem:[#allocation2 + $0x18] sm:$0xf] %vm2654, %v2559
        %2662 = vst.msk [vmem:[#allocation2 + $0x1c] sm:$0xf] %vm2654, %v2561
        %2663 = vst.msk [vmem:[#allocation2 + $0x20] sm:$0xf] %vm2654, %v2563
        %2664 = vst.msk [vmem:[#allocation2 + $0x24] sm:$0xf] %vm2654, %v2565
        %2665 = vst.msk [vmem:[#allocation2 + $0x28] sm:$0xf] %vm2654, %v2567
        %2666 = vst.msk [vmem:[#allocation2 + $0x2c] sm:$0xf] %vm2654, %v2569
        %2667 = vst.msk [vmem:[#allocation2 + $0x30] sm:$0xf] %vm2654, %v2571
        %2668 = vst.msk [vmem:[#allocation2 + $0x34] sm:$0xf] %vm2654, %v2573
        %2669 = vst.msk [vmem:[#allocation2 + $0x38] sm:$0xf] %vm2654, %v2575
        %2670 = vst.msk [vmem:[#allocation2 + $0x3c] sm:$0xf] %vm2654, %v2577
        %2671 = vst.msk [vmem:[#allocation2 + $0x40] sm:$0xf] %vm2654, %v2579
        %2672 = vst.msk [vmem:[#allocation2 + $0x44] sm:$0xf] %vm2654, %v2581
        %2673 = vst.msk [vmem:[#allocation2 + $0x48] sm:$0xf] %vm2654, %v2583
        %2674 = vst.msk [vmem:[#allocation2 + $0x4c] sm:$0xf] %vm2654, %v2585
        %2675 = vst.msk [vmem:[#allocation2 + $0x50] sm:$0xf] %vm2654, %v2587
        %2676 = vst.msk [vmem:[#allocation2 + $0x54] sm:$0xf] %vm2654, %v2589
        %2677 = vst.msk [vmem:[#allocation2 + $0x58] sm:$0xf] %vm2654, %v2591
        %2678 = vst.msk [vmem:[#allocation2 + $0x5c] sm:$0xf] %vm2654, %v2593
        %2679 = vst.msk [vmem:[#allocation2 + $0x60] sm:$0xf] %vm2654, %v2595
        %2680 = vst.msk [vmem:[#allocation2 + $0x64] sm:$0xf] %vm2654, %v2597
        %2681 = vst.msk [vmem:[#allocation2 + $0x68] sm:$0xf] %vm2654, %v2599
        %2682 = vst.msk [vmem:[#allocation2 + $0x6c] sm:$0xf] %vm2654, %v2601
        %2683 = vst.msk [vmem:[#allocation2 + $0x70] sm:$0xf] %vm2654, %v2603
        %2684 = vst.msk [vmem:[#allocation2 + $0x74] sm:$0xf] %vm2654, %v2605
        %2685 = vst.msk [vmem:[#allocation2 + $0x78] sm:$0xf] %vm2654, %v2607
        %2686 = vst.msk [vmem:[#allocation2 + $0x7c] sm:$0xf] %vm2654, %v2609
        %2687 = vst.msk [vmem:[#allocation2 + $0x80] sm:$0xf] %vm2654, %v2611
        %2688 = vst.msk [vmem:[#allocation2 + $0x84] sm:$0xf] %vm2654, %v2613
        %2689 = vst.msk [vmem:[#allocation2 + $0x88] sm:$0xf] %vm2654, %v2615
        %2690 = vst.msk [vmem:[#allocation2 + $0x8c] sm:$0xf] %vm2654, %v2617
        %v2691 = vld [vmem:[%s196 + $0x10] sm:$0xc]
        %v2692 = vld [vmem:[%s196 + $0x14] sm:$0xf]
        %v2693 = vld [vmem:[%s196 + $0x18] sm:$0xf]
        %v2694 = vld [vmem:[%s196 + $0x1c] sm:$0xf]
        %v2695 = vld [vmem:[%s196 + $0x20] sm:$0xf]
        %v2696 = vld [vmem:[%s196 + $0x24] sm:$0xf]
        %v2697 = vld [vmem:[%s196 + $0x28] sm:$0xf]
        %v2698 = vld [vmem:[%s196 + $0x2c] sm:$0xf]
        %v2699 = vld [vmem:[%s196 + $0x30] sm:$0xf]
        %v2700 = vld [vmem:[%s196 + $0x34] sm:$0xf]
        %v2701 = vld [vmem:[%s196 + $0x38] sm:$0xf]
        %v2702 = vld [vmem:[%s196 + $0x3c] sm:$0xf]
        %v2703 = vld [vmem:[%s196 + $0x40] sm:$0xf]
        %v2704 = vld [vmem:[%s196 + $0x44] sm:$0xf]
        %v2705 = vld [vmem:[%s196 + $0x48] sm:$0xf]
        %v2706 = vld [vmem:[%s196 + $0x4c] sm:$0xf]
        %v2707 = vld [vmem:[%s196 + $0x50] sm:$0xf]
        %v2708 = vld [vmem:[%s196 + $0x54] sm:$0xf]
        %v2709 = vld [vmem:[%s196 + $0x58] sm:$0xf]
        %v2710 = vld [vmem:[%s196 + $0x5c] sm:$0xf]
        %v2711 = vld [vmem:[%s196 + $0x60] sm:$0xf]
        %v2712 = vld [vmem:[%s196 + $0x64] sm:$0xf]
        %v2713 = vld [vmem:[%s196 + $0x68] sm:$0xf]
        %v2714 = vld [vmem:[%s196 + $0x6c] sm:$0xf]
        %v2715 = vld [vmem:[%s196 + $0x70] sm:$0xf]
        %v2716 = vld [vmem:[%s196 + $0x74] sm:$0xf]
        %v2717 = vld [vmem:[%s196 + $0x78] sm:$0xf]
        %v2718 = vld [vmem:[%s196 + $0x7c] sm:$0xf]
        %v2719 = vld [vmem:[%s196 + $0x80] sm:$0xf]
        %v2720 = vld [vmem:[%s196 + $0x84] sm:$0xf]
        %v2721 = vld [vmem:[%s196 + $0x88] sm:$0xf]
        %v2722 = vld [vmem:[%s196 + $0x8c] sm:$0xf]
        %v2723 = vld [vmem:[%s196 + $0x90] sm:$0xf]
        %v2724 = vld [vmem:[%s196 + $0x94] sm:$0xf]
        %v2725 = vld [vmem:[%s196 + $0x98] sm:$0xf]
        %v2726 = vld [vmem:[%s196 + $0x9c] sm:$0xf]
        %v2727 = vld [vmem:[%s196 + $0xa0] sm:$0x7]
        %vm2728 = vsmask.f32 1280
        %vm2729 = vsmask.f32 5392
        %vm2730 = vmor %vm2728, %vm2729
        %v2732 = vshrl.u32 %v2691, 16
        %v2734 = vrot.slane %v2732, 6
        %v2735 = vshll.u32 %v2691, 16
        %v2737 = vrot.slane %v2735, 7
        %v2738 = vor.u32 %v2734, %v2737
        %v2739 = vrot.slane %v2738, 4
        %v2741 = vshrl.u32 %v2692, 16
        %v2743 = vrot.slane %v2741, 6
        %v2744 = vshll.u32 %v2692, 16
        %v2746 = vrot.slane %v2744, 7
        %v2747 = vor.u32 %v2743, %v2746
        %v2748 = vsel %vm2730, %v2739, %v2747
        %v2749 = vrot.slane %v2747, 4
        %v2751 = vshrl.u32 %v2693, 16
        %v2753 = vrot.slane %v2751, 6
        %v2754 = vshll.u32 %v2693, 16
        %v2756 = vrot.slane %v2754, 7
        %v2757 = vor.u32 %v2753, %v2756
        %v2758 = vsel %vm2730, %v2749, %v2757
        %v2759 = vrot.slane %v2757, 4
        %v2761 = vshrl.u32 %v2694, 16
        %v2763 = vrot.slane %v2761, 6
        %v2764 = vshll.u32 %v2694, 16
        %v2766 = vrot.slane %v2764, 7
        %v2767 = vor.u32 %v2763, %v2766
        %v2768 = vsel %vm2730, %v2759, %v2767
        %v2769 = vrot.slane %v2767, 4
        %v2771 = vshrl.u32 %v2695, 16
        %v2773 = vrot.slane %v2771, 6
        %v2774 = vshll.u32 %v2695, 16
        %v2776 = vrot.slane %v2774, 7
        %v2777 = vor.u32 %v2773, %v2776
        %v2778 = vsel %vm2730, %v2769, %v2777
        %v2779 = vrot.slane %v2777, 4
        %v2781 = vshrl.u32 %v2696, 16
        %v2783 = vrot.slane %v2781, 6
        %v2784 = vshll.u32 %v2696, 16
        %v2786 = vrot.slane %v2784, 7
        %v2787 = vor.u32 %v2783, %v2786
        %v2788 = vsel %vm2730, %v2779, %v2787
        %v2789 = vrot.slane %v2787, 4
        %v2791 = vshrl.u32 %v2697, 16
        %v2793 = vrot.slane %v2791, 6
        %v2794 = vshll.u32 %v2697, 16
        %v2796 = vrot.slane %v2794, 7
        %v2797 = vor.u32 %v2793, %v2796
        %v2798 = vsel %vm2730, %v2789, %v2797
        %v2799 = vrot.slane %v2797, 4
        %v2801 = vshrl.u32 %v2698, 16
        %v2803 = vrot.slane %v2801, 6
        %v2804 = vshll.u32 %v2698, 16
        %v2806 = vrot.slane %v2804, 7
        %v2807 = vor.u32 %v2803, %v2806
        %v2808 = vsel %vm2730, %v2799, %v2807
        %v2809 = vrot.slane %v2807, 4
        %v2811 = vshrl.u32 %v2699, 16
        %v2813 = vrot.slane %v2811, 6
        %v2814 = vshll.u32 %v2699, 16
        %v2816 = vrot.slane %v2814, 7
        %v2817 = vor.u32 %v2813, %v2816
        %v2818 = vsel %vm2730, %v2809, %v2817
        %v2819 = vrot.slane %v2817, 4
        %v2821 = vshrl.u32 %v2700, 16
        %v2823 = vrot.slane %v2821, 6
        %v2824 = vshll.u32 %v2700, 16
        %v2826 = vrot.slane %v2824, 7
        %v2827 = vor.u32 %v2823, %v2826
        %v2828 = vsel %vm2730, %v2819, %v2827
        %v2829 = vrot.slane %v2827, 4
        %v2831 = vshrl.u32 %v2701, 16
        %v2833 = vrot.slane %v2831, 6
        %v2834 = vshll.u32 %v2701, 16
        %v2836 = vrot.slane %v2834, 7
        %v2837 = vor.u32 %v2833, %v2836
        %v2838 = vsel %vm2730, %v2829, %v2837
        %v2839 = vrot.slane %v2837, 4
        %v2841 = vshrl.u32 %v2702, 16
        %v2843 = vrot.slane %v2841, 6
        %v2844 = vshll.u32 %v2702, 16
        %v2846 = vrot.slane %v2844, 7
        %v2847 = vor.u32 %v2843, %v2846
        %v2848 = vsel %vm2730, %v2839, %v2847
        %v2849 = vrot.slane %v2847, 4
        %v2851 = vshrl.u32 %v2703, 16
        %v2853 = vrot.slane %v2851, 6
        %v2854 = vshll.u32 %v2703, 16
        %v2856 = vrot.slane %v2854, 7
        %v2857 = vor.u32 %v2853, %v2856
        %v2858 = vsel %vm2730, %v2849, %v2857
        %v2859 = vrot.slane %v2857, 4
        %v2861 = vshrl.u32 %v2704, 16
        %v2863 = vrot.slane %v2861, 6
        %v2864 = vshll.u32 %v2704, 16
        %v2866 = vrot.slane %v2864, 7
        %v2867 = vor.u32 %v2863, %v2866
        %v2868 = vsel %vm2730, %v2859, %v2867
        %v2869 = vrot.slane %v2867, 4
        %v2871 = vshrl.u32 %v2705, 16
        %v2873 = vrot.slane %v2871, 6
        %v2874 = vshll.u32 %v2705, 16
        %v2876 = vrot.slane %v2874, 7
        %v2877 = vor.u32 %v2873, %v2876
        %v2878 = vsel %vm2730, %v2869, %v2877
        %v2879 = vrot.slane %v2877, 4
        %v2881 = vshrl.u32 %v2706, 16
        %v2883 = vrot.slane %v2881, 6
        %v2884 = vshll.u32 %v2706, 16
        %v2886 = vrot.slane %v2884, 7
        %v2887 = vor.u32 %v2883, %v2886
        %v2888 = vsel %vm2730, %v2879, %v2887
        %v2889 = vrot.slane %v2887, 4
        %v2891 = vshrl.u32 %v2707, 16
        %v2893 = vrot.slane %v2891, 6
        %v2894 = vshll.u32 %v2707, 16
        %v2896 = vrot.slane %v2894, 7
        %v2897 = vor.u32 %v2893, %v2896
        %v2898 = vsel %vm2730, %v2889, %v2897
        %v2899 = vrot.slane %v2897, 4
        %v2901 = vshrl.u32 %v2708, 16
        %v2903 = vrot.slane %v2901, 6
        %v2904 = vshll.u32 %v2708, 16
        %v2906 = vrot.slane %v2904, 7
        %v2907 = vor.u32 %v2903, %v2906
        %v2908 = vsel %vm2730, %v2899, %v2907
        %v2909 = vrot.slane %v2907, 4
        %v2911 = vshrl.u32 %v2709, 16
        %v2913 = vrot.slane %v2911, 6
        %v2914 = vshll.u32 %v2709, 16
        %v2916 = vrot.slane %v2914, 7
        %v2917 = vor.u32 %v2913, %v2916
        %v2918 = vsel %vm2730, %v2909, %v2917
        %v2919 = vrot.slane %v2917, 4
        %v2921 = vshrl.u32 %v2710, 16
        %v2923 = vrot.slane %v2921, 6
        %v2924 = vshll.u32 %v2710, 16
        %v2926 = vrot.slane %v2924, 7
        %v2927 = vor.u32 %v2923, %v2926
        %v2928 = vsel %vm2730, %v2919, %v2927
        %v2929 = vrot.slane %v2927, 4
        %v2931 = vshrl.u32 %v2711, 16
        %v2933 = vrot.slane %v2931, 6
        %v2934 = vshll.u32 %v2711, 16
        %v2936 = vrot.slane %v2934, 7
        %v2937 = vor.u32 %v2933, %v2936
        %v2938 = vsel %vm2730, %v2929, %v2937
        %v2939 = vrot.slane %v2937, 4
        %v2941 = vshrl.u32 %v2712, 16
        %v2943 = vrot.slane %v2941, 6
        %v2944 = vshll.u32 %v2712, 16
        %v2946 = vrot.slane %v2944, 7
        %v2947 = vor.u32 %v2943, %v2946
        %v2948 = vsel %vm2730, %v2939, %v2947
        %v2949 = vrot.slane %v2947, 4
        %v2951 = vshrl.u32 %v2713, 16
        %v2953 = vrot.slane %v2951, 6
        %v2954 = vshll.u32 %v2713, 16
        %v2956 = vrot.slane %v2954, 7
        %v2957 = vor.u32 %v2953, %v2956
        %v2958 = vsel %vm2730, %v2949, %v2957
        %v2959 = vrot.slane %v2957, 4
        %v2961 = vshrl.u32 %v2714, 16
        %v2963 = vrot.slane %v2961, 6
        %v2964 = vshll.u32 %v2714, 16
        %v2966 = vrot.slane %v2964, 7
        %v2967 = vor.u32 %v2963, %v2966
        %v2968 = vsel %vm2730, %v2959, %v2967
        %v2969 = vrot.slane %v2967, 4
        %v2971 = vshrl.u32 %v2715, 16
        %v2973 = vrot.slane %v2971, 6
        %v2974 = vshll.u32 %v2715, 16
        %v2976 = vrot.slane %v2974, 7
        %v2977 = vor.u32 %v2973, %v2976
        %v2978 = vsel %vm2730, %v2969, %v2977
        %v2979 = vrot.slane %v2977, 4
        %v2981 = vshrl.u32 %v2716, 16
        %v2983 = vrot.slane %v2981, 6
        %v2984 = vshll.u32 %v2716, 16
        %v2986 = vrot.slane %v2984, 7
        %v2987 = vor.u32 %v2983, %v2986
        %v2988 = vsel %vm2730, %v2979, %v2987
        %v2989 = vrot.slane %v2987, 4
        %v2991 = vshrl.u32 %v2717, 16
        %v2993 = vrot.slane %v2991, 6
        %v2994 = vshll.u32 %v2717, 16
        %v2996 = vrot.slane %v2994, 7
        %v2997 = vor.u32 %v2993, %v2996
        %v2998 = vsel %vm2730, %v2989, %v2997
        %v2999 = vrot.slane %v2997, 4
        %v3001 = vshrl.u32 %v2718, 16
        %v3003 = vrot.slane %v3001, 6
        %v3004 = vshll.u32 %v2718, 16
        %v3006 = vrot.slane %v3004, 7
        %v3007 = vor.u32 %v3003, %v3006
        %v3008 = vsel %vm2730, %v2999, %v3007
        %v3009 = vrot.slane %v3007, 4
        %v3011 = vshrl.u32 %v2719, 16
        %v3013 = vrot.slane %v3011, 6
        %v3014 = vshll.u32 %v2719, 16
        %v3016 = vrot.slane %v3014, 7
        %v3017 = vor.u32 %v3013, %v3016
        %v3018 = vsel %vm2730, %v3009, %v3017
        %v3019 = vrot.slane %v3017, 4
        %v3021 = vshrl.u32 %v2720, 16
        %v3023 = vrot.slane %v3021, 6
        %v3024 = vshll.u32 %v2720, 16
        %v3026 = vrot.slane %v3024, 7
        %v3027 = vor.u32 %v3023, %v3026
        %v3028 = vsel %vm2730, %v3019, %v3027
        %v3029 = vrot.slane %v3027, 4
        %v3031 = vshrl.u32 %v2721, 16
        %v3033 = vrot.slane %v3031, 6
        %v3034 = vshll.u32 %v2721, 16
        %v3036 = vrot.slane %v3034, 7
        %v3037 = vor.u32 %v3033, %v3036
        %v3038 = vsel %vm2730, %v3029, %v3037
        %v3039 = vrot.slane %v3037, 4
        %v3041 = vshrl.u32 %v2722, 16
        %v3043 = vrot.slane %v3041, 6
        %v3044 = vshll.u32 %v2722, 16
        %v3046 = vrot.slane %v3044, 7
        %v3047 = vor.u32 %v3043, %v3046
        %v3048 = vsel %vm2730, %v3039, %v3047
        %v3049 = vrot.slane %v3047, 4
        %v3051 = vshrl.u32 %v2723, 16
        %v3053 = vrot.slane %v3051, 6
        %v3054 = vshll.u32 %v2723, 16
        %v3056 = vrot.slane %v3054, 7
        %v3057 = vor.u32 %v3053, %v3056
        %v3058 = vsel %vm2730, %v3049, %v3057
        %v3059 = vrot.slane %v3057, 4
        %v3061 = vshrl.u32 %v2724, 16
        %v3063 = vrot.slane %v3061, 6
        %v3064 = vshll.u32 %v2724, 16
        %v3066 = vrot.slane %v3064, 7
        %v3067 = vor.u32 %v3063, %v3066
        %v3068 = vsel %vm2730, %v3059, %v3067
        %v3069 = vrot.slane %v3067, 4
        %v3071 = vshrl.u32 %v2725, 16
        %v3073 = vrot.slane %v3071, 6
        %v3074 = vshll.u32 %v2725, 16
        %v3076 = vrot.slane %v3074, 7
        %v3077 = vor.u32 %v3073, %v3076
        %v3078 = vsel %vm2730, %v3069, %v3077
        %v3079 = vrot.slane %v3077, 4
        %v3081 = vshrl.u32 %v2726, 16
        %v3083 = vrot.slane %v3081, 6
        %v3084 = vshll.u32 %v2726, 16
        %v3086 = vrot.slane %v3084, 7
        %v3087 = vor.u32 %v3083, %v3086
        %v3088 = vsel %vm2730, %v3079, %v3087
        %v3089 = vrot.slane %v3087, 4
        %v3091 = vshrl.u32 %v2727, 16
        %v3093 = vrot.slane %v3091, 6
        %v3094 = vshll.u32 %v2727, 16
        %v3096 = vrot.slane %v3094, 7
        %v3097 = vor.u32 %v3093, %v3096
        %v3098 = vsel %vm2730, %v3089, %v3097
        %3099 = vrot.lane.b32.xlu0 %v2748, 56
        %v3100 = vpop.permute.xlu0 %3099
        %3101 = vrot.lane.b32.xlu0 %v2758, 56
        %v3102 = vpop.permute.xlu0 %3101
        %3103 = vrot.lane.b32.xlu0 %v2768, 56
        %v3104 = vpop.permute.xlu0 %3103
        %3105 = vrot.lane.b32.xlu0 %v2778, 56
        %v3106 = vpop.permute.xlu0 %3105
        %3107 = vrot.lane.b32.xlu0 %v2788, 56
        %v3108 = vpop.permute.xlu0 %3107
        %3109 = vrot.lane.b32.xlu0 %v2798, 56
        %v3110 = vpop.permute.xlu0 %3109
        %3111 = vrot.lane.b32.xlu0 %v2808, 56
        %v3112 = vpop.permute.xlu0 %3111
        %3113 = vrot.lane.b32.xlu0 %v2818, 56
        %v3114 = vpop.permute.xlu0 %3113
        %3115 = vrot.lane.b32.xlu0 %v2828, 56
        %v3116 = vpop.permute.xlu0 %3115
        %3117 = vrot.lane.b32.xlu0 %v2838, 56
        %v3118 = vpop.permute.xlu0 %3117
        %3119 = vrot.lane.b32.xlu0 %v2848, 56
        %v3120 = vpop.permute.xlu0 %3119
        %3121 = vrot.lane.b32.xlu0 %v2858, 56
        %v3122 = vpop.permute.xlu0 %3121
        %3123 = vrot.lane.b32.xlu0 %v2868, 56
        %v3124 = vpop.permute.xlu0 %3123
        %3125 = vrot.lane.b32.xlu0 %v2878, 56
        %v3126 = vpop.permute.xlu0 %3125
        %3127 = vrot.lane.b32.xlu0 %v2888, 56
        %v3128 = vpop.permute.xlu0 %3127
        %3129 = vrot.lane.b32.xlu0 %v2898, 56
        %v3130 = vpop.permute.xlu0 %3129
        %3131 = vrot.lane.b32.xlu0 %v2908, 56
        %v3132 = vpop.permute.xlu0 %3131
        %3133 = vrot.lane.b32.xlu0 %v2918, 56
        %v3134 = vpop.permute.xlu0 %3133
        %3135 = vrot.lane.b32.xlu0 %v2928, 56
        %v3136 = vpop.permute.xlu0 %3135
        %3137 = vrot.lane.b32.xlu0 %v2938, 56
        %v3138 = vpop.permute.xlu0 %3137
        %3139 = vrot.lane.b32.xlu0 %v2948, 56
        %v3140 = vpop.permute.xlu0 %3139
        %3141 = vrot.lane.b32.xlu0 %v2958, 56
        %v3142 = vpop.permute.xlu0 %3141
        %3143 = vrot.lane.b32.xlu0 %v2968, 56
        %v3144 = vpop.permute.xlu0 %3143
        %3145 = vrot.lane.b32.xlu0 %v2978, 56
        %v3146 = vpop.permute.xlu0 %3145
        %3147 = vrot.lane.b32.xlu0 %v2988, 56
        %v3148 = vpop.permute.xlu0 %3147
        %3149 = vrot.lane.b32.xlu0 %v2998, 56
        %v3150 = vpop.permute.xlu0 %3149
        %3151 = vrot.lane.b32.xlu0 %v3008, 56
        %v3152 = vpop.permute.xlu0 %3151
        %3153 = vrot.lane.b32.xlu0 %v3018, 56
        %v3154 = vpop.permute.xlu0 %3153
        %3155 = vrot.lane.b32.xlu0 %v3028, 56
        %v3156 = vpop.permute.xlu0 %3155
        %3157 = vrot.lane.b32.xlu0 %v3038, 56
        %v3158 = vpop.permute.xlu0 %3157
        %3159 = vrot.lane.b32.xlu0 %v3048, 56
        %v3160 = vpop.permute.xlu0 %3159
        %3161 = vrot.lane.b32.xlu0 %v3058, 56
        %v3162 = vpop.permute.xlu0 %3161
        %3163 = vrot.lane.b32.xlu0 %v3068, 56
        %v3164 = vpop.permute.xlu0 %3163
        %3165 = vrot.lane.b32.xlu0 %v3078, 56
        %v3166 = vpop.permute.xlu0 %3165
        %3167 = vrot.lane.b32.xlu0 %v3088, 56
        %v3168 = vpop.permute.xlu0 %3167
        %3169 = vrot.lane.b32.xlu0 %v3098, 56
        %v3170 = vpop.permute.xlu0 %3169
        %vm3207 = vcmask 519616
        %3208 = vst.msk [vmem:[#allocation2] sm:$0xf] %vm3207, %v3100
        %3209 = vst.msk [vmem:[#allocation2 + $0x4] sm:$0xf] %vm3207, %v3102
        %3210 = vst.msk [vmem:[#allocation2 + $0x8] sm:$0xf] %vm3207, %v3104
        %3211 = vst.msk [vmem:[#allocation2 + $0xc] sm:$0xf] %vm3207, %v3106
        %3212 = vst.msk [vmem:[#allocation2 + $0x10] sm:$0xf] %vm3207, %v3108
        %3213 = vst.msk [vmem:[#allocation2 + $0x14] sm:$0xf] %vm3207, %v3110
        %3214 = vst.msk [vmem:[#allocation2 + $0x18] sm:$0xf] %vm3207, %v3112
        %3215 = vst.msk [vmem:[#allocation2 + $0x1c] sm:$0xf] %vm3207, %v3114
        %3216 = vst.msk [vmem:[#allocation2 + $0x20] sm:$0xf] %vm3207, %v3116
        %3217 = vst.msk [vmem:[#allocation2 + $0x24] sm:$0xf] %vm3207, %v3118
        %3218 = vst.msk [vmem:[#allocation2 + $0x28] sm:$0xf] %vm3207, %v3120
        %3219 = vst.msk [vmem:[#allocation2 + $0x2c] sm:$0xf] %vm3207, %v3122
        %3220 = vst.msk [vmem:[#allocation2 + $0x30] sm:$0xf] %vm3207, %v3124
        %3221 = vst.msk [vmem:[#allocation2 + $0x34] sm:$0xf] %vm3207, %v3126
        %3222 = vst.msk [vmem:[#allocation2 + $0x38] sm:$0xf] %vm3207, %v3128
        %3223 = vst.msk [vmem:[#allocation2 + $0x3c] sm:$0xf] %vm3207, %v3130
        %3224 = vst.msk [vmem:[#allocation2 + $0x40] sm:$0xf] %vm3207, %v3132
        %3225 = vst.msk [vmem:[#allocation2 + $0x44] sm:$0xf] %vm3207, %v3134
        %3226 = vst.msk [vmem:[#allocation2 + $0x48] sm:$0xf] %vm3207, %v3136
        %3227 = vst.msk [vmem:[#allocation2 + $0x4c] sm:$0xf] %vm3207, %v3138
        %3228 = vst.msk [vmem:[#allocation2 + $0x50] sm:$0xf] %vm3207, %v3140
        %3229 = vst.msk [vmem:[#allocation2 + $0x54] sm:$0xf] %vm3207, %v3142
        %3230 = vst.msk [vmem:[#allocation2 + $0x58] sm:$0xf] %vm3207, %v3144
        %3231 = vst.msk [vmem:[#allocation2 + $0x5c] sm:$0xf] %vm3207, %v3146
        %3232 = vst.msk [vmem:[#allocation2 + $0x60] sm:$0xf] %vm3207, %v3148
        %3233 = vst.msk [vmem:[#allocation2 + $0x64] sm:$0xf] %vm3207, %v3150
        %3234 = vst.msk [vmem:[#allocation2 + $0x68] sm:$0xf] %vm3207, %v3152
        %3235 = vst.msk [vmem:[#allocation2 + $0x6c] sm:$0xf] %vm3207, %v3154
        %3236 = vst.msk [vmem:[#allocation2 + $0x70] sm:$0xf] %vm3207, %v3156
        %3237 = vst.msk [vmem:[#allocation2 + $0x74] sm:$0xf] %vm3207, %v3158
        %3238 = vst.msk [vmem:[#allocation2 + $0x78] sm:$0xf] %vm3207, %v3160
        %3239 = vst.msk [vmem:[#allocation2 + $0x7c] sm:$0xf] %vm3207, %v3162
        %3240 = vst.msk [vmem:[#allocation2 + $0x80] sm:$0xf] %vm3207, %v3164
        %3241 = vst.msk [vmem:[#allocation2 + $0x84] sm:$0xf] %vm3207, %v3166
        %3242 = vst.msk [vmem:[#allocation2 + $0x88] sm:$0xf] %vm3207, %v3168
        %3243 = vst.msk [vmem:[#allocation2 + $0x8c] sm:$0xf] %vm3207, %v3170
        %v3244 = vld [vmem:[%s196 + $0x10] sm:$0x8]
        %v3245 = vld [vmem:[%s196 + $0x14] sm:$0xf]
        %v3246 = vld [vmem:[%s196 + $0x18] sm:$0xf]
        %v3247 = vld [vmem:[%s196 + $0x1c] sm:$0xf]
        %v3248 = vld [vmem:[%s196 + $0x20] sm:$0xf]
        %v3249 = vld [vmem:[%s196 + $0x24] sm:$0xf]
        %v3250 = vld [vmem:[%s196 + $0x28] sm:$0xf]
        %v3251 = vld [vmem:[%s196 + $0x2c] sm:$0xf]
        %v3252 = vld [vmem:[%s196 + $0x30] sm:$0xf]
        %v3253 = vld [vmem:[%s196 + $0x34] sm:$0xf]
        %v3254 = vld [vmem:[%s196 + $0x38] sm:$0xf]
        %v3255 = vld [vmem:[%s196 + $0x3c] sm:$0xf]
        %v3256 = vld [vmem:[%s196 + $0x40] sm:$0xf]
        %v3257 = vld [vmem:[%s196 + $0x44] sm:$0xf]
        %v3258 = vld [vmem:[%s196 + $0x48] sm:$0xf]
        %v3259 = vld [vmem:[%s196 + $0x4c] sm:$0xf]
        %v3260 = vld [vmem:[%s196 + $0x50] sm:$0xf]
        %v3261 = vld [vmem:[%s196 + $0x54] sm:$0xf]
        %v3262 = vld [vmem:[%s196 + $0x58] sm:$0xf]
        %v3263 = vld [vmem:[%s196 + $0x5c] sm:$0xf]
        %v3264 = vld [vmem:[%s196 + $0x60] sm:$0xf]
        %v3265 = vld [vmem:[%s196 + $0x64] sm:$0xf]
        %v3266 = vld [vmem:[%s196 + $0x68] sm:$0xf]
        %v3267 = vld [vmem:[%s196 + $0x6c] sm:$0xf]
        %v3268 = vld [vmem:[%s196 + $0x70] sm:$0xf]
        %v3269 = vld [vmem:[%s196 + $0x74] sm:$0xf]
        %v3270 = vld [vmem:[%s196 + $0x78] sm:$0xf]
        %v3271 = vld [vmem:[%s196 + $0x7c] sm:$0xf]
        %v3272 = vld [vmem:[%s196 + $0x80] sm:$0xf]
        %v3273 = vld [vmem:[%s196 + $0x84] sm:$0xf]
        %v3274 = vld [vmem:[%s196 + $0x88] sm:$0xf]
        %v3275 = vld [vmem:[%s196 + $0x8c] sm:$0xf]
        %v3276 = vld [vmem:[%s196 + $0x90] sm:$0xf]
        %v3277 = vld [vmem:[%s196 + $0x94] sm:$0xf]
        %v3278 = vld [vmem:[%s196 + $0x98] sm:$0xf]
        %v3279 = vld [vmem:[%s196 + $0x9c] sm:$0xf]
        %v3280 = vld [vmem:[%s196 + $0xa0] sm:$0x7]
        %vm3318 = vcmask 1040384
        %vm3319 = vcmask 1044484
        %vm3320 = vmor %vm3318, %vm3319
        %v3321 = vrot.slane %v3244, 7
        %v3322 = vrot.slane %v3321, 4
        %v3323 = vrot.slane %v3245, 7
        %v3324 = vsel %vm3320, %v3322, %v3323
        %v3325 = vrot.slane %v3323, 4
        %v3326 = vrot.slane %v3246, 7
        %v3327 = vsel %vm3320, %v3325, %v3326
        %v3328 = vrot.slane %v3326, 4
        %v3329 = vrot.slane %v3247, 7
        %v3330 = vsel %vm3320, %v3328, %v3329
        %v3331 = vrot.slane %v3329, 4
        %v3332 = vrot.slane %v3248, 7
        %v3333 = vsel %vm3320, %v3331, %v3332
        %v3334 = vrot.slane %v3332, 4
        %v3335 = vrot.slane %v3249, 7
        %v3336 = vsel %vm3320, %v3334, %v3335
        %v3337 = vrot.slane %v3335, 4
        %v3338 = vrot.slane %v3250, 7
        %v3339 = vsel %vm3320, %v3337, %v3338
        %v3340 = vrot.slane %v3338, 4
        %v3341 = vrot.slane %v3251, 7
        %v3342 = vsel %vm3320, %v3340, %v3341
        %v3343 = vrot.slane %v3341, 4
        %v3344 = vrot.slane %v3252, 7
        %v3345 = vsel %vm3320, %v3343, %v3344
        %v3346 = vrot.slane %v3344, 4
        %v3347 = vrot.slane %v3253, 7
        %v3348 = vsel %vm3320, %v3346, %v3347
        %v3349 = vrot.slane %v3347, 4
        %v3350 = vrot.slane %v3254, 7
        %v3351 = vsel %vm3320, %v3349, %v3350
        %v3352 = vrot.slane %v3350, 4
        %v3353 = vrot.slane %v3255, 7
        %v3354 = vsel %vm3320, %v3352, %v3353
        %v3355 = vrot.slane %v3353, 4
        %v3356 = vrot.slane %v3256, 7
        %v3357 = vsel %vm3320, %v3355, %v3356
        %v3358 = vrot.slane %v3356, 4
        %v3359 = vrot.slane %v3257, 7
        %v3360 = vsel %vm3320, %v3358, %v3359
        %v3361 = vrot.slane %v3359, 4
        %v3362 = vrot.slane %v3258, 7
        %v3363 = vsel %vm3320, %v3361, %v3362
        %v3364 = vrot.slane %v3362, 4
        %v3365 = vrot.slane %v3259, 7
        %v3366 = vsel %vm3320, %v3364, %v3365
        %v3367 = vrot.slane %v3365, 4
        %v3368 = vrot.slane %v3260, 7
        %v3369 = vsel %vm3320, %v3367, %v3368
        %v3370 = vrot.slane %v3368, 4
        %v3371 = vrot.slane %v3261, 7
        %v3372 = vsel %vm3320, %v3370, %v3371
        %v3373 = vrot.slane %v3371, 4
        %v3374 = vrot.slane %v3262, 7
        %v3375 = vsel %vm3320, %v3373, %v3374
        %v3376 = vrot.slane %v3374, 4
        %v3377 = vrot.slane %v3263, 7
        %v3378 = vsel %vm3320, %v3376, %v3377
        %v3379 = vrot.slane %v3377, 4
        %v3380 = vrot.slane %v3264, 7
        %v3381 = vsel %vm3320, %v3379, %v3380
        %v3382 = vrot.slane %v3380, 4
        %v3383 = vrot.slane %v3265, 7
        %v3384 = vsel %vm3320, %v3382, %v3383
        %v3385 = vrot.slane %v3383, 4
        %v3386 = vrot.slane %v3266, 7
        %v3387 = vsel %vm3320, %v3385, %v3386
        %v3388 = vrot.slane %v3386, 4
        %v3389 = vrot.slane %v3267, 7
        %v3390 = vsel %vm3320, %v3388, %v3389
        %v3391 = vrot.slane %v3389, 4
        %v3392 = vrot.slane %v3268, 7
        %v3393 = vsel %vm3320, %v3391, %v3392
        %v3394 = vrot.slane %v3392, 4
        %v3395 = vrot.slane %v3269, 7
        %v3396 = vsel %vm3320, %v3394, %v3395
        %v3397 = vrot.slane %v3395, 4
        %v3398 = vrot.slane %v3270, 7
        %v3399 = vsel %vm3320, %v3397, %v3398
        %v3400 = vrot.slane %v3398, 4
        %v3401 = vrot.slane %v3271, 7
        %v3402 = vsel %vm3320, %v3400, %v3401
        %v3403 = vrot.slane %v3401, 4
        %v3404 = vrot.slane %v3272, 7
        %v3405 = vsel %vm3320, %v3403, %v3404
        %v3406 = vrot.slane %v3404, 4
        %v3407 = vrot.slane %v3273, 7
        %v3408 = vsel %vm3320, %v3406, %v3407
        %v3409 = vrot.slane %v3407, 4
        %v3410 = vrot.slane %v3274, 7
        %v3411 = vsel %vm3320, %v3409, %v3410
        %v3412 = vrot.slane %v3410, 4
        %v3413 = vrot.slane %v3275, 7
        %v3414 = vsel %vm3320, %v3412, %v3413
        %v3415 = vrot.slane %v3413, 4
        %v3416 = vrot.slane %v3276, 7
        %v3417 = vsel %vm3320, %v3415, %v3416
        %v3418 = vrot.slane %v3416, 4
        %v3419 = vrot.slane %v3277, 7
        %v3420 = vsel %vm3320, %v3418, %v3419
        %v3421 = vrot.slane %v3419, 4
        %v3422 = vrot.slane %v3278, 7
        %v3423 = vsel %vm3320, %v3421, %v3422
        %v3424 = vrot.slane %v3422, 4
        %v3425 = vrot.slane %v3279, 7
        %v3426 = vsel %vm3320, %v3424, %v3425
        %v3427 = vrot.slane %v3425, 4
        %v3428 = vrot.slane %v3280, 7
        %v3429 = vsel %vm3320, %v3427, %v3428
        %3430 = vrot.lane.b32.xlu0 %v3324, 64
        %v3431 = vpop.permute.xlu0 %3430
        %3432 = vrot.lane.b32.xlu0 %v3327, 64
        %v3433 = vpop.permute.xlu0 %3432
        %3434 = vrot.lane.b32.xlu0 %v3330, 64
        %v3435 = vpop.permute.xlu0 %3434
        %3436 = vrot.lane.b32.xlu0 %v3333, 64
        %v3437 = vpop.permute.xlu0 %3436
        %3438 = vrot.lane.b32.xlu0 %v3336, 64
        %v3439 = vpop.permute.xlu0 %3438
        %3440 = vrot.lane.b32.xlu0 %v3339, 64
        %v3441 = vpop.permute.xlu0 %3440
        %3442 = vrot.lane.b32.xlu0 %v3342, 64
        %v3443 = vpop.permute.xlu0 %3442
        %3444 = vrot.lane.b32.xlu0 %v3345, 64
        %v3445 = vpop.permute.xlu0 %3444
        %3446 = vrot.lane.b32.xlu0 %v3348, 64
        %v3447 = vpop.permute.xlu0 %3446
        %3448 = vrot.lane.b32.xlu0 %v3351, 64
        %v3449 = vpop.permute.xlu0 %3448
        %3450 = vrot.lane.b32.xlu0 %v3354, 64
        %v3451 = vpop.permute.xlu0 %3450
        %3452 = vrot.lane.b32.xlu0 %v3357, 64
        %v3453 = vpop.permute.xlu0 %3452
        %3454 = vrot.lane.b32.xlu0 %v3360, 64
        %v3455 = vpop.permute.xlu0 %3454
        %3456 = vrot.lane.b32.xlu0 %v3363, 64
        %v3457 = vpop.permute.xlu0 %3456
        %3458 = vrot.lane.b32.xlu0 %v3366, 64
        %v3459 = vpop.permute.xlu0 %3458
        %3460 = vrot.lane.b32.xlu0 %v3369, 64
        %v3461 = vpop.permute.xlu0 %3460
        %3462 = vrot.lane.b32.xlu0 %v3372, 64
        %v3463 = vpop.permute.xlu0 %3462
        %3464 = vrot.lane.b32.xlu0 %v3375, 64
        %v3465 = vpop.permute.xlu0 %3464
        %3466 = vrot.lane.b32.xlu0 %v3378, 64
        %v3467 = vpop.permute.xlu0 %3466
        %3468 = vrot.lane.b32.xlu0 %v3381, 64
        %v3469 = vpop.permute.xlu0 %3468
        %3470 = vrot.lane.b32.xlu0 %v3384, 64
        %v3471 = vpop.permute.xlu0 %3470
        %3472 = vrot.lane.b32.xlu0 %v3387, 64
        %v3473 = vpop.permute.xlu0 %3472
        %3474 = vrot.lane.b32.xlu0 %v3390, 64
        %v3475 = vpop.permute.xlu0 %3474
        %3476 = vrot.lane.b32.xlu0 %v3393, 64
        %v3477 = vpop.permute.xlu0 %3476
        %3478 = vrot.lane.b32.xlu0 %v3396, 64
        %v3479 = vpop.permute.xlu0 %3478
        %3480 = vrot.lane.b32.xlu0 %v3399, 64
        %v3481 = vpop.permute.xlu0 %3480
        %3482 = vrot.lane.b32.xlu0 %v3402, 64
        %v3483 = vpop.permute.xlu0 %3482
        %3484 = vrot.lane.b32.xlu0 %v3405, 64
        %v3485 = vpop.permute.xlu0 %3484
        %3486 = vrot.lane.b32.xlu0 %v3408, 64
        %v3487 = vpop.permute.xlu0 %3486
        %3488 = vrot.lane.b32.xlu0 %v3411, 64
        %v3489 = vpop.permute.xlu0 %3488
        %3490 = vrot.lane.b32.xlu0 %v3414, 64
        %v3491 = vpop.permute.xlu0 %3490
        %3492 = vrot.lane.b32.xlu0 %v3417, 64
        %v3493 = vpop.permute.xlu0 %3492
        %3494 = vrot.lane.b32.xlu0 %v3420, 64
        %v3495 = vpop.permute.xlu0 %3494
        %3496 = vrot.lane.b32.xlu0 %v3423, 64
        %v3497 = vpop.permute.xlu0 %3496
        %3498 = vrot.lane.b32.xlu0 %v3426, 64
        %v3499 = vpop.permute.xlu0 %3498
        %3500 = vrot.lane.b32.xlu0 %v3429, 64
        %v3501 = vpop.permute.xlu0 %3500
        %vm3538 = vcmask 585216
        %3539 = vst.msk [vmem:[#allocation2] sm:$0xf] %vm3538, %v3431
        %3540 = vst.msk [vmem:[#allocation2 + $0x4] sm:$0xf] %vm3538, %v3433
        %3541 = vst.msk [vmem:[#allocation2 + $0x8] sm:$0xf] %vm3538, %v3435
        %3542 = vst.msk [vmem:[#allocation2 + $0xc] sm:$0xf] %vm3538, %v3437
        %3543 = vst.msk [vmem:[#allocation2 + $0x10] sm:$0xf] %vm3538, %v3439
        %3544 = vst.msk [vmem:[#allocation2 + $0x14] sm:$0xf] %vm3538, %v3441
        %3545 = vst.msk [vmem:[#allocation2 + $0x18] sm:$0xf] %vm3538, %v3443
        %3546 = vst.msk [vmem:[#allocation2 + $0x1c] sm:$0xf] %vm3538, %v3445
        %3547 = vst.msk [vmem:[#allocation2 + $0x20] sm:$0xf] %vm3538, %v3447
        %3548 = vst.msk [vmem:[#allocation2 + $0x24] sm:$0xf] %vm3538, %v3449
        %3549 = vst.msk [vmem:[#allocation2 + $0x28] sm:$0xf] %vm3538, %v3451
        %3550 = vst.msk [vmem:[#allocation2 + $0x2c] sm:$0xf] %vm3538, %v3453
        %3551 = vst.msk [vmem:[#allocation2 + $0x30] sm:$0xf] %vm3538, %v3455
        %3552 = vst.msk [vmem:[#allocation2 + $0x34] sm:$0xf] %vm3538, %v3457
        %3553 = vst.msk [vmem:[#allocation2 + $0x38] sm:$0xf] %vm3538, %v3459
        %3554 = vst.msk [vmem:[#allocation2 + $0x3c] sm:$0xf] %vm3538, %v3461
        %3555 = vst.msk [vmem:[#allocation2 + $0x40] sm:$0xf] %vm3538, %v3463
        %3556 = vst.msk [vmem:[#allocation2 + $0x44] sm:$0xf] %vm3538, %v3465
        %3557 = vst.msk [vmem:[#allocation2 + $0x48] sm:$0xf] %vm3538, %v3467
        %3558 = vst.msk [vmem:[#allocation2 + $0x4c] sm:$0xf] %vm3538, %v3469
        %3559 = vst.msk [vmem:[#allocation2 + $0x50] sm:$0xf] %vm3538, %v3471
        %3560 = vst.msk [vmem:[#allocation2 + $0x54] sm:$0xf] %vm3538, %v3473
        %3561 = vst.msk [vmem:[#allocation2 + $0x58] sm:$0xf] %vm3538, %v3475
        %3562 = vst.msk [vmem:[#allocation2 + $0x5c] sm:$0xf] %vm3538, %v3477
        %3563 = vst.msk [vmem:[#allocation2 + $0x60] sm:$0xf] %vm3538, %v3479
        %3564 = vst.msk [vmem:[#allocation2 + $0x64] sm:$0xf] %vm3538, %v3481
        %3565 = vst.msk [vmem:[#allocation2 + $0x68] sm:$0xf] %vm3538, %v3483
        %3566 = vst.msk [vmem:[#allocation2 + $0x6c] sm:$0xf] %vm3538, %v3485
        %3567 = vst.msk [vmem:[#allocation2 + $0x70] sm:$0xf] %vm3538, %v3487
        %3568 = vst.msk [vmem:[#allocation2 + $0x74] sm:$0xf] %vm3538, %v3489
        %3569 = vst.msk [vmem:[#allocation2 + $0x78] sm:$0xf] %vm3538, %v3491
        %3570 = vst.msk [vmem:[#allocation2 + $0x7c] sm:$0xf] %vm3538, %v3493
        %3571 = vst.msk [vmem:[#allocation2 + $0x80] sm:$0xf] %vm3538, %v3495
        %3572 = vst.msk [vmem:[#allocation2 + $0x84] sm:$0xf] %vm3538, %v3497
        %3573 = vst.msk [vmem:[#allocation2 + $0x88] sm:$0xf] %vm3538, %v3499
        %3574 = vst.msk [vmem:[#allocation2 + $0x8c] sm:$0xf] %vm3538, %v3501
        %v3575 = vld [vmem:[#allocation2] sm:$0xf]
        %v3576 = vld [vmem:[#allocation2 + $0x4] sm:$0xf]
        %v3577 = vld [vmem:[#allocation2 + $0x8] sm:$0xf]
        %v3578 = vld [vmem:[#allocation2 + $0xc] sm:$0xf]
        %v3579 = vld [vmem:[#allocation2 + $0x10] sm:$0xf]
        %v3580 = vld [vmem:[#allocation2 + $0x14] sm:$0xf]
        %v3581 = vld [vmem:[#allocation2 + $0x18] sm:$0xf]
        %v3582 = vld [vmem:[#allocation2 + $0x1c] sm:$0xf]
        %v3583 = vld [vmem:[#allocation2 + $0x20] sm:$0xf]
        %v3584 = vld [vmem:[#allocation2 + $0x24] sm:$0xf]
        %v3585 = vld [vmem:[#allocation2 + $0x28] sm:$0xf]
        %v3586 = vld [vmem:[#allocation2 + $0x2c] sm:$0xf]
        %v3587 = vld [vmem:[#allocation2 + $0x30] sm:$0xf]
        %v3588 = vld [vmem:[#allocation2 + $0x34] sm:$0xf]
        %v3589 = vld [vmem:[#allocation2 + $0x38] sm:$0xf]
        %v3590 = vld [vmem:[#allocation2 + $0x3c] sm:$0xf]
        %v3591 = vld [vmem:[#allocation2 + $0x40] sm:$0xf]
        %v3592 = vld [vmem:[#allocation2 + $0x44] sm:$0xf]
        %v3593 = vld [vmem:[#allocation2 + $0x48] sm:$0xf]
        %v3594 = vld [vmem:[#allocation2 + $0x4c] sm:$0xf]
        %v3595 = vld [vmem:[#allocation2 + $0x50] sm:$0xf]
        %v3596 = vld [vmem:[#allocation2 + $0x54] sm:$0xf]
        %v3597 = vld [vmem:[#allocation2 + $0x58] sm:$0xf]
        %v3598 = vld [vmem:[#allocation2 + $0x5c] sm:$0xf]
        %v3599 = vld [vmem:[#allocation2 + $0x60] sm:$0xf]
        %v3600 = vld [vmem:[#allocation2 + $0x64] sm:$0xf]
        %v3601 = vld [vmem:[#allocation2 + $0x68] sm:$0xf]
        %v3602 = vld [vmem:[#allocation2 + $0x6c] sm:$0xf]
        %v3603 = vld [vmem:[#allocation2 + $0x70] sm:$0xf]
        %v3604 = vld [vmem:[#allocation2 + $0x74] sm:$0xf]
        %v3605 = vld [vmem:[#allocation2 + $0x78] sm:$0xf]
        %v3606 = vld [vmem:[#allocation2 + $0x7c] sm:$0xf]
        %v3607 = vld [vmem:[#allocation2 + $0x80] sm:$0xf]
        %v3608 = vld [vmem:[#allocation2 + $0x84] sm:$0xf]
        %v3609 = vld [vmem:[#allocation2 + $0x88] sm:$0xf]
        %v3610 = vld [vmem:[#allocation2 + $0x8c] sm:$0xf]
        %v3611 = vld [vmem:[%s1] sm:$0xf]
        %v3612 = vld [vmem:[%s1 + $0x4] sm:$0xf]
        %v3613 = vld [vmem:[%s1 + $0x8] sm:$0xf]
        %v3614 = vld [vmem:[%s1 + $0xc] sm:$0xf]
        %v3615 = vld [vmem:[%s1 + $0x10] sm:$0xf]
        %v3616 = vld [vmem:[%s1 + $0x14] sm:$0xf]
        %v3617 = vld [vmem:[%s1 + $0x18] sm:$0xf]
        %v3618 = vld [vmem:[%s1 + $0x1c] sm:$0xf]
        %v3619 = vld [vmem:[%s1 + $0x20] sm:$0xf]
        %v3620 = vld [vmem:[%s2] sm:$0x1]
        %v3622 = vlaneseq
        %v3623 = vshrl.u32 %v3622, 7
        %v3624 = vsub.s32 0, %v3623
        %v3625 = vrot.slane %v3620, %v3624
        %v3663 = vunpack.c.l.b16 %v3575
        %v3664 = vunpack.c.l.b16 %v3576
        %v3665 = vunpack.c.l.b16 %v3577
        %v3666 = vunpack.c.l.b16 %v3578
        %v3667 = vunpack.c.l.b16 %v3579
        %v3668 = vunpack.c.l.b16 %v3580
        %v3669 = vunpack.c.l.b16 %v3581
        %v3670 = vunpack.c.l.b16 %v3582
        %v3671 = vunpack.c.l.b16 %v3583
        %v3672 = vunpack.c.l.b16 %v3584
        %v3673 = vunpack.c.l.b16 %v3585
        %v3674 = vunpack.c.l.b16 %v3586
        %v3675 = vunpack.c.l.b16 %v3587
        %v3676 = vunpack.c.l.b16 %v3588
        %v3677 = vunpack.c.l.b16 %v3589
        %v3678 = vunpack.c.l.b16 %v3590
        %v3679 = vunpack.c.l.b16 %v3591
        %v3680 = vunpack.c.l.b16 %v3592
        %v3681 = vunpack.c.l.b16 %v3593
        %v3682 = vunpack.c.l.b16 %v3594
        %v3683 = vunpack.c.l.b16 %v3595
        %v3684 = vunpack.c.l.b16 %v3596
        %v3685 = vunpack.c.l.b16 %v3597
        %v3686 = vunpack.c.l.b16 %v3598
        %v3687 = vunpack.c.l.b16 %v3599
        %v3688 = vunpack.c.l.b16 %v3600
        %v3689 = vunpack.c.l.b16 %v3601
        %v3690 = vunpack.c.l.b16 %v3602
        %v3691 = vunpack.c.l.b16 %v3603
        %v3692 = vunpack.c.l.b16 %v3604
        %v3693 = vunpack.c.l.b16 %v3605
        %v3694 = vunpack.c.l.b16 %v3606
        %v3695 = vunpack.c.l.b16 %v3607
        %v3696 = vunpack.c.l.b16 %v3608
        %v3697 = vunpack.c.l.b16 %v3609
        %v3698 = vunpack.c.l.b16 %v3610
        %v3699 = vpack.c.b16 %v3664, %v3663
        %v3700 = vpack.c.b16 %v3666, %v3665
        %v3701 = vpack.c.b16 %v3668, %v3667
        %v3702 = vpack.c.b16 %v3670, %v3669
        %v3703 = vpack.c.b16 %v3672, %v3671
        %v3704 = vpack.c.b16 %v3674, %v3673
        %v3705 = vpack.c.b16 %v3676, %v3675
        %v3706 = vpack.c.b16 %v3678, %v3677
        %v3707 = vpack.c.b16 %v3680, %v3679
        %v3708 = vpack.c.b16 %v3682, %v3681
        %v3709 = vpack.c.b16 %v3684, %v3683
        %v3710 = vpack.c.b16 %v3686, %v3685
        %v3711 = vpack.c.b16 %v3688, %v3687
        %v3712 = vpack.c.b16 %v3690, %v3689
        %v3713 = vpack.c.b16 %v3692, %v3691
        %v3714 = vpack.c.b16 %v3694, %v3693
        %v3715 = vpack.c.b16 %v3696, %v3695
        %v3716 = vpack.c.b16 %v3698, %v3697
        %v3726 = vunpack.c.l.b16 %v3611
        %v3727 = vunpack.c.l.b16 %v3612
        %v3728 = vunpack.c.l.b16 %v3613
        %v3729 = vunpack.c.l.b16 %v3614
        %v3730 = vunpack.c.l.b16 %v3615
        %v3731 = vunpack.c.l.b16 %v3616
        %v3732 = vunpack.c.l.b16 %v3617
        %v3733 = vunpack.c.l.b16 %v3618
        %v3734 = vunpack.c.l.b16 %v3619
        %v3735 = vpack.c.b16 %v3727, %v3726
        %v3736 = vpack.c.b16 %v3729, %v3728
        %v3737 = vpack.c.b16 %v3731, %v3730
        %v3738 = vpack.c.b16 %v3733, %v3732
        %v3739 = vpack.c.b16 %v3734, %v3734
        %vm3744 = vcmask 588800
        %v3746 = vsel %vm3744, %v3699, 0
        %v3749 = vsel %vm3744, %v3700, 0
        %v3752 = vsel %vm3744, %v3701, 0
        %v3755 = vsel %vm3744, %v3702, 0
        %v3758 = vsel %vm3744, %v3703, 0
        %v3761 = vsel %vm3744, %v3704, 0
        %v3764 = vsel %vm3744, %v3705, 0
        %v3767 = vsel %vm3744, %v3706, 0
        %v3770 = vsel %vm3744, %v3707, 0
        %v3773 = vsel %vm3744, %v3708, 0
        %v3776 = vsel %vm3744, %v3709, 0
        %v3779 = vsel %vm3744, %v3710, 0
        %v3782 = vsel %vm3744, %v3711, 0
        %v3785 = vsel %vm3744, %v3712, 0
        %v3788 = vsel %vm3744, %v3713, 0
        %v3791 = vsel %vm3744, %v3714, 0
        %v3794 = vsel %vm3744, %v3715, 0
        %v3797 = vsel %vm3744, %v3716, 0
        %vm3799 = vcmask 1043456
        %v3801 = vsel %vm3799, %v3739, 0
        %3803 = vmatprep.subr.bf16.mxu0 0
        %3804 = vmatpush1.bf16.msra.mxu0 0
        %3805 = vmatprep.subr.bf16.mxu0 0
        %3806 = vmatpush1.bf16.msra.mxu0 0
        %3807 = vmatprep.subr.bf16.mxu0 0
        %3808 = vmatpush1.bf16.msra.mxu0 0
        %3809 = vmatprep.subr.bf16.mxu0 0
        %3810 = vmatpush1.bf16.msra.mxu0 %v3801
        %3811 = vmatprep.subr.bf16.mxu0 0
        %3812 = vmatpush1.bf16.msra.mxu0 %v3738
        %3813 = vmatprep.subr.bf16.mxu0 0
        %3814 = vmatpush1.bf16.msra.mxu0 %v3737
        %3815 = vmatprep.subr.bf16.mxu0 0
        %3816 = vmatpush1.bf16.msra.mxu0 %v3736
        %3817 = vmatprep.subr.bf16.mxu0 0
        %3818 = vmatpush1.bf16.msra.mxu0 %v3735
        %3819 = vmatprep.subr.bf16.mxu0 0
        %3820 = vmatpush2.bf16.msra.mxu0 0
        %3821 = vmatprep.subr.bf16.mxu0 0
        %3822 = vmatpush2.bf16.msra.mxu0 0
        %3823 = vmatprep.subr.bf16.mxu0 0
        %3824 = vmatpush2.bf16.msra.mxu0 0
        %3825 = vmatprep.subr.bf16.mxu0 0
        %3826 = vmatpush2.bf16.msra.mxu0 0
        %3827 = vmatprep.subr.bf16.mxu0 0
        %3828 = vmatpush2.bf16.msra.mxu0 0
        %3829 = vmatprep.subr.bf16.mxu0 0
        %3830 = vmatpush2.bf16.msra.mxu0 0
        %3831 = vmatprep.subr.bf16.mxu0 0
        %3832 = vmatpush2.bf16.msra.mxu0 0
        %3833 = vmatprep.subr.bf16.mxu0 0
        %3834 = vmatpush2.bf16.msra.mxu0 0
        %3835 = vmatprep.mubr.bf16.mxu0 0
        %3836 = vmatmul.mubr.bf16.gmra.mxu0 %v3746
        %v3837 = vpop.f32.mrf.mxu0
        %v3838 = vadd.f32 %v3625, %v3837
        %v3839 = vpop.f32.mrf.mxu0
        %v3840 = vpop.f32.mrf.mxu0
        %v3841 = vadd.f32 %v3625, %v3840
        %v3842 = vpop.f32.mrf.mxu0
        %3843 = vmatprep.mubr.bf16.mxu0 0
        %3844 = vmatmul.mubr.bf16.gmra.mxu0 %v3749
        %v3845 = vpop.f32.mrf.mxu0
        %v3846 = vadd.f32 %v3625, %v3845
        %v3847 = vpop.f32.mrf.mxu0
        %v3848 = vpop.f32.mrf.mxu0
        %v3849 = vadd.f32 %v3625, %v3848
        %v3850 = vpop.f32.mrf.mxu0
        %3851 = vmatprep.mubr.bf16.mxu0 0
        %3852 = vmatmul.mubr.bf16.gmra.mxu0 %v3752
        %v3853 = vpop.f32.mrf.mxu0
        %v3854 = vadd.f32 %v3625, %v3853
        %v3855 = vpop.f32.mrf.mxu0
        %v3856 = vpop.f32.mrf.mxu0
        %v3857 = vadd.f32 %v3625, %v3856
        %v3858 = vpop.f32.mrf.mxu0
        %3859 = vmatprep.mubr.bf16.mxu0 0
        %3860 = vmatmul.mubr.bf16.gmra.mxu0 %v3755
        %v3861 = vpop.f32.mrf.mxu0
        %v3862 = vadd.f32 %v3625, %v3861
        %v3863 = vpop.f32.mrf.mxu0
        %v3864 = vpop.f32.mrf.mxu0
        %v3865 = vadd.f32 %v3625, %v3864
        %v3866 = vpop.f32.mrf.mxu0
        %3867 = vmatprep.mubr.bf16.mxu0 0
        %3868 = vmatmul.mubr.bf16.gmra.mxu0 %v3758
        %v3869 = vpop.f32.mrf.mxu0
        %v3870 = vadd.f32 %v3625, %v3869
        %v3871 = vpop.f32.mrf.mxu0
        %v3872 = vpop.f32.mrf.mxu0
        %v3873 = vadd.f32 %v3625, %v3872
        %v3874 = vpop.f32.mrf.mxu0
        %3875 = vmatprep.mubr.bf16.mxu0 0
        %3876 = vmatmul.mubr.bf16.gmra.mxu0 %v3761
        %v3877 = vpop.f32.mrf.mxu0
        %v3878 = vadd.f32 %v3625, %v3877
        %v3879 = vpop.f32.mrf.mxu0
        %v3880 = vpop.f32.mrf.mxu0
        %v3881 = vadd.f32 %v3625, %v3880
        %v3882 = vpop.f32.mrf.mxu0
        %3883 = vmatprep.mubr.bf16.mxu0 0
        %3884 = vmatmul.mubr.bf16.gmra.mxu0 %v3764
        %v3885 = vpop.f32.mrf.mxu0
        %v3886 = vadd.f32 %v3625, %v3885
        %v3887 = vpop.f32.mrf.mxu0
        %v3888 = vpop.f32.mrf.mxu0
        %v3889 = vadd.f32 %v3625, %v3888
        %v3890 = vpop.f32.mrf.mxu0
        %3891 = vmatprep.mubr.bf16.mxu0 0
        %3892 = vmatmul.mubr.bf16.gmra.mxu0 %v3767
        %v3893 = vpop.f32.mrf.mxu0
        %v3894 = vadd.f32 %v3625, %v3893
        %v3895 = vpop.f32.mrf.mxu0
        %v3896 = vpop.f32.mrf.mxu0
        %v3897 = vadd.f32 %v3625, %v3896
        %v3898 = vpop.f32.mrf.mxu0
        %3899 = vmatprep.mubr.bf16.mxu0 0
        %3900 = vmatmul.mubr.bf16.gmra.mxu0 %v3770
        %v3901 = vpop.f32.mrf.mxu0
        %v3902 = vadd.f32 %v3625, %v3901
        %v3903 = vpop.f32.mrf.mxu0
        %v3904 = vpop.f32.mrf.mxu0
        %v3905 = vadd.f32 %v3625, %v3904
        %v3906 = vpop.f32.mrf.mxu0
        %3907 = vmatprep.mubr.bf16.mxu0 0
        %3908 = vmatmul.mubr.bf16.gmra.mxu0 %v3773
        %v3909 = vpop.f32.mrf.mxu0
        %v3910 = vadd.f32 %v3625, %v3909
        %v3911 = vpop.f32.mrf.mxu0
        %v3912 = vpop.f32.mrf.mxu0
        %v3913 = vadd.f32 %v3625, %v3912
        %v3914 = vpop.f32.mrf.mxu0
        %3915 = vmatprep.mubr.bf16.mxu0 0
        %3916 = vmatmul.mubr.bf16.gmra.mxu0 %v3776
        %v3917 = vpop.f32.mrf.mxu0
        %v3918 = vadd.f32 %v3625, %v3917
        %v3919 = vpop.f32.mrf.mxu0
        %v3920 = vpop.f32.mrf.mxu0
        %v3921 = vadd.f32 %v3625, %v3920
        %v3922 = vpop.f32.mrf.mxu0
        %3923 = vmatprep.mubr.bf16.mxu0 0
        %3924 = vmatmul.mubr.bf16.gmra.mxu0 %v3779
        %v3925 = vpop.f32.mrf.mxu0
        %v3926 = vadd.f32 %v3625, %v3925
        %v3927 = vpop.f32.mrf.mxu0
        %v3928 = vpop.f32.mrf.mxu0
        %v3929 = vadd.f32 %v3625, %v3928
        %v3930 = vpop.f32.mrf.mxu0
        %3931 = vmatprep.mubr.bf16.mxu0 0
        %3932 = vmatmul.mubr.bf16.gmra.mxu0 %v3782
        %v3933 = vpop.f32.mrf.mxu0
        %v3934 = vadd.f32 %v3625, %v3933
        %v3935 = vpop.f32.mrf.mxu0
        %v3936 = vpop.f32.mrf.mxu0
        %v3937 = vadd.f32 %v3625, %v3936
        %v3938 = vpop.f32.mrf.mxu0
        %3939 = vmatprep.mubr.bf16.mxu0 0
        %3940 = vmatmul.mubr.bf16.gmra.mxu0 %v3785
        %v3941 = vpop.f32.mrf.mxu0
        %v3942 = vadd.f32 %v3625, %v3941
        %v3943 = vpop.f32.mrf.mxu0
        %v3944 = vpop.f32.mrf.mxu0
        %v3945 = vadd.f32 %v3625, %v3944
        %v3946 = vpop.f32.mrf.mxu0
        %3947 = vmatprep.mubr.bf16.mxu0 0
        %3948 = vmatmul.mubr.bf16.gmra.mxu0 %v3788
        %v3949 = vpop.f32.mrf.mxu0
        %v3950 = vadd.f32 %v3625, %v3949
        %v3951 = vpop.f32.mrf.mxu0
        %v3952 = vpop.f32.mrf.mxu0
        %v3953 = vadd.f32 %v3625, %v3952
        %v3954 = vpop.f32.mrf.mxu0
        %3955 = vmatprep.mubr.bf16.mxu0 0
        %3956 = vmatmul.mubr.bf16.gmra.mxu0 %v3791
        %v3957 = vpop.f32.mrf.mxu0
        %v3958 = vadd.f32 %v3625, %v3957
        %v3959 = vpop.f32.mrf.mxu0
        %v3960 = vpop.f32.mrf.mxu0
        %v3961 = vadd.f32 %v3625, %v3960
        %v3962 = vpop.f32.mrf.mxu0
        %3963 = vmatprep.mubr.bf16.mxu0 0
        %3964 = vmatmul.mubr.bf16.gmra.mxu0 %v3794
        %v3965 = vpop.f32.mrf.mxu0
        %v3966 = vadd.f32 %v3625, %v3965
        %v3967 = vpop.f32.mrf.mxu0
        %v3968 = vpop.f32.mrf.mxu0
        %v3969 = vadd.f32 %v3625, %v3968
        %v3970 = vpop.f32.mrf.mxu0
        %3971 = vmatprep.mubr.bf16.mxu0 0
        %3972 = vmatmul.mubr.bf16.gmra.mxu0 %v3797
        %v3973 = vpop.f32.mrf.mxu0
        %v3974 = vadd.f32 %v3625, %v3973
        %v3975 = vpop.f32.mrf.mxu0
        %v3976 = vpop.f32.mrf.mxu0
        %v3977 = vadd.f32 %v3625, %v3976
        %v3978 = vpop.f32.mrf.mxu0
        %3979 = vdwg.mxu0
        %vm3980 = vcmp.ge.f32.partialorder %v3838, 0.0
        %vm3981 = vcmp.ge.f32.partialorder %v3841, 0.0
        %vm3982 = vcmp.ge.f32.partialorder %v3846, 0.0
        %vm3983 = vcmp.ge.f32.partialorder %v3849, 0.0
        %vm3984 = vcmp.ge.f32.partialorder %v3854, 0.0
        %vm3985 = vcmp.ge.f32.partialorder %v3857, 0.0
        %vm3986 = vcmp.ge.f32.partialorder %v3862, 0.0
        %vm3987 = vcmp.ge.f32.partialorder %v3865, 0.0
        %vm3988 = vcmp.ge.f32.partialorder %v3870, 0.0
        %vm3989 = vcmp.ge.f32.partialorder %v3873, 0.0
        %vm3990 = vcmp.ge.f32.partialorder %v3878, 0.0
        %vm3991 = vcmp.ge.f32.partialorder %v3881, 0.0
        %vm3992 = vcmp.ge.f32.partialorder %v3886, 0.0
        %vm3993 = vcmp.ge.f32.partialorder %v3889, 0.0
        %vm3994 = vcmp.ge.f32.partialorder %v3894, 0.0
        %vm3995 = vcmp.ge.f32.partialorder %v3897, 0.0
        %vm3996 = vcmp.ge.f32.partialorder %v3902, 0.0
        %vm3997 = vcmp.ge.f32.partialorder %v3905, 0.0
        %vm3998 = vcmp.ge.f32.partialorder %v3910, 0.0
        %vm3999 = vcmp.ge.f32.partialorder %v3913, 0.0
        %vm4000 = vcmp.ge.f32.partialorder %v3918, 0.0
        %vm4001 = vcmp.ge.f32.partialorder %v3921, 0.0
        %vm4002 = vcmp.ge.f32.partialorder %v3926, 0.0
        %vm4003 = vcmp.ge.f32.partialorder %v3929, 0.0
        %vm4004 = vcmp.ge.f32.partialorder %v3934, 0.0
        %vm4005 = vcmp.ge.f32.partialorder %v3937, 0.0
        %vm4006 = vcmp.ge.f32.partialorder %v3942, 0.0
        %vm4007 = vcmp.ge.f32.partialorder %v3945, 0.0
        %vm4008 = vcmp.ge.f32.partialorder %v3950, 0.0
        %vm4009 = vcmp.ge.f32.partialorder %v3953, 0.0
        %vm4010 = vcmp.ge.f32.partialorder %v3958, 0.0
        %vm4011 = vcmp.ge.f32.partialorder %v3961, 0.0
        %vm4012 = vcmp.ge.f32.partialorder %v3966, 0.0
        %vm4013 = vcmp.ge.f32.partialorder %v3969, 0.0
        %vm4014 = vcmp.ge.f32.partialorder %v3974, 0.0
        %vm4015 = vcmp.ge.f32.partialorder %v3977, 0.0
        %v4016 = vmul.f32 %v3838, 0.01
        %v4017 = vmul.f32 %v3841, 0.01
        %v4018 = vmul.f32 %v3846, 0.01
        %v4019 = vmul.f32 %v3849, 0.01
        %v4020 = vmul.f32 %v3854, 0.01
        %v4021 = vmul.f32 %v3857, 0.01
        %v4022 = vmul.f32 %v3862, 0.01
        %v4023 = vmul.f32 %v3865, 0.01
        %v4024 = vmul.f32 %v3870, 0.01
        %v4025 = vmul.f32 %v3873, 0.01
        %v4026 = vmul.f32 %v3878, 0.01
        %v4027 = vmul.f32 %v3881, 0.01
        %v4028 = vmul.f32 %v3886, 0.01
        %v4029 = vmul.f32 %v3889, 0.01
        %v4030 = vmul.f32 %v3894, 0.01
        %v4031 = vmul.f32 %v3897, 0.01
        %v4032 = vmul.f32 %v3902, 0.01
        %v4033 = vmul.f32 %v3905, 0.01
        %v4034 = vmul.f32 %v3910, 0.01
        %v4035 = vmul.f32 %v3913, 0.01
        %v4036 = vmul.f32 %v3918, 0.01
        %v4037 = vmul.f32 %v3921, 0.01
        %v4038 = vmul.f32 %v3926, 0.01
        %v4039 = vmul.f32 %v3929, 0.01
        %v4040 = vmul.f32 %v3934, 0.01
        %v4041 = vmul.f32 %v3937, 0.01
        %v4042 = vmul.f32 %v3942, 0.01
        %v4043 = vmul.f32 %v3945, 0.01
        %v4044 = vmul.f32 %v3950, 0.01
        %v4045 = vmul.f32 %v3953, 0.01
        %v4046 = vmul.f32 %v3958, 0.01
        %v4047 = vmul.f32 %v3961, 0.01
        %v4048 = vmul.f32 %v3966, 0.01
        %v4049 = vmul.f32 %v3969, 0.01
        %v4050 = vmul.f32 %v3974, 0.01
        %v4051 = vmul.f32 %v3977, 0.01
        %v4052 = vsel %vm3980, %v3838, %v4016
        %v4053 = vsel %vm3981, %v3841, %v4017
        %v4054 = vsel %vm3982, %v3846, %v4018
        %v4055 = vsel %vm3983, %v3849, %v4019
        %v4056 = vsel %vm3984, %v3854, %v4020
        %v4057 = vsel %vm3985, %v3857, %v4021
        %v4058 = vsel %vm3986, %v3862, %v4022
        %v4059 = vsel %vm3987, %v3865, %v4023
        %v4060 = vsel %vm3988, %v3870, %v4024
        %v4061 = vsel %vm3989, %v3873, %v4025
        %v4062 = vsel %vm3990, %v3878, %v4026
        %v4063 = vsel %vm3991, %v3881, %v4027
        %v4064 = vsel %vm3992, %v3886, %v4028
        %v4065 = vsel %vm3993, %v3889, %v4029
        %v4066 = vsel %vm3994, %v3894, %v4030
        %v4067 = vsel %vm3995, %v3897, %v4031
        %v4068 = vsel %vm3996, %v3902, %v4032
        %v4069 = vsel %vm3997, %v3905, %v4033
        %v4070 = vsel %vm3998, %v3910, %v4034
        %v4071 = vsel %vm3999, %v3913, %v4035
        %v4072 = vsel %vm4000, %v3918, %v4036
        %v4073 = vsel %vm4001, %v3921, %v4037
        %v4074 = vsel %vm4002, %v3926, %v4038
        %v4075 = vsel %vm4003, %v3929, %v4039
        %v4076 = vsel %vm4004, %v3934, %v4040
        %v4077 = vsel %vm4005, %v3937, %v4041
        %v4078 = vsel %vm4006, %v3942, %v4042
        %v4079 = vsel %vm4007, %v3945, %v4043
        %v4080 = vsel %vm4008, %v3950, %v4044
        %v4081 = vsel %vm4009, %v3953, %v4045
        %v4082 = vsel %vm4010, %v3958, %v4046
        %v4083 = vsel %vm4011, %v3961, %v4047
        %v4084 = vsel %vm4012, %v3966, %v4048
        %v4085 = vsel %vm4013, %v3969, %v4049
        %v4086 = vsel %vm4014, %v3974, %v4050
        %v4087 = vsel %vm4015, %v3977, %v4051
        %v4088 = vpack.c.bf16 %v4053, %v4052
        %v4089 = vpack.c.bf16 %v4055, %v4054
        %v4090 = vpack.c.bf16 %v4057, %v4056
        %v4091 = vpack.c.bf16 %v4059, %v4058
        %v4092 = vpack.c.bf16 %v4061, %v4060
        %v4093 = vpack.c.bf16 %v4063, %v4062
        %v4094 = vpack.c.bf16 %v4065, %v4064
        %v4095 = vpack.c.bf16 %v4067, %v4066
        %v4096 = vpack.c.bf16 %v4069, %v4068
        %v4097 = vpack.c.bf16 %v4071, %v4070
        %v4098 = vpack.c.bf16 %v4073, %v4072
        %v4099 = vpack.c.bf16 %v4075, %v4074
        %v4100 = vpack.c.bf16 %v4077, %v4076
        %v4101 = vpack.c.bf16 %v4079, %v4078
        %v4102 = vpack.c.bf16 %v4081, %v4080
        %v4103 = vpack.c.bf16 %v4083, %v4082
        %v4104 = vpack.c.bf16 %v4085, %v4084
        %v4105 = vpack.c.bf16 %v4087, %v4086
        %v4124 = vunpack.c.l.b16 %v4088
        %v4125 = vunpack.c.h.b16 %v4088
        %v4126 = vunpack.c.l.b16 %v4089
        %v4127 = vunpack.c.h.b16 %v4089
        %v4128 = vunpack.c.l.b16 %v4090
        %v4129 = vunpack.c.h.b16 %v4090
        %v4130 = vunpack.c.l.b16 %v4091
        %v4131 = vunpack.c.h.b16 %v4091
        %v4132 = vunpack.c.l.b16 %v4092
        %v4133 = vunpack.c.h.b16 %v4092
        %v4134 = vunpack.c.l.b16 %v4093
        %v4135 = vunpack.c.h.b16 %v4093
        %v4136 = vunpack.c.l.b16 %v4094
        %v4137 = vunpack.c.h.b16 %v4094
        %v4138 = vunpack.c.l.b16 %v4095
        %v4139 = vunpack.c.h.b16 %v4095
        %v4140 = vunpack.c.l.b16 %v4096
        %v4141 = vunpack.c.h.b16 %v4096
        %v4142 = vunpack.c.l.b16 %v4097
        %v4143 = vunpack.c.h.b16 %v4097
        %v4144 = vunpack.c.l.b16 %v4098
        %v4145 = vunpack.c.h.b16 %v4098
        %v4146 = vunpack.c.l.b16 %v4099
        %v4147 = vunpack.c.h.b16 %v4099
        %v4148 = vunpack.c.l.b16 %v4100
        %v4149 = vunpack.c.h.b16 %v4100
        %v4150 = vunpack.c.l.b16 %v4101
        %v4151 = vunpack.c.h.b16 %v4101
        %v4152 = vunpack.c.l.b16 %v4102
        %v4153 = vunpack.c.h.b16 %v4102
        %v4154 = vunpack.c.l.b16 %v4103
        %v4155 = vunpack.c.h.b16 %v4103
        %v4156 = vunpack.c.l.b16 %v4104
        %v4157 = vunpack.c.h.b16 %v4104
        %v4158 = vunpack.c.l.b16 %v4105
        %v4159 = vunpack.c.h.b16 %v4105
        %v4160 = vpack.c.b16 %v4124, %v4124
        %v4161 = vpack.c.b16 %v4125, %v4125
        %v4162 = vpack.c.b16 %v4126, %v4126
        %v4163 = vpack.c.b16 %v4127, %v4127
        %v4164 = vpack.c.b16 %v4128, %v4128
        %v4165 = vpack.c.b16 %v4129, %v4129
        %v4166 = vpack.c.b16 %v4130, %v4130
        %v4167 = vpack.c.b16 %v4131, %v4131
        %v4168 = vpack.c.b16 %v4132, %v4132
        %v4169 = vpack.c.b16 %v4133, %v4133
        %v4170 = vpack.c.b16 %v4134, %v4134
        %v4171 = vpack.c.b16 %v4135, %v4135
        %v4172 = vpack.c.b16 %v4136, %v4136
        %v4173 = vpack.c.b16 %v4137, %v4137
        %v4174 = vpack.c.b16 %v4138, %v4138
        %v4175 = vpack.c.b16 %v4139, %v4139
        %v4176 = vpack.c.b16 %v4140, %v4140
        %v4177 = vpack.c.b16 %v4141, %v4141
        %v4178 = vpack.c.b16 %v4142, %v4142
        %v4179 = vpack.c.b16 %v4143, %v4143
        %v4180 = vpack.c.b16 %v4144, %v4144
        %v4181 = vpack.c.b16 %v4145, %v4145
        %v4182 = vpack.c.b16 %v4146, %v4146
        %v4183 = vpack.c.b16 %v4147, %v4147
        %v4184 = vpack.c.b16 %v4148, %v4148
        %v4185 = vpack.c.b16 %v4149, %v4149
        %v4186 = vpack.c.b16 %v4150, %v4150
        %v4187 = vpack.c.b16 %v4151, %v4151
        %v4188 = vpack.c.b16 %v4152, %v4152
        %v4189 = vpack.c.b16 %v4153, %v4153
        %v4190 = vpack.c.b16 %v4154, %v4154
        %v4191 = vpack.c.b16 %v4155, %v4155
        %v4192 = vpack.c.b16 %v4156, %v4156
        %v4193 = vpack.c.b16 %v4157, %v4157
        %v4194 = vpack.c.b16 %v4158, %v4158
        %v4195 = vpack.c.b16 %v4159, %v4159
        %4232 = vst [vmem:[%s187] sm:$0xf] %v4160
        %4233 = vst [vmem:[%s187 + $0x4] sm:$0xf] %v4161
        %4234 = vst [vmem:[%s187 + $0x8] sm:$0xf] %v4162
        %4235 = vst [vmem:[%s187 + $0xc] sm:$0xf] %v4163
        %4236 = vst [vmem:[%s187 + $0x10] sm:$0xf] %v4164
        %4237 = vst [vmem:[%s187 + $0x14] sm:$0xf] %v4165
        %4238 = vst [vmem:[%s187 + $0x18] sm:$0xf] %v4166
        %4239 = vst [vmem:[%s187 + $0x1c] sm:$0xf] %v4167
        %4240 = vst [vmem:[%s187 + $0x20] sm:$0xf] %v4168
        %4241 = vst [vmem:[%s187 + $0x24] sm:$0xf] %v4169
        %4242 = vst [vmem:[%s187 + $0x28] sm:$0xf] %v4170
        %4243 = vst [vmem:[%s187 + $0x2c] sm:$0xf] %v4171
        %4244 = vst [vmem:[%s187 + $0x30] sm:$0xf] %v4172
        %4245 = vst [vmem:[%s187 + $0x34] sm:$0xf] %v4173
        %4246 = vst [vmem:[%s187 + $0x38] sm:$0xf] %v4174
        %4247 = vst [vmem:[%s187 + $0x3c] sm:$0xf] %v4175
        %4248 = vst [vmem:[%s187 + $0x40] sm:$0xf] %v4176
        %4249 = vst [vmem:[%s187 + $0x44] sm:$0xf] %v4177
        %4250 = vst [vmem:[%s187 + $0x48] sm:$0xf] %v4178
        %4251 = vst [vmem:[%s187 + $0x4c] sm:$0xf] %v4179
        %4252 = vst [vmem:[%s187 + $0x50] sm:$0xf] %v4180
        %4253 = vst [vmem:[%s187 + $0x54] sm:$0xf] %v4181
        %4254 = vst [vmem:[%s187 + $0x58] sm:$0xf] %v4182
        %4255 = vst [vmem:[%s187 + $0x5c] sm:$0xf] %v4183
        %4256 = vst [vmem:[%s187 + $0x60] sm:$0xf] %v4184
        %4257 = vst [vmem:[%s187 + $0x64] sm:$0xf] %v4185
        %4258 = vst [vmem:[%s187 + $0x68] sm:$0xf] %v4186
        %4259 = vst [vmem:[%s187 + $0x6c] sm:$0xf] %v4187
        %4260 = vst [vmem:[%s187 + $0x70] sm:$0xf] %v4188
        %4261 = vst [vmem:[%s187 + $0x74] sm:$0xf] %v4189
        %4262 = vst [vmem:[%s187 + $0x78] sm:$0xf] %v4190
        %4263 = vst [vmem:[%s187 + $0x7c] sm:$0xf] %v4191
        %4264 = vst [vmem:[%s187 + $0x80] sm:$0xf] %v4192
        %4265 = vst [vmem:[%s187 + $0x84] sm:$0xf] %v4193
        %4266 = vst [vmem:[%s187 + $0x88] sm:$0xf] %v4194
        %4267 = vst [vmem:[%s187 + $0x8c] sm:$0xf] %v4195
        %s4268 = sand.u32 %s109, 1
        %s4269 = scalar_lea.sflag [#allocation4], %s4268
        %s4270 = sand.u32 %s109, 1
        %s4271 = smul.addr %s4270, 144
        %s4272 = scalar_lea.vmem [#allocation3], %s4271
        // Predicated region
        $region33: #{tpu_custom_call.1} parent=31 // pred_check
          %p4273 = pneg %p119
        $region34: #{tpu_custom_call.1} parent=31 // pred_check_branch
          %4275 = sbr.rel (%p4273) target = $region36
        $region35: #{tpu_custom_call.1} parent=31 // pred_region
          %s4277 = ssub.s32 2304, 2304
          %4278 = vsyncadd %s4269, %s4277
          %s4279 = smul.addr %s22, 36
          %s4280 = smul.addr %s21, 36
          %s4281 = sadd.s32 %s4279, %s4280
          %s4282 = smul.addr %s4281, 64
          %s4283 = scalar_lea.hbm %s3, %s4282
          %s4284 = sshll.u32 %s4272, 4
          %s4285 = int_to_ptr.vmem [resolvable:$true] %s4284
          %4290 = dma.vmem_to_hbm [thread:$0]  %s4285, 2304, %s4283, %s4269, 64, 64, 4
        $region36: #{tpu_custom_call.1} parent=31 // pred_fallthru
          _
      $region32: #{tpu_custom_call.1} parent=5 // pred_fallthru
        _
      %p4291 = scmp.le.s32.totalorder 2, %s12
      // Predicated region
      $region37: #{tpu_custom_call.1} parent=5 // pred_check
        %p4292 = pneg %p4291
      $region38: #{tpu_custom_call.1} parent=5 // pred_check_branch
        %4294 = sbr.rel (%p4292) target = $region40
      $region39: #{tpu_custom_call.1} parent=5 // pred_region
        %s4295 = ssub.s32 %s12, 2
        // Predicated region
        $region41: #{tpu_custom_call.1} parent=39 // pred_check
          %p4296 = pneg %p125
        $region42: #{tpu_custom_call.1} parent=39 // pred_check_branch
          %4298 = sbr.rel (%p4296) target = $region44
        $region43: #{tpu_custom_call.1} parent=39 // pred_region
          %s4299 = sand.u32 %s110, 1
          %s4300 = scalar_lea.sflag [#allocation4], %s4299
          %s4301 = sand.u32 %s110, 1
          %s4302 = smul.addr %s4301, 144
          %s4303 = scalar_lea.vmem [#allocation3], %s4302
          %4304 = dma.done %s4300, 2304
        $region44: #{tpu_custom_call.1} parent=39 // pred_fallthru
          _
      $region40: #{tpu_custom_call.1} parent=5 // pred_fallthru
        _
    $region6: #{tpu_custom_call.1} parent=1 // loop_footer
      %s16 = sadd.s32 1, %s12
    $region7: #{tpu_custom_call.1} parent=1 // loop_footer_branch
      %11 = sbr.rel target = $region3
    $region8: #{tpu_custom_call.1} parent=1 // loop_exit
      _
    %4305 = vsyncpa [#allocation4], 1
    %s4306 = scalar_lea.sflag [#allocation4], 1
    %4307 = vsyncpa %s4306, 1

</llo_original>
